<compile_context>
chip_gen: v6e
topology: v6e:2x2x1
jax: 0.10.0
libtpu: 0.0.40
codegen_flags: <defaults>
</compile_context>

<pallas_src>
import functools

import jax
import jax.numpy as jnp
from jax.experimental import pallas as pl
from jax.experimental.pallas import tpu as pltpu

# ------------------------- small HuBERT-like config -------------------------
CONV_DIM    = (16, 32, 32)
CONV_KERNEL = (10, 3, 3)
CONV_STRIDE = (5, 2, 2)
HIDDEN      = 32
N_HEADS     = 4
N_LAYERS    = 2
FFN_DIM     = 64
POS_KERNEL  = 16
POS_GROUPS  = 4
N_CLASSES   = 5
LN_EPS      = 1e-5


def _gelu(x):
    # TODO(synk): HF Hubert uses exact erf-GELU; tanh approximation is used here
    # because lax.erf is not guaranteed to lower through Mosaic.
    return jax.nn.gelu(x, approximate=True)


def _ln(x, g, b, eps):
    mu = jnp.mean(x, axis=-1, keepdims=True)
    var = jnp.mean(jnp.square(x - mu), axis=-1, keepdims=True)
    return (x - mu) * jax.lax.rsqrt(var + eps) * g + b


# ------------------------------ Pallas kernels ------------------------------
def _conv_stage_kernel(p_ref, w_ref, b_ref, g_ref, beta_ref, o_ref, *, eps):
    """Fused: im2col-GEMM conv + LayerNorm(channel) + GELU."""
    acc = jnp.dot(p_ref[...], w_ref[...], preferred_element_type=jnp.float32)
    acc = acc + b_ref[...]
    y = _ln(acc, g_ref[...], beta_ref[...], eps)
    o_ref[...] = _gelu(y).astype(o_ref.dtype)


def conv_stage(patches, w, b, g, beta):
    M, CK = patches.shape
    Co = w.shape[1]
    return pl.pallas_call(
        functools.partial(_conv_stage_kernel, eps=LN_EPS),
        grid=(1,),
        out_shape=jax.ShapeDtypeStruct((M, Co), patches.dtype),
        in_specs=[
            pl.BlockSpec((M, CK), lambda i: (0, 0)),
            pl.BlockSpec((CK, Co), lambda i: (0, 0)),
            pl.BlockSpec((1, Co), lambda i: (0, 0)),
            pl.BlockSpec((1, Co), lambda i: (0, 0)),
            pl.BlockSpec((1, Co), lambda i: (0, 0)),
        ],
        out_specs=pl.BlockSpec((M, Co), lambda i: (0, 0)),
    )(patches, w, b, g, beta)


def _ln_linear_kernel(x_ref, g_ref, b_ref, w_ref, bias_ref, o_ref, *, eps):
    """Fused feature projection: LayerNorm + Linear."""
    x = x_ref[...].astype(jnp.float32)
    y = _ln(x, g_ref[...], b_ref[...], eps)
    out = jnp.dot(y, w_ref[...], preferred_element_type=jnp.float32) + bias_ref[...]
    o_ref[...] = out.astype(o_ref.dtype)


def ln_linear(x, g, b, w, bias):
    M, C = x.shape
    D = w.shape[1]
    return pl.pallas_call(
        functools.partial(_ln_linear_kernel, eps=LN_EPS),
        grid=(1,),
        out_shape=jax.ShapeDtypeStruct((M, D), x.dtype),
        in_specs=[
            pl.BlockSpec((M, C), lambda i: (0, 0)),
            pl.BlockSpec((1, C), lambda i: (0, 0)),
            pl.BlockSpec((1, C), lambda i: (0, 0)),
            pl.BlockSpec((C, D), lambda i: (0, 0)),
            pl.BlockSpec((1, D), lambda i: (0, 0)),
        ],
        out_specs=pl.BlockSpec((M, D), lambda i: (0, 0)),
    )(x, g, b, w, bias)


def _posconv_kernel(h_ref, p_ref, w_ref, b_ref, o_ref):
    """Fused grouped positional conv (block-diag GEMM) + GELU + residual add."""
    pos = jnp.dot(p_ref[...], w_ref[...], preferred_element_type=jnp.float32)
    pos = _gelu(pos + b_ref[...])
    o_ref[...] = (h_ref[...].astype(jnp.float32) + pos).astype(o_ref.dtype)


def posconv_residual(h_flat, patches, w, b):
    M, D = h_flat.shape
    DK = patches.shape[1]
    return pl.pallas_call(
        _posconv_kernel,
        grid=(1,),
        out_shape=jax.ShapeDtypeStruct((M, D), h_flat.dtype),
        in_specs=[
            pl.BlockSpec((M, D), lambda i: (0, 0)),
            pl.BlockSpec((M, DK), lambda i: (0, 0)),
            pl.BlockSpec((DK, D), lambda i: (0, 0)),
            pl.BlockSpec((1, D), lambda i: (0, 0)),
        ],
        out_specs=pl.BlockSpec((M, D), lambda i: (0, 0)),
    )(h_flat, patches, w, b)


def _encoder_layer_kernel(h_ref, ln1g_ref, ln1b_ref, qkvw_ref, qkvb_ref,
                          ow_ref, ob_ref, ln2g_ref, ln2b_ref,
                          fc1w_ref, fc1b_ref, fc2w_ref, fc2b_ref, o_ref,
                          *, n_heads, eps):
    """One full pre-LN transformer layer for one batch element, entirely in VMEM."""
    h = h_ref[0].astype(jnp.float32)                       # (T, D)
    D = h.shape[-1]
    Dh = D // n_heads
    scale = Dh ** -0.5

    # ---- self-attention block ----
    x = _ln(h, ln1g_ref[...], ln1b_ref[...], eps)
    qkv = jnp.dot(x, qkvw_ref[...], preferred_element_type=jnp.float32)
    qkv = qkv + qkvb_ref[...]                              # (T, 3D)

    heads = []
    for i in range(n_heads):                               # static unroll, lane slices
        q = qkv[:, i * Dh:(i + 1) * Dh] * scale
        k = qkv[:, D + i * Dh:D + (i + 1) * Dh]
        v = qkv[:, 2 * D + i * Dh:2 * D + (i + 1) * Dh]
        s = jnp.dot(q, k.T, preferred_element_type=jnp.float32)       # (T, T)
        s = s - jnp.max(s, axis=-1, keepdims=True)
        p = jnp.exp(s)
        p = p * pl.reciprocal(jnp.sum(p, axis=-1, keepdims=True), approx=True)
        heads.append(jnp.dot(p, v, preferred_element_type=jnp.float32))
    attn = jnp.concatenate(heads, axis=-1)                 # (T, D)

    o = jnp.dot(attn, ow_ref[...], preferred_element_type=jnp.float32) + ob_ref[...]
    h = h + o

    # ---- feed-forward block ----
    x2 = _ln(h, ln2g_ref[...], ln2b_ref[...], eps)
    ff = _gelu(jnp.dot(x2, fc1w_ref[...], preferred_element_type=jnp.float32)
               + fc1b_ref[...])
    ff = jnp.dot(ff, fc2w_ref[...], preferred_element_type=jnp.float32) + fc2b_ref[...]
    o_ref[0] = (h + ff).astype(o_ref.dtype)


def encoder_layer(h, lp):
    B, T, D = h.shape
    F = lp["fc1_w"].shape[1]
    vec = lambda n: pl.BlockSpec((1, n), lambda b: (0, 0))
    mat = lambda r, c: pl.BlockSpec((r, c), lambda b: (0, 0))
    return pl.pallas_call(
        functools.partial(_encoder_layer_kernel, n_heads=N_HEADS, eps=LN_EPS),
        grid=(B,),
        out_shape=jax.ShapeDtypeStruct((B, T, D), h.dtype),
        in_specs=[
            pl.BlockSpec((1, T, D), lambda b: (b, 0, 0)),
            vec(D), vec(D),
            mat(D, 3 * D), vec(3 * D),
            mat(D, D), vec(D),
            vec(D), vec(D),
            mat(D, F), vec(F),
            mat(F, D), vec(D),
        ],
        out_specs=pl.BlockSpec((1, T, D), lambda b: (b, 0, 0)),
        compiler_params=pltpu.CompilerParams(dimension_semantics=("arbitrary",)),
    )(h, lp["ln1_g"], lp["ln1_b"], lp["qkv_w"], lp["qkv_b"], lp["o_w"], lp["o_b"],
      lp["ln2_g"], lp["ln2_b"], lp["fc1_w"], lp["fc1_b"], lp["fc2_w"], lp["fc2_b"])


def _final_kernel(h_ref, g_ref, b_ref, w_ref, hb_ref, o_ref, *, eps):
    """Fused: final encoder LayerNorm + mean pool over time + linear head."""
    rows = []
    for bi in range(h_ref.shape[0]):                       # static unroll over batch
        y = _ln(h_ref[bi].astype(jnp.float32), g_ref[...], b_ref[...], eps)   # (T, D)
        rows.append(jnp.mean(y, axis=0, keepdims=True))                        # (1, D)
    pooled = jnp.concatenate(rows, axis=0)                                     # (B, D)
    out = jnp.dot(pooled, w_ref[...], preferred_element_type=jnp.float32) + hb_ref[...]
    o_ref[...] = out.astype(o_ref.dtype)


def final_ln_pool_head(h, g, b, w, hb):
    B, T, D = h.shape
    C = w.shape[1]
    return pl.pallas_call(
        functools.partial(_final_kernel, eps=LN_EPS),
        grid=(1,),
        out_shape=jax.ShapeDtypeStruct((B, C), h.dtype),
        in_specs=[
            pl.BlockSpec((B, T, D), lambda i: (0, 0, 0)),
            pl.BlockSpec((1, D), lambda i: (0, 0)),
            pl.BlockSpec((1, D), lambda i: (0, 0)),
            pl.BlockSpec((D, C), lambda i: (0, 0)),
            pl.BlockSpec((1, C), lambda i: (0, 0)),
        ],
        out_specs=pl.BlockSpec((B, C), lambda i: (0, 0)),
    )(h, g, b, w, hb)


# ---------------------------------- glue -------------------------------------
def _im2col(x_btc, kernel, stride):
    """x: (B, T_in, C) -> (B, T_out, C*kernel) patches in torch Conv1d flatten order."""
    B, Tin, C = x_btc.shape
    Tout = (Tin - kernel) // stride + 1
    idx = jnp.arange(Tout)[:, None] * stride + jnp.arange(kernel)[None, :]
    p = x_btc[:, idx, :]                       # (B, Tout, K, C)
    p = jnp.transpose(p, (0, 1, 3, 2))         # (B, Tout, C, K)
    return p.reshape(B, Tout, C * kernel)


def hubert_ft_forward(params, inp):
    # inp: (B, 1, L) raw waveform (like the torch module's `input`)
    x = jnp.squeeze(inp, axis=1)               # keep batch dim even when B == 1
    B, L = x.shape

    # ----------------- feature extractor: fused (conv + LN + GELU) x3 ---------
    h = x[:, :, None]                          # (B, L, 1) channels-last
    for i, (co, k, s) in enumerate(zip(CONV_DIM, CONV_KERNEL, CONV_STRIDE)):
        patches = _im2col(h, k, s)             # (B, T, C_in*k)
        _, T, CK = patches.shape
        y = conv_stage(patches.reshape(B * T, CK),
                       params[f"conv{i}_w"], params[f"conv{i}_b"],
                       params[f"conv{i}_ln_g"], params[f"conv{i}_ln_b"])
        h = y.reshape(B, T, co)
    B, T, C = h.shape
    D = HIDDEN

    # ----------------- feature projection (fused LN + Linear) -----------------
    y = ln_linear(h.reshape(B * T, C), params["fp_ln_g"], params["fp_ln_b"],
                  params["fp_w"], params["fp_b"])
    h = y.reshape(B, T, D)

    # ------ positional conv embedding: one block-diag GEMM + GELU + residual --
    K = POS_KERNEL
    pad = K // 2
    hp = jnp.pad(h, ((0, 0), (pad, pad), (0, 0)))
    patches = _im2col(hp, K, 1)[:, :T, :]      # SamePadLayer trims the extra step
    h = posconv_residual(h.reshape(B * T, D), patches.reshape(B * T, D * K),
                         params["pos_w"], params["pos_b"]).reshape(B, T, D)

    # ----------------- transformer encoder: one fused kernel per layer --------
    for l in range(N_LAYERS):
        lp = {k: params[f"l{l}_{k}"] for k in (
            "ln1_g", "ln1_b", "qkv_w", "qkv_b", "o_w", "o_b",
            "ln2_g", "ln2_b", "fc1_w", "fc1_b", "fc2_w", "fc2_b")}
        h = encoder_layer(h, lp)

    # -------- final LN + transpose + AdaptiveAvgPool1d(1) + squeeze + head ----
    return final_ln_pool_head(h, params["enc_ln_g"], params["enc_ln_b"],
                              params["head_w"], params["head_b"])


# ------------------------------ parameter init -------------------------------
def init_params(key):
    params = {}

    def normal(shape, scale=0.02):
        nonlocal key
        key, sub = jax.random.split(key)
        return scale * jax.random.normal(sub, shape, dtype=jnp.float32)

    c_in = 1
    for i, (co, k) in enumerate(zip(CONV_DIM, CONV_KERNEL)):
        w = normal((co, c_in, k))                          # torch Conv1d weight (Cout, Cin, K)
        params[f"conv{i}_w"] = w.reshape(co, c_in * k).T   # GEMM layout (Cin*K, Cout)
        params[f"conv{i}_b"] = jnp.zeros((1, co), jnp.float32)
        params[f"conv{i}_ln_g"] = jnp.ones((1, co), jnp.float32)
        params[f"conv{i}_ln_b"] = jnp.zeros((1, co), jnp.float32)
        c_in = co

    C, D = CONV_DIM[-1], HIDDEN
    params["fp_ln_g"] = jnp.ones((1, C), jnp.float32)
    params["fp_ln_b"] = jnp.zeros((1, C), jnp.float32)
    params["fp_w"] = normal((C, D))
    params["fp_b"] = jnp.zeros((1, D), jnp.float32)

    # grouped positional conv weight -> single block-diagonal GEMM weight (D*K, D)
    # TODO(synk): HF applies weight_norm to this weight; skipped for random init.
    G, K = POS_GROUPS, POS_KERNEL
    Dg = D // G
    wpos = normal((D, Dg, K))                              # grouped Conv1d weight
    w_full = jnp.zeros((D * K, D), jnp.float32)
    for g in range(G):
        wg = wpos[g * Dg:(g + 1) * Dg].reshape(Dg, Dg * K).T           # (Dg*K, Dg)
        w_full = w_full.at[g * Dg * K:(g + 1) * Dg * K,
                           g * Dg:(g + 1) * Dg].set(wg)
    params["pos_w"] = w_full
    params["pos_b"] = jnp.zeros((1, D), jnp.float32)

    F = FFN_DIM
    for l in range(N_LAYERS):
        params[f"l{l}_ln1_g"] = jnp.ones((1, D), jnp.float32)
        params[f"l{l}_ln1_b"] = jnp.zeros((1, D), jnp.float32)
        qw, kw, vw = normal((D, D)), normal((D, D)), normal((D, D))
        params[f"l{l}_qkv_w"] = jnp.concatenate([qw, kw, vw], axis=1)  # (D, 3D)
        params[f"l{l}_qkv_b"] = jnp.zeros((1, 3 * D), jnp.float32)
        params[f"l{l}_o_w"] = normal((D, D))
        params[f"l{l}_o_b"] = jnp.zeros((1, D), jnp.float32)
        params[f"l{l}_ln2_g"] = jnp.ones((1, D), jnp.float32)
        params[f"l{l}_ln2_b"] = jnp.zeros((1, D), jnp.float32)
        params[f"l{l}_fc1_w"] = normal((D, F))
        params[f"l{l}_fc1_b"] = jnp.zeros((1, F), jnp.float32)
        params[f"l{l}_fc2_w"] = normal((F, D))
        params[f"l{l}_fc2_b"] = jnp.zeros((1, D), jnp.float32)

    params["enc_ln_g"] = jnp.ones((1, D), jnp.float32)
    params["enc_ln_b"] = jnp.zeros((1, D), jnp.float32)
    params["head_w"] = normal((D, N_CLASSES))
    params["head_b"] = jnp.zeros((1, N_CLASSES), jnp.float32)
    return params


if __name__ == "__main__":
    key = jax.random.PRNGKey(0)
    pkey, xkey = jax.random.split(key)
    params = init_params(pkey)

    # raw waveform input, shape (B, 1, L) like the PyTorch module expects
    x = jax.random.normal(xkey, (2, 1, 400), dtype=jnp.float32)

    fwd = jax.jit(hubert_ft_forward)
    out = fwd(params, x)
    out = jax.block_until_ready(out)
    assert out.shape == (2, N_CLASSES), out.shape
    assert jnp.all(jnp.isfinite(out))
    print("KERNEL_OK")
</pallas_src>

<mosaic_0001>
module attributes {stable_mosaic.version = 11 : i64} {
  func.func @_conv_stage_kernel(%arg0: i32, %arg1: memref<158x10xf32, #tpu.memory_space<vmem>>, %arg2: memref<10x16xf32, #tpu.memory_space<vmem>>, %arg3: memref<1x16xf32, #tpu.memory_space<vmem>>, %arg4: memref<1x16xf32, #tpu.memory_space<vmem>>, %arg5: memref<1x16xf32, #tpu.memory_space<vmem>>, %arg6: memref<158x16xf32, #tpu.memory_space<vmem>>) attributes {dimension_semantics = [#tpu.dimension_semantics<arbitrary>], iteration_bounds = array<i64: 1>, scalar_prefetch = 0 : i64, scratch_operands = 0 : i64, tpu.core_type = #tpu.core_type<tc>, window_params = [{pipeline_mode = #tpu.pipeline_mode<synchronous>, transform_indices = @transform_0, window_bounds = array<i64: 158, 10>}, {pipeline_mode = #tpu.pipeline_mode<synchronous>, transform_indices = @transform_1, window_bounds = array<i64: 10, 16>}, {pipeline_mode = #tpu.pipeline_mode<synchronous>, transform_indices = @transform_2, window_bounds = array<i64: 1, 16>}, {pipeline_mode = #tpu.pipeline_mode<synchronous>, transform_indices = @transform_3, window_bounds = array<i64: 1, 16>}, {pipeline_mode = #tpu.pipeline_mode<synchronous>, transform_indices = @transform_4, window_bounds = array<i64: 1, 16>}, {pipeline_mode = #tpu.pipeline_mode<synchronous>, transform_indices = @transform_5, window_bounds = array<i64: 158, 16>}]} {
    %c0 = arith.constant 0 : index
    %c0_0 = arith.constant 0 : index
    %0 = vector.load %arg1[%c0, %c0_0] : memref<158x10xf32, #tpu.memory_space<vmem>>, vector<158x10xf32>
    %c0_1 = arith.constant 0 : index
    %c0_2 = arith.constant 0 : index
    %1 = vector.load %arg2[%c0_1, %c0_2] : memref<10x16xf32, #tpu.memory_space<vmem>>, vector<10x16xf32>
    %cst = arith.constant dense<0.000000e+00> : vector<158x16xf32>
    %2 = tpu.matmul %0, %1, %cst {dimension_numbers = #tpu.dot_dimension_numbers<[1], [0], [0], [1], [0, 0, 1, 1], [], []>} : vector<158x10xf32>, vector<10x16xf32>, vector<158x16xf32> -> vector<158x16xf32>
    %c0_3 = arith.constant 0 : index
    %c0_4 = arith.constant 0 : index
    %3 = vector.load %arg3[%c0_3, %c0_4] : memref<1x16xf32, #tpu.memory_space<vmem>>, vector<1x16xf32>
    %4 = vector.broadcast %3 : vector<1x16xf32> to vector<158x16xf32>
    %5 = arith.addf %2, %4 : vector<158x16xf32>
    %c0_5 = arith.constant 0 : index
    %c0_6 = arith.constant 0 : index
    %6 = vector.load %arg4[%c0_5, %c0_6] : memref<1x16xf32, #tpu.memory_space<vmem>>, vector<1x16xf32>
    %c0_7 = arith.constant 0 : index
    %c0_8 = arith.constant 0 : index
    %7 = vector.load %arg5[%c0_7, %c0_8] : memref<1x16xf32, #tpu.memory_space<vmem>>, vector<1x16xf32>
    %cst_9 = arith.constant dense<0.000000e+00> : vector<158xf32>
    %8 = vector.multi_reduction <add>, %5, %cst_9 [1] : vector<158x16xf32> to vector<158xf32>
    %9 = vector.shape_cast %8 : vector<158xf32> to vector<158x1xf32>
    %cst_10 = arith.constant 1.600000e+01 : f32
    %10 = vector.broadcast %cst_10 : f32 to vector<158x1xf32>
    %11 = arith.divf %9, %10 : vector<158x1xf32>
    %12 = vector.broadcast %11 : vector<158x1xf32> to vector<158x16xf32>
    %13 = arith.subf %5, %12 : vector<158x16xf32>
    %14 = arith.mulf %13, %13 : vector<158x16xf32>
    %cst_11 = arith.constant dense<0.000000e+00> : vector<158xf32>
    %15 = vector.multi_reduction <add>, %14, %cst_11 [1] : vector<158x16xf32> to vector<158xf32>
    %16 = vector.shape_cast %15 : vector<158xf32> to vector<158x1xf32>
    %cst_12 = arith.constant 1.600000e+01 : f32
    %17 = vector.broadcast %cst_12 : f32 to vector<158x1xf32>
    %18 = arith.divf %16, %17 : vector<158x1xf32>
    %19 = vector.broadcast %11 : vector<158x1xf32> to vector<158x16xf32>
    %20 = arith.subf %5, %19 : vector<158x16xf32>
    %cst_13 = arith.constant 9.99999974E-6 : f32
    %21 = vector.broadcast %cst_13 : f32 to vector<158x1xf32>
    %22 = arith.addf %18, %21 : vector<158x1xf32>
    %23 = math.rsqrt %22 : vector<158x1xf32>
    %24 = vector.broadcast %23 : vector<158x1xf32> to vector<158x16xf32>
    %25 = arith.mulf %20, %24 : vector<158x16xf32>
    %26 = vector.broadcast %6 : vector<1x16xf32> to vector<158x16xf32>
    %27 = arith.mulf %25, %26 : vector<158x16xf32>
    %28 = vector.broadcast %7 : vector<1x16xf32> to vector<158x16xf32>
    %29 = arith.addf %27, %28 : vector<158x16xf32>
    %30 = arith.mulf %29, %29 : vector<158x16xf32>
    %31 = arith.mulf %29, %30 : vector<158x16xf32>
    %cst_14 = arith.constant 4.471500e-02 : f32
    %32 = vector.broadcast %cst_14 : f32 to vector<158x16xf32>
    %33 = arith.mulf %32, %31 : vector<158x16xf32>
    %34 = arith.addf %29, %33 : vector<158x16xf32>
    %cst_15 = arith.constant 0.797884583 : f32
    %35 = vector.broadcast %cst_15 : f32 to vector<158x16xf32>
    %36 = arith.mulf %35, %34 : vector<158x16xf32>
    %37 = math.tanh %36 : vector<158x16xf32>
    %cst_16 = arith.constant 1.000000e+00 : f32
    %38 = vector.broadcast %cst_16 : f32 to vector<158x16xf32>
    %39 = arith.addf %38, %37 : vector<158x16xf32>
    %cst_17 = arith.constant 5.000000e-01 : f32
    %40 = vector.broadcast %cst_17 : f32 to vector<158x16xf32>
    %41 = arith.mulf %40, %39 : vector<158x16xf32>
    %42 = arith.mulf %29, %41 : vector<158x16xf32>
    %c0_18 = arith.constant 0 : index
    %c0_19 = arith.constant 0 : index
    %43 = vector.load %arg6[%c0_18, %c0_19] : memref<158x16xf32, #tpu.memory_space<vmem>>, vector<158x16xf32>
    tpu.vector_store %arg6[%c0_18, %c0_19], %42 {strides = array<i32>} : memref<158x16xf32, #tpu.memory_space<vmem>>, vector<158x16xf32>,
    return
  }
  func.func @transform_0(%arg0: i32) -> (i32, i32) {
    %c0_i32 = arith.constant 0 : i32
    %c0_i32_0 = arith.constant 0 : i32
    %c0_i32_1 = arith.constant 0 : i32
    return %c0_i32, %c0_i32_0 : i32, i32
  }
  func.func @transform_1(%arg0: i32) -> (i32, i32) {
    %c0_i32 = arith.constant 0 : i32
    %c0_i32_0 = arith.constant 0 : i32
    %c0_i32_1 = arith.constant 0 : i32
    return %c0_i32, %c0_i32_0 : i32, i32
  }
  func.func @transform_2(%arg0: i32) -> (i32, i32) {
    %c0_i32 = arith.constant 0 : i32
    %c0_i32_0 = arith.constant 0 : i32
    %c0_i32_1 = arith.constant 0 : i32
    return %c0_i32, %c0_i32_0 : i32, i32
  }
  func.func @transform_3(%arg0: i32) -> (i32, i32) {
    %c0_i32 = arith.constant 0 : i32
    %c0_i32_0 = arith.constant 0 : i32
    %c0_i32_1 = arith.constant 0 : i32
    return %c0_i32, %c0_i32_0 : i32, i32
  }
  func.func @transform_4(%arg0: i32) -> (i32, i32) {
    %c0_i32 = arith.constant 0 : i32
    %c0_i32_0 = arith.constant 0 : i32
    %c0_i32_1 = arith.constant 0 : i32
    return %c0_i32, %c0_i32_0 : i32, i32
  }
  func.func @transform_5(%arg0: i32) -> (i32, i32) {
    %c0_i32 = arith.constant 0 : i32
    %c0_i32_0 = arith.constant 0 : i32
    %c0_i32_1 = arith.constant 0 : i32
    return %c0_i32, %c0_i32_0 : i32, i32
  }
}

module attributes {stable_mosaic.version = 11 : i64} {
  func.func @_conv_stage_kernel(%arg0: i32, %arg1: memref<78x48xf32, #tpu.memory_space<vmem>>, %arg2: memref<48x32xf32, #tpu.memory_space<vmem>>, %arg3: memref<1x32xf32, #tpu.memory_space<vmem>>, %arg4: memref<1x32xf32, #tpu.memory_space<vmem>>, %arg5: memref<1x32xf32, #tpu.memory_space<vmem>>, %arg6: memref<78x32xf32, #tpu.memory_space<vmem>>) attributes {dimension_semantics = [#tpu.dimension_semantics<arbitrary>], iteration_bounds = array<i64: 1>, scalar_prefetch = 0 : i64, scratch_operands = 0 : i64, tpu.core_type = #tpu.core_type<tc>, window_params = [{pipeline_mode = #tpu.pipeline_mode<synchronous>, transform_indices = @transform_0, window_bounds = array<i64: 78, 48>}, {pipeline_mode = #tpu.pipeline_mode<synchronous>, transform_indices = @transform_1, window_bounds = array<i64: 48, 32>}, {pipeline_mode = #tpu.pipeline_mode<synchronous>, transform_indices = @transform_2, window_bounds = array<i64: 1, 32>}, {pipeline_mode = #tpu.pipeline_mode<synchronous>, transform_indices = @transform_3, window_bounds = array<i64: 1, 32>}, {pipeline_mode = #tpu.pipeline_mode<synchronous>, transform_indices = @transform_4, window_bounds = array<i64: 1, 32>}, {pipeline_mode = #tpu.pipeline_mode<synchronous>, transform_indices = @transform_5, window_bounds = array<i64: 78, 32>}]} {
    %c0 = arith.constant 0 : index
    %c0_0 = arith.constant 0 : index
    %0 = vector.load %arg1[%c0, %c0_0] : memref<78x48xf32, #tpu.memory_space<vmem>>, vector<78x48xf32>
    %c0_1 = arith.constant 0 : index
    %c0_2 = arith.constant 0 : index
    %1 = vector.load %arg2[%c0_1, %c0_2] : memref<48x32xf32, #tpu.memory_space<vmem>>, vector<48x32xf32>
    %cst = arith.constant dense<0.000000e+00> : vector<78x32xf32>
    %2 = tpu.matmul %0, %1, %cst {dimension_numbers = #tpu.dot_dimension_numbers<[1], [0], [0], [1], [0, 0, 1, 1], [], []>} : vector<78x48xf32>, vector<48x32xf32>, vector<78x32xf32> -> vector<78x32xf32>
    %c0_3 = arith.constant 0 : index
    %c0_4 = arith.constant 0 : index
    %3 = vector.load %arg3[%c0_3, %c0_4] : memref<1x32xf32, #tpu.memory_space<vmem>>, vector<1x32xf32>
    %4 = vector.broadcast %3 : vector<1x32xf32> to vector<78x32xf32>
    %5 = arith.addf %2, %4 : vector<78x32xf32>
    %c0_5 = arith.constant 0 : index
    %c0_6 = arith.constant 0 : index
    %6 = vector.load %arg4[%c0_5, %c0_6] : memref<1x32xf32, #tpu.memory_space<vmem>>, vector<1x32xf32>
    %c0_7 = arith.constant 0 : index
    %c0_8 = arith.constant 0 : index
    %7 = vector.load %arg5[%c0_7, %c0_8] : memref<1x32xf32, #tpu.memory_space<vmem>>, vector<1x32xf32>
    %cst_9 = arith.constant dense<0.000000e+00> : vector<78xf32>
    %8 = vector.multi_reduction <add>, %5, %cst_9 [1] : vector<78x32xf32> to vector<78xf32>
    %9 = vector.shape_cast %8 : vector<78xf32> to vector<78x1xf32>
    %cst_10 = arith.constant 3.200000e+01 : f32
    %10 = vector.broadcast %cst_10 : f32 to vector<78x1xf32>
    %11 = arith.divf %9, %10 : vector<78x1xf32>
    %12 = vector.broadcast %11 : vector<78x1xf32> to vector<78x32xf32>
    %13 = arith.subf %5, %12 : vector<78x32xf32>
    %14 = arith.mulf %13, %13 : vector<78x32xf32>
    %cst_11 = arith.constant dense<0.000000e+00> : vector<78xf32>
    %15 = vector.multi_reduction <add>, %14, %cst_11 [1] : vector<78x32xf32> to vector<78xf32>
    %16 = vector.shape_cast %15 : vector<78xf32> to vector<78x1xf32>
    %cst_12 = arith.constant 3.200000e+01 : f32
    %17 = vector.broadcast %cst_12 : f32 to vector<78x1xf32>
    %18 = arith.divf %16, %17 : vector<78x1xf32>
    %19 = vector.broadcast %11 : vector<78x1xf32> to vector<78x32xf32>
    %20 = arith.subf %5, %19 : vector<78x32xf32>
    %cst_13 = arith.constant 9.99999974E-6 : f32
    %21 = vector.broadcast %cst_13 : f32 to vector<78x1xf32>
    %22 = arith.addf %18, %21 : vector<78x1xf32>
    %23 = math.rsqrt %22 : vector<78x1xf32>
    %24 = vector.broadcast %23 : vector<78x1xf32> to vector<78x32xf32>
    %25 = arith.mulf %20, %24 : vector<78x32xf32>
    %26 = vector.broadcast %6 : vector<1x32xf32> to vector<78x32xf32>
    %27 = arith.mulf %25, %26 : vector<78x32xf32>
    %28 = vector.broadcast %7 : vector<1x32xf32> to vector<78x32xf32>
    %29 = arith.addf %27, %28 : vector<78x32xf32>
    %30 = arith.mulf %29, %29 : vector<78x32xf32>
    %31 = arith.mulf %29, %30 : vector<78x32xf32>
    %cst_14 = arith.constant 4.471500e-02 : f32
    %32 = vector.broadcast %cst_14 : f32 to vector<78x32xf32>
    %33 = arith.mulf %32, %31 : vector<78x32xf32>
    %34 = arith.addf %29, %33 : vector<78x32xf32>
    %cst_15 = arith.constant 0.797884583 : f32
    %35 = vector.broadcast %cst_15 : f32 to vector<78x32xf32>
    %36 = arith.mulf %35, %34 : vector<78x32xf32>
    %37 = math.tanh %36 : vector<78x32xf32>
    %cst_16 = arith.constant 1.000000e+00 : f32
    %38 = vector.broadcast %cst_16 : f32 to vector<78x32xf32>
    %39 = arith.addf %38, %37 : vector<78x32xf32>
    %cst_17 = arith.constant 5.000000e-01 : f32
    %40 = vector.broadcast %cst_17 : f32 to vector<78x32xf32>
    %41 = arith.mulf %40, %39 : vector<78x32xf32>
    %42 = arith.mulf %29, %41 : vector<78x32xf32>
    %c0_18 = arith.constant 0 : index
    %c0_19 = arith.constant 0 : index
    %43 = vector.load %arg6[%c0_18, %c0_19] : memref<78x32xf32, #tpu.memory_space<vmem>>, vector<78x32xf32>
    tpu.vector_store %arg6[%c0_18, %c0_19], %42 {strides = array<i32>} : memref<78x32xf32, #tpu.memory_space<vmem>>, vector<78x32xf32>,
    return
  }
  func.func @transform_0(%arg0: i32) -> (i32, i32) {
    %c0_i32 = arith.constant 0 : i32
    %c0_i32_0 = arith.constant 0 : i32
    %c0_i32_1 = arith.constant 0 : i32
    return %c0_i32, %c0_i32_0 : i32, i32
  }
  func.func @transform_1(%arg0: i32) -> (i32, i32) {
    %c0_i32 = arith.constant 0 : i32
    %c0_i32_0 = arith.constant 0 : i32
    %c0_i32_1 = arith.constant 0 : i32
    return %c0_i32, %c0_i32_0 : i32, i32
  }
  func.func @transform_2(%arg0: i32) -> (i32, i32) {
    %c0_i32 = arith.constant 0 : i32
    %c0_i32_0 = arith.constant 0 : i32
    %c0_i32_1 = arith.constant 0 : i32
    return %c0_i32, %c0_i32_0 : i32, i32
  }
  func.func @transform_3(%arg0: i32) -> (i32, i32) {
    %c0_i32 = arith.constant 0 : i32
    %c0_i32_0 = arith.constant 0 : i32
    %c0_i32_1 = arith.constant 0 : i32
    return %c0_i32, %c0_i32_0 : i32, i32
  }
  func.func @transform_4(%arg0: i32) -> (i32, i32) {
    %c0_i32 = arith.constant 0 : i32
    %c0_i32_0 = arith.constant 0 : i32
    %c0_i32_1 = arith.constant 0 : i32
    return %c0_i32, %c0_i32_0 : i32, i32
  }
  func.func @transform_5(%arg0: i32) -> (i32, i32) {
    %c0_i32 = arith.constant 0 : i32
    %c0_i32_0 = arith.constant 0 : i32
    %c0_i32_1 = arith.constant 0 : i32
    return %c0_i32, %c0_i32_0 : i32, i32
  }
}

module attributes {stable_mosaic.version = 11 : i64} {
  func.func @_conv_stage_kernel(%arg0: i32, %arg1: memref<38x96xf32, #tpu.memory_space<vmem>>, %arg2: memref<96x32xf32, #tpu.memory_space<vmem>>, %arg3: memref<1x32xf32, #tpu.memory_space<vmem>>, %arg4: memref<1x32xf32, #tpu.memory_space<vmem>>, %arg5: memref<1x32xf32, #tpu.memory_space<vmem>>, %arg6: memref<38x32xf32, #tpu.memory_space<vmem>>) attributes {dimension_semantics = [#tpu.dimension_semantics<arbitrary>], iteration_bounds = array<i64: 1>, scalar_prefetch = 0 : i64, scratch_operands = 0 : i64, tpu.core_type = #tpu.core_type<tc>, window_params = [{pipeline_mode = #tpu.pipeline_mode<synchronous>, transform_indices = @transform_0, window_bounds = array<i64: 38, 96>}, {pipeline_mode = #tpu.pipeline_mode<synchronous>, transform_indices = @transform_1, window_bounds = array<i64: 96, 32>}, {pipeline_mode = #tpu.pipeline_mode<synchronous>, transform_indices = @transform_2, window_bounds = array<i64: 1, 32>}, {pipeline_mode = #tpu.pipeline_mode<synchronous>, transform_indices = @transform_3, window_bounds = array<i64: 1, 32>}, {pipeline_mode = #tpu.pipeline_mode<synchronous>, transform_indices = @transform_4, window_bounds = array<i64: 1, 32>}, {pipeline_mode = #tpu.pipeline_mode<synchronous>, transform_indices = @transform_5, window_bounds = array<i64: 38, 32>}]} {
    %c0 = arith.constant 0 : index
    %c0_0 = arith.constant 0 : index
    %0 = vector.load %arg1[%c0, %c0_0] : memref<38x96xf32, #tpu.memory_space<vmem>>, vector<38x96xf32>
    %c0_1 = arith.constant 0 : index
    %c0_2 = arith.constant 0 : index
    %1 = vector.load %arg2[%c0_1, %c0_2] : memref<96x32xf32, #tpu.memory_space<vmem>>, vector<96x32xf32>
    %cst = arith.constant dense<0.000000e+00> : vector<38x32xf32>
    %2 = tpu.matmul %0, %1, %cst {dimension_numbers = #tpu.dot_dimension_numbers<[1], [0], [0], [1], [0, 0, 1, 1], [], []>} : vector<38x96xf32>, vector<96x32xf32>, vector<38x32xf32> -> vector<38x32xf32>
    %c0_3 = arith.constant 0 : index
    %c0_4 = arith.constant 0 : index
    %3 = vector.load %arg3[%c0_3, %c0_4] : memref<1x32xf32, #tpu.memory_space<vmem>>, vector<1x32xf32>
    %4 = vector.broadcast %3 : vector<1x32xf32> to vector<38x32xf32>
    %5 = arith.addf %2, %4 : vector<38x32xf32>
    %c0_5 = arith.constant 0 : index
    %c0_6 = arith.constant 0 : index
    %6 = vector.load %arg4[%c0_5, %c0_6] : memref<1x32xf32, #tpu.memory_space<vmem>>, vector<1x32xf32>
    %c0_7 = arith.constant 0 : index
    %c0_8 = arith.constant 0 : index
    %7 = vector.load %arg5[%c0_7, %c0_8] : memref<1x32xf32, #tpu.memory_space<vmem>>, vector<1x32xf32>
    %cst_9 = arith.constant dense<0.000000e+00> : vector<38xf32>
    %8 = vector.multi_reduction <add>, %5, %cst_9 [1] : vector<38x32xf32> to vector<38xf32>
    %9 = vector.shape_cast %8 : vector<38xf32> to vector<38x1xf32>
    %cst_10 = arith.constant 3.200000e+01 : f32
    %10 = vector.broadcast %cst_10 : f32 to vector<38x1xf32>
    %11 = arith.divf %9, %10 : vector<38x1xf32>
    %12 = vector.broadcast %11 : vector<38x1xf32> to vector<38x32xf32>
    %13 = arith.subf %5, %12 : vector<38x32xf32>
    %14 = arith.mulf %13, %13 : vector<38x32xf32>
    %cst_11 = arith.constant dense<0.000000e+00> : vector<38xf32>
    %15 = vector.multi_reduction <add>, %14, %cst_11 [1] : vector<38x32xf32> to vector<38xf32>
    %16 = vector.shape_cast %15 : vector<38xf32> to vector<38x1xf32>
    %cst_12 = arith.constant 3.200000e+01 : f32
    %17 = vector.broadcast %cst_12 : f32 to vector<38x1xf32>
    %18 = arith.divf %16, %17 : vector<38x1xf32>
    %19 = vector.broadcast %11 : vector<38x1xf32> to vector<38x32xf32>
    %20 = arith.subf %5, %19 : vector<38x32xf32>
    %cst_13 = arith.constant 9.99999974E-6 : f32
    %21 = vector.broadcast %cst_13 : f32 to vector<38x1xf32>
    %22 = arith.addf %18, %21 : vector<38x1xf32>
    %23 = math.rsqrt %22 : vector<38x1xf32>
    %24 = vector.broadcast %23 : vector<38x1xf32> to vector<38x32xf32>
    %25 = arith.mulf %20, %24 : vector<38x32xf32>
    %26 = vector.broadcast %6 : vector<1x32xf32> to vector<38x32xf32>
    %27 = arith.mulf %25, %26 : vector<38x32xf32>
    %28 = vector.broadcast %7 : vector<1x32xf32> to vector<38x32xf32>
    %29 = arith.addf %27, %28 : vector<38x32xf32>
    %30 = arith.mulf %29, %29 : vector<38x32xf32>
    %31 = arith.mulf %29, %30 : vector<38x32xf32>
    %cst_14 = arith.constant 4.471500e-02 : f32
    %32 = vector.broadcast %cst_14 : f32 to vector<38x32xf32>
    %33 = arith.mulf %32, %31 : vector<38x32xf32>
    %34 = arith.addf %29, %33 : vector<38x32xf32>
    %cst_15 = arith.constant 0.797884583 : f32
    %35 = vector.broadcast %cst_15 : f32 to vector<38x32xf32>
    %36 = arith.mulf %35, %34 : vector<38x32xf32>
    %37 = math.tanh %36 : vector<38x32xf32>
    %cst_16 = arith.constant 1.000000e+00 : f32
    %38 = vector.broadcast %cst_16 : f32 to vector<38x32xf32>
    %39 = arith.addf %38, %37 : vector<38x32xf32>
    %cst_17 = arith.constant 5.000000e-01 : f32
    %40 = vector.broadcast %cst_17 : f32 to vector<38x32xf32>
    %41 = arith.mulf %40, %39 : vector<38x32xf32>
    %42 = arith.mulf %29, %41 : vector<38x32xf32>
    %c0_18 = arith.constant 0 : index
    %c0_19 = arith.constant 0 : index
    %43 = vector.load %arg6[%c0_18, %c0_19] : memref<38x32xf32, #tpu.memory_space<vmem>>, vector<38x32xf32>
    tpu.vector_store %arg6[%c0_18, %c0_19], %42 {strides = array<i32>} : memref<38x32xf32, #tpu.memory_space<vmem>>, vector<38x32xf32>,
    return
  }
  func.func @transform_0(%arg0: i32) -> (i32, i32) {
    %c0_i32 = arith.constant 0 : i32
    %c0_i32_0 = arith.constant 0 : i32
    %c0_i32_1 = arith.constant 0 : i32
    return %c0_i32, %c0_i32_0 : i32, i32
  }
  func.func @transform_1(%arg0: i32) -> (i32, i32) {
    %c0_i32 = arith.constant 0 : i32
    %c0_i32_0 = arith.constant 0 : i32
    %c0_i32_1 = arith.constant 0 : i32
    return %c0_i32, %c0_i32_0 : i32, i32
  }
  func.func @transform_2(%arg0: i32) -> (i32, i32) {
    %c0_i32 = arith.constant 0 : i32
    %c0_i32_0 = arith.constant 0 : i32
    %c0_i32_1 = arith.constant 0 : i32
    return %c0_i32, %c0_i32_0 : i32, i32
  }
  func.func @transform_3(%arg0: i32) -> (i32, i32) {
    %c0_i32 = arith.constant 0 : i32
    %c0_i32_0 = arith.constant 0 : i32
    %c0_i32_1 = arith.constant 0 : i32
    return %c0_i32, %c0_i32_0 : i32, i32
  }
  func.func @transform_4(%arg0: i32) -> (i32, i32) {
    %c0_i32 = arith.constant 0 : i32
    %c0_i32_0 = arith.constant 0 : i32
    %c0_i32_1 = arith.constant 0 : i32
    return %c0_i32, %c0_i32_0 : i32, i32
  }
  func.func @transform_5(%arg0: i32) -> (i32, i32) {
    %c0_i32 = arith.constant 0 : i32
    %c0_i32_0 = arith.constant 0 : i32
    %c0_i32_1 = arith.constant 0 : i32
    return %c0_i32, %c0_i32_0 : i32, i32
  }
}

module attributes {stable_mosaic.version = 11 : i64} {
  func.func @_ln_linear_kernel(%arg0: i32, %arg1: memref<38x32xf32, #tpu.memory_space<vmem>>, %arg2: memref<1x32xf32, #tpu.memory_space<vmem>>, %arg3: memref<1x32xf32, #tpu.memory_space<vmem>>, %arg4: memref<32x32xf32, #tpu.memory_space<vmem>>, %arg5: memref<1x32xf32, #tpu.memory_space<vmem>>, %arg6: memref<38x32xf32, #tpu.memory_space<vmem>>) attributes {dimension_semantics = [#tpu.dimension_semantics<arbitrary>], iteration_bounds = array<i64: 1>, scalar_prefetch = 0 : i64, scratch_operands = 0 : i64, tpu.core_type = #tpu.core_type<tc>, window_params = [{pipeline_mode = #tpu.pipeline_mode<synchronous>, transform_indices = @transform_0, window_bounds = array<i64: 38, 32>}, {pipeline_mode = #tpu.pipeline_mode<synchronous>, transform_indices = @transform_1, window_bounds = array<i64: 1, 32>}, {pipeline_mode = #tpu.pipeline_mode<synchronous>, transform_indices = @transform_2, window_bounds = array<i64: 1, 32>}, {pipeline_mode = #tpu.pipeline_mode<synchronous>, transform_indices = @transform_3, window_bounds = array<i64: 32, 32>}, {pipeline_mode = #tpu.pipeline_mode<synchronous>, transform_indices = @transform_4, window_bounds = array<i64: 1, 32>}, {pipeline_mode = #tpu.pipeline_mode<synchronous>, transform_indices = @transform_5, window_bounds = array<i64: 38, 32>}]} {
    %c0 = arith.constant 0 : index
    %c0_0 = arith.constant 0 : index
    %0 = vector.load %arg1[%c0, %c0_0] : memref<38x32xf32, #tpu.memory_space<vmem>>, vector<38x32xf32>
    %c0_1 = arith.constant 0 : index
    %c0_2 = arith.constant 0 : index
    %1 = vector.load %arg2[%c0_1, %c0_2] : memref<1x32xf32, #tpu.memory_space<vmem>>, vector<1x32xf32>
    %c0_3 = arith.constant 0 : index
    %c0_4 = arith.constant 0 : index
    %2 = vector.load %arg3[%c0_3, %c0_4] : memref<1x32xf32, #tpu.memory_space<vmem>>, vector<1x32xf32>
    %cst = arith.constant dense<0.000000e+00> : vector<38xf32>
    %3 = vector.multi_reduction <add>, %0, %cst [1] : vector<38x32xf32> to vector<38xf32>
    %4 = vector.shape_cast %3 : vector<38xf32> to vector<38x1xf32>
    %cst_5 = arith.constant 3.200000e+01 : f32
    %5 = vector.broadcast %cst_5 : f32 to vector<38x1xf32>
    %6 = arith.divf %4, %5 : vector<38x1xf32>
    %7 = vector.broadcast %6 : vector<38x1xf32> to vector<38x32xf32>
    %8 = arith.subf %0, %7 : vector<38x32xf32>
    %9 = arith.mulf %8, %8 : vector<38x32xf32>
    %cst_6 = arith.constant dense<0.000000e+00> : vector<38xf32>
    %10 = vector.multi_reduction <add>, %9, %cst_6 [1] : vector<38x32xf32> to vector<38xf32>
    %11 = vector.shape_cast %10 : vector<38xf32> to vector<38x1xf32>
    %cst_7 = arith.constant 3.200000e+01 : f32
    %12 = vector.broadcast %cst_7 : f32 to vector<38x1xf32>
    %13 = arith.divf %11, %12 : vector<38x1xf32>
    %14 = vector.broadcast %6 : vector<38x1xf32> to vector<38x32xf32>
    %15 = arith.subf %0, %14 : vector<38x32xf32>
    %cst_8 = arith.constant 9.99999974E-6 : f32
    %16 = vector.broadcast %cst_8 : f32 to vector<38x1xf32>
    %17 = arith.addf %13, %16 : vector<38x1xf32>
    %18 = math.rsqrt %17 : vector<38x1xf32>
    %19 = vector.broadcast %18 : vector<38x1xf32> to vector<38x32xf32>
    %20 = arith.mulf %15, %19 : vector<38x32xf32>
    %21 = vector.broadcast %1 : vector<1x32xf32> to vector<38x32xf32>
    %22 = arith.mulf %20, %21 : vector<38x32xf32>
    %23 = vector.broadcast %2 : vector<1x32xf32> to vector<38x32xf32>
    %24 = arith.addf %22, %23 : vector<38x32xf32>
    %c0_9 = arith.constant 0 : index
    %c0_10 = arith.constant 0 : index
    %25 = vector.load %arg4[%c0_9, %c0_10] : memref<32x32xf32, #tpu.memory_space<vmem>>, vector<32x32xf32>
    %cst_11 = arith.constant dense<0.000000e+00> : vector<38x32xf32>
    %26 = tpu.matmul %24, %25, %cst_11 {dimension_numbers = #tpu.dot_dimension_numbers<[1], [0], [0], [1], [0, 0, 1, 1], [], []>} : vector<38x32xf32>, vector<32x32xf32>, vector<38x32xf32> -> vector<38x32xf32>
    %c0_12 = arith.constant 0 : index
    %c0_13 = arith.constant 0 : index
    %27 = vector.load %arg5[%c0_12, %c0_13] : memref<1x32xf32, #tpu.memory_space<vmem>>, vector<1x32xf32>
    %28 = vector.broadcast %27 : vector<1x32xf32> to vector<38x32xf32>
    %29 = arith.addf %26, %28 : vector<38x32xf32>
    %c0_14 = arith.constant 0 : index
    %c0_15 = arith.constant 0 : index
    %30 = vector.load %arg6[%c0_14, %c0_15] : memref<38x32xf32, #tpu.memory_space<vmem>>, vector<38x32xf32>
    tpu.vector_store %arg6[%c0_14, %c0_15], %29 {strides = array<i32>} : memref<38x32xf32, #tpu.memory_space<vmem>>, vector<38x32xf32>,
    return
  }
  func.func @transform_0(%arg0: i32) -> (i32, i32) {
    %c0_i32 = arith.constant 0 : i32
    %c0_i32_0 = arith.constant 0 : i32
    %c0_i32_1 = arith.constant 0 : i32
    return %c0_i32, %c0_i32_0 : i32, i32
  }
  func.func @transform_1(%arg0: i32) -> (i32, i32) {
    %c0_i32 = arith.constant 0 : i32
    %c0_i32_0 = arith.constant 0 : i32
    %c0_i32_1 = arith.constant 0 : i32
    return %c0_i32, %c0_i32_0 : i32, i32
  }
  func.func @transform_2(%arg0: i32) -> (i32, i32) {
    %c0_i32 = arith.constant 0 : i32
    %c0_i32_0 = arith.constant 0 : i32
    %c0_i32_1 = arith.constant 0 : i32
    return %c0_i32, %c0_i32_0 : i32, i32
  }
  func.func @transform_3(%arg0: i32) -> (i32, i32) {
    %c0_i32 = arith.constant 0 : i32
    %c0_i32_0 = arith.constant 0 : i32
    %c0_i32_1 = arith.constant 0 : i32
    return %c0_i32, %c0_i32_0 : i32, i32
  }
  func.func @transform_4(%arg0: i32) -> (i32, i32) {
    %c0_i32 = arith.constant 0 : i32
    %c0_i32_0 = arith.constant 0 : i32
    %c0_i32_1 = arith.constant 0 : i32
    return %c0_i32, %c0_i32_0 : i32, i32
  }
  func.func @transform_5(%arg0: i32) -> (i32, i32) {
    %c0_i32 = arith.constant 0 : i32
    %c0_i32_0 = arith.constant 0 : i32
    %c0_i32_1 = arith.constant 0 : i32
    return %c0_i32, %c0_i32_0 : i32, i32
  }
}

module attributes {stable_mosaic.version = 11 : i64} {
  func.func @_posconv_kernel(%arg0: i32, %arg1: memref<38x32xf32, #tpu.memory_space<vmem>>, %arg2: memref<38x512xf32, #tpu.memory_space<vmem>>, %arg3: memref<512x32xf32, #tpu.memory_space<vmem>>, %arg4: memref<1x32xf32, #tpu.memory_space<vmem>>, %arg5: memref<38x32xf32, #tpu.memory_space<vmem>>) attributes {dimension_semantics = [#tpu.dimension_semantics<arbitrary>], iteration_bounds = array<i64: 1>, scalar_prefetch = 0 : i64, scratch_operands = 0 : i64, tpu.core_type = #tpu.core_type<tc>, window_params = [{pipeline_mode = #tpu.pipeline_mode<synchronous>, transform_indices = @transform_0, window_bounds = array<i64: 38, 32>}, {pipeline_mode = #tpu.pipeline_mode<synchronous>, transform_indices = @transform_1, window_bounds = array<i64: 38, 512>}, {pipeline_mode = #tpu.pipeline_mode<synchronous>, transform_indices = @transform_2, window_bounds = array<i64: 512, 32>}, {pipeline_mode = #tpu.pipeline_mode<synchronous>, transform_indices = @transform_3, window_bounds = array<i64: 1, 32>}, {pipeline_mode = #tpu.pipeline_mode<synchronous>, transform_indices = @transform_4, window_bounds = array<i64: 38, 32>}]} {
    %c0 = arith.constant 0 : index
    %c0_0 = arith.constant 0 : index
    %0 = vector.load %arg2[%c0, %c0_0] : memref<38x512xf32, #tpu.memory_space<vmem>>, vector<38x512xf32>
    %c0_1 = arith.constant 0 : index
    %c0_2 = arith.constant 0 : index
    %1 = vector.load %arg3[%c0_1, %c0_2] : memref<512x32xf32, #tpu.memory_space<vmem>>, vector<512x32xf32>
    %cst = arith.constant dense<0.000000e+00> : vector<38x32xf32>
    %2 = tpu.matmul %0, %1, %cst {dimension_numbers = #tpu.dot_dimension_numbers<[1], [0], [0], [1], [0, 0, 1, 1], [], []>} : vector<38x512xf32>, vector<512x32xf32>, vector<38x32xf32> -> vector<38x32xf32>
    %c0_3 = arith.constant 0 : index
    %c0_4 = arith.constant 0 : index
    %3 = vector.load %arg4[%c0_3, %c0_4] : memref<1x32xf32, #tpu.memory_space<vmem>>, vector<1x32xf32>
    %4 = vector.broadcast %3 : vector<1x32xf32> to vector<38x32xf32>
    %5 = arith.addf %2, %4 : vector<38x32xf32>
    %6 = arith.mulf %5, %5 : vector<38x32xf32>
    %7 = arith.mulf %5, %6 : vector<38x32xf32>
    %cst_5 = arith.constant 4.471500e-02 : f32
    %8 = vector.broadcast %cst_5 : f32 to vector<38x32xf32>
    %9 = arith.mulf %8, %7 : vector<38x32xf32>
    %10 = arith.addf %5, %9 : vector<38x32xf32>
    %cst_6 = arith.constant 0.797884583 : f32
    %11 = vector.broadcast %cst_6 : f32 to vector<38x32xf32>
    %12 = arith.mulf %11, %10 : vector<38x32xf32>
    %13 = math.tanh %12 : vector<38x32xf32>
    %cst_7 = arith.constant 1.000000e+00 : f32
    %14 = vector.broadcast %cst_7 : f32 to vector<38x32xf32>
    %15 = arith.addf %14, %13 : vector<38x32xf32>
    %cst_8 = arith.constant 5.000000e-01 : f32
    %16 = vector.broadcast %cst_8 : f32 to vector<38x32xf32>
    %17 = arith.mulf %16, %15 : vector<38x32xf32>
    %18 = arith.mulf %5, %17 : vector<38x32xf32>
    %c0_9 = arith.constant 0 : index
    %c0_10 = arith.constant 0 : index
    %19 = vector.load %arg1[%c0_9, %c0_10] : memref<38x32xf32, #tpu.memory_space<vmem>>, vector<38x32xf32>
    %20 = arith.addf %19, %18 : vector<38x32xf32>
    %c0_11 = arith.constant 0 : index
    %c0_12 = arith.constant 0 : index
    %21 = vector.load %arg5[%c0_11, %c0_12] : memref<38x32xf32, #tpu.memory_space<vmem>>, vector<38x32xf32>
    tpu.vector_store %arg5[%c0_11, %c0_12], %20 {strides = array<i32>} : memref<38x32xf32, #tpu.memory_space<vmem>>, vector<38x32xf32>,
    return
  }
  func.func @transform_0(%arg0: i32) -> (i32, i32) {
    %c0_i32 = arith.constant 0 : i32
    %c0_i32_0 = arith.constant 0 : i32
    %c0_i32_1 = arith.constant 0 : i32
    return %c0_i32, %c0_i32_0 : i32, i32
  }
  func.func @transform_1(%arg0: i32) -> (i32, i32) {
    %c0_i32 = arith.constant 0 : i32
    %c0_i32_0 = arith.constant 0 : i32
    %c0_i32_1 = arith.constant 0 : i32
    return %c0_i32, %c0_i32_0 : i32, i32
  }
  func.func @transform_2(%arg0: i32) -> (i32, i32) {
    %c0_i32 = arith.constant 0 : i32
    %c0_i32_0 = arith.constant 0 : i32
    %c0_i32_1 = arith.constant 0 : i32
    return %c0_i32, %c0_i32_0 : i32, i32
  }
  func.func @transform_3(%arg0: i32) -> (i32, i32) {
    %c0_i32 = arith.constant 0 : i32
    %c0_i32_0 = arith.constant 0 : i32
    %c0_i32_1 = arith.constant 0 : i32
    return %c0_i32, %c0_i32_0 : i32, i32
  }
  func.func @transform_4(%arg0: i32) -> (i32, i32) {
    %c0_i32 = arith.constant 0 : i32
    %c0_i32_0 = arith.constant 0 : i32
    %c0_i32_1 = arith.constant 0 : i32
    return %c0_i32, %c0_i32_0 : i32, i32
  }
}

module attributes {stable_mosaic.version = 11 : i64} {
  func.func @_encoder_layer_kernel(%arg0: i32, %arg1: memref<1x19x32xf32, #tpu.memory_space<vmem>>, %arg2: memref<1x32xf32, #tpu.memory_space<vmem>>, %arg3: memref<1x32xf32, #tpu.memory_space<vmem>>, %arg4: memref<32x96xf32, #tpu.memory_space<vmem>>, %arg5: memref<1x96xf32, #tpu.memory_space<vmem>>, %arg6: memref<32x32xf32, #tpu.memory_space<vmem>>, %arg7: memref<1x32xf32, #tpu.memory_space<vmem>>, %arg8: memref<1x32xf32, #tpu.memory_space<vmem>>, %arg9: memref<1x32xf32, #tpu.memory_space<vmem>>, %arg10: memref<32x64xf32, #tpu.memory_space<vmem>>, %arg11: memref<1x64xf32, #tpu.memory_space<vmem>>, %arg12: memref<64x32xf32, #tpu.memory_space<vmem>>, %arg13: memref<1x32xf32, #tpu.memory_space<vmem>>, %arg14: memref<1x19x32xf32, #tpu.memory_space<vmem>>) attributes {dimension_semantics = [#tpu.dimension_semantics<arbitrary>], iteration_bounds = array<i64: 2>, scalar_prefetch = 0 : i64, scratch_operands = 0 : i64, tpu.core_type = #tpu.core_type<tc>, window_params = [{transform_indices = @transform_0, window_bounds = array<i64: 1, 19, 32>}, {pipeline_mode = #tpu.pipeline_mode<synchronous>, transform_indices = @transform_1, window_bounds = array<i64: 1, 32>}, {pipeline_mode = #tpu.pipeline_mode<synchronous>, transform_indices = @transform_2, window_bounds = array<i64: 1, 32>}, {pipeline_mode = #tpu.pipeline_mode<synchronous>, transform_indices = @transform_3, window_bounds = array<i64: 32, 96>}, {pipeline_mode = #tpu.pipeline_mode<synchronous>, transform_indices = @transform_4, window_bounds = array<i64: 1, 96>}, {pipeline_mode = #tpu.pipeline_mode<synchronous>, transform_indices = @transform_5, window_bounds = array<i64: 32, 32>}, {pipeline_mode = #tpu.pipeline_mode<synchronous>, transform_indices = @transform_6, window_bounds = array<i64: 1, 32>}, {pipeline_mode = #tpu.pipeline_mode<synchronous>, transform_indices = @transform_7, window_bounds = array<i64: 1, 32>}, {pipeline_mode = #tpu.pipeline_mode<synchronous>, transform_indices = @transform_8, window_bounds = array<i64: 1, 32>}, {pipeline_mode = #tpu.pipeline_mode<synchronous>, transform_indices = @transform_9, window_bounds = array<i64: 32, 64>}, {pipeline_mode = #tpu.pipeline_mode<synchronous>, transform_indices = @transform_10, window_bounds = array<i64: 1, 64>}, {pipeline_mode = #tpu.pipeline_mode<synchronous>, transform_indices = @transform_11, window_bounds = array<i64: 64, 32>}, {pipeline_mode = #tpu.pipeline_mode<synchronous>, transform_indices = @transform_12, window_bounds = array<i64: 1, 32>}, {transform_indices = @transform_13, window_bounds = array<i64: 1, 19, 32>}]} {
    %c0 = arith.constant 0 : index
    %c0_0 = arith.constant 0 : index
    %c0_1 = arith.constant 0 : index
    %0 = vector.load %arg1[%c0, %c0_0, %c0_1] : memref<1x19x32xf32, #tpu.memory_space<vmem>>, vector<1x19x32xf32>
    %1 = vector.shape_cast %0 : vector<1x19x32xf32> to vector<19x32xf32>
    %c0_2 = arith.constant 0 : index
    %c0_3 = arith.constant 0 : index
    %2 = vector.load %arg2[%c0_2, %c0_3] : memref<1x32xf32, #tpu.memory_space<vmem>>, vector<1x32xf32>
    %c0_4 = arith.constant 0 : index
    %c0_5 = arith.constant 0 : index
    %3 = vector.load %arg3[%c0_4, %c0_5] : memref<1x32xf32, #tpu.memory_space<vmem>>, vector<1x32xf32>
    %cst = arith.constant dense<0.000000e+00> : vector<19xf32>
    %4 = vector.multi_reduction <add>, %1, %cst [1] : vector<19x32xf32> to vector<19xf32>
    %5 = vector.shape_cast %4 : vector<19xf32> to vector<19x1xf32>
    %cst_6 = arith.constant 3.200000e+01 : f32
    %6 = vector.broadcast %cst_6 : f32 to vector<19x1xf32>
    %7 = arith.divf %5, %6 : vector<19x1xf32>
    %8 = vector.broadcast %7 : vector<19x1xf32> to vector<19x32xf32>
    %9 = arith.subf %1, %8 : vector<19x32xf32>
    %10 = arith.mulf %9, %9 : vector<19x32xf32>
    %cst_7 = arith.constant dense<0.000000e+00> : vector<19xf32>
    %11 = vector.multi_reduction <add>, %10, %cst_7 [1] : vector<19x32xf32> to vector<19xf32>
    %12 = vector.shape_cast %11 : vector<19xf32> to vector<19x1xf32>
    %cst_8 = arith.constant 3.200000e+01 : f32
    %13 = vector.broadcast %cst_8 : f32 to vector<19x1xf32>
    %14 = arith.divf %12, %13 : vector<19x1xf32>
    %15 = vector.broadcast %7 : vector<19x1xf32> to vector<19x32xf32>
    %16 = arith.subf %1, %15 : vector<19x32xf32>
    %cst_9 = arith.constant 9.99999974E-6 : f32
    %17 = vector.broadcast %cst_9 : f32 to vector<19x1xf32>
    %18 = arith.addf %14, %17 : vector<19x1xf32>
    %19 = math.rsqrt %18 : vector<19x1xf32>
    %20 = vector.broadcast %19 : vector<19x1xf32> to vector<19x32xf32>
    %21 = arith.mulf %16, %20 : vector<19x32xf32>
    %22 = vector.broadcast %2 : vector<1x32xf32> to vector<19x32xf32>
    %23 = arith.mulf %21, %22 : vector<19x32xf32>
    %24 = vector.broadcast %3 : vector<1x32xf32> to vector<19x32xf32>
    %25 = arith.addf %23, %24 : vector<19x32xf32>
    %c0_10 = arith.constant 0 : index
    %c0_11 = arith.constant 0 : index
    %26 = vector.load %arg4[%c0_10, %c0_11] : memref<32x96xf32, #tpu.memory_space<vmem>>, vector<32x96xf32>
    %cst_12 = arith.constant dense<0.000000e+00> : vector<19x96xf32>
    %27 = tpu.matmul %25, %26, %cst_12 {dimension_numbers = #tpu.dot_dimension_numbers<[1], [0], [0], [1], [0, 0, 1, 1], [], []>} : vector<19x32xf32>, vector<32x96xf32>, vector<19x96xf32> -> vector<19x96xf32>
    %c0_13 = arith.constant 0 : index
    %c0_14 = arith.constant 0 : index
    %28 = vector.load %arg5[%c0_13, %c0_14] : memref<1x96xf32, #tpu.memory_space<vmem>>, vector<1x96xf32>
    %29 = vector.broadcast %28 : vector<1x96xf32> to vector<19x96xf32>
    %30 = arith.addf %27, %29 : vector<19x96xf32>
    %31 = vector.extract_strided_slice %30 {offsets = [0, 0], sizes = [19, 8], strides = [1, 1]} : vector<19x96xf32> to vector<19x8xf32>
    %cst_15 = arith.constant 0.353553385 : f32
    %32 = vector.broadcast %cst_15 : f32 to vector<19x8xf32>
    %33 = arith.mulf %31, %32 : vector<19x8xf32>
    %34 = vector.extract_strided_slice %30 {offsets = [0, 32], sizes = [19, 8], strides = [1, 1]} : vector<19x96xf32> to vector<19x8xf32>
    %35 = vector.extract_strided_slice %30 {offsets = [0, 64], sizes = [19, 8], strides = [1, 1]} : vector<19x96xf32> to vector<19x8xf32>
    %36 = tpu.transpose %34, [1, 0] : vector<19x8xf32> -> vector<8x19xf32>
    %cst_16 = arith.constant dense<0.000000e+00> : vector<19x19xf32>
    %37 = tpu.matmul %33, %36, %cst_16 {dimension_numbers = #tpu.dot_dimension_numbers<[1], [0], [0], [1], [0, 0, 1, 1], [], []>} : vector<19x8xf32>, vector<8x19xf32>, vector<19x19xf32> -> vector<19x19xf32>
    %cst_17 = arith.constant dense<0xFF800000> : vector<19xf32>
    %38 = vector.multi_reduction <maximumf>, %37, %cst_17 [1] : vector<19x19xf32> to vector<19xf32>
    %39 = vector.shape_cast %38 : vector<19xf32> to vector<19x1xf32>
    %40 = vector.broadcast %39 : vector<19x1xf32> to vector<19x19xf32>
    %41 = arith.subf %37, %40 : vector<19x19xf32>
    %42 = math.exp %41 : vector<19x19xf32>
    %cst_18 = arith.constant dense<0.000000e+00> : vector<19xf32>
    %43 = vector.multi_reduction <add>, %42, %cst_18 [1] : vector<19x19xf32> to vector<19xf32>
    %44 = vector.shape_cast %43 : vector<19xf32> to vector<19x1xf32>
    %45 = tpu.reciprocal %44 {approx = true} : vector<19x1xf32> -> vector<19x1xf32>
    %46 = vector.broadcast %45 : vector<19x1xf32> to vector<19x19xf32>
    %47 = arith.mulf %42, %46 : vector<19x19xf32>
    %cst_19 = arith.constant dense<0.000000e+00> : vector<19x8xf32>
    %48 = tpu.matmul %47, %35, %cst_19 {dimension_numbers = #tpu.dot_dimension_numbers<[1], [0], [0], [1], [0, 0, 1, 1], [], []>} : vector<19x19xf32>, vector<19x8xf32>, vector<19x8xf32> -> vector<19x8xf32>
    %49 = vector.extract_strided_slice %30 {offsets = [0, 8], sizes = [19, 8], strides = [1, 1]} : vector<19x96xf32> to vector<19x8xf32>
    %cst_20 = arith.constant 0.353553385 : f32
    %50 = vector.broadcast %cst_20 : f32 to vector<19x8xf32>
    %51 = arith.mulf %49, %50 : vector<19x8xf32>
    %52 = vector.extract_strided_slice %30 {offsets = [0, 40], sizes = [19, 8], strides = [1, 1]} : vector<19x96xf32> to vector<19x8xf32>
    %53 = vector.extract_strided_slice %30 {offsets = [0, 72], sizes = [19, 8], strides = [1, 1]} : vector<19x96xf32> to vector<19x8xf32>
    %54 = tpu.transpose %52, [1, 0] : vector<19x8xf32> -> vector<8x19xf32>
    %cst_21 = arith.constant dense<0.000000e+00> : vector<19x19xf32>
    %55 = tpu.matmul %51, %54, %cst_21 {dimension_numbers = #tpu.dot_dimension_numbers<[1], [0], [0], [1], [0, 0, 1, 1], [], []>} : vector<19x8xf32>, vector<8x19xf32>, vector<19x19xf32> -> vector<19x19xf32>
    %cst_22 = arith.constant dense<0xFF800000> : vector<19xf32>
    %56 = vector.multi_reduction <maximumf>, %55, %cst_22 [1] : vector<19x19xf32> to vector<19xf32>
    %57 = vector.shape_cast %56 : vector<19xf32> to vector<19x1xf32>
    %58 = vector.broadcast %57 : vector<19x1xf32> to vector<19x19xf32>
    %59 = arith.subf %55, %58 : vector<19x19xf32>
    %60 = math.exp %59 : vector<19x19xf32>
    %cst_23 = arith.constant dense<0.000000e+00> : vector<19xf32>
    %61 = vector.multi_reduction <add>, %60, %cst_23 [1] : vector<19x19xf32> to vector<19xf32>
    %62 = vector.shape_cast %61 : vector<19xf32> to vector<19x1xf32>
    %63 = tpu.reciprocal %62 {approx = true} : vector<19x1xf32> -> vector<19x1xf32>
    %64 = vector.broadcast %63 : vector<19x1xf32> to vector<19x19xf32>
    %65 = arith.mulf %60, %64 : vector<19x19xf32>
    %cst_24 = arith.constant dense<0.000000e+00> : vector<19x8xf32>
    %66 = tpu.matmul %65, %53, %cst_24 {dimension_numbers = #tpu.dot_dimension_numbers<[1], [0], [0], [1], [0, 0, 1, 1], [], []>} : vector<19x19xf32>, vector<19x8xf32>, vector<19x8xf32> -> vector<19x8xf32>
    %67 = vector.extract_strided_slice %30 {offsets = [0, 16], sizes = [19, 8], strides = [1, 1]} : vector<19x96xf32> to vector<19x8xf32>
    %cst_25 = arith.constant 0.353553385 : f32
    %68 = vector.broadcast %cst_25 : f32 to vector<19x8xf32>
    %69 = arith.mulf %67, %68 : vector<19x8xf32>
    %70 = vector.extract_strided_slice %30 {offsets = [0, 48], sizes = [19, 8], strides = [1, 1]} : vector<19x96xf32> to vector<19x8xf32>
    %71 = vector.extract_strided_slice %30 {offsets = [0, 80], sizes = [19, 8], strides = [1, 1]} : vector<19x96xf32> to vector<19x8xf32>
    %72 = tpu.transpose %70, [1, 0] : vector<19x8xf32> -> vector<8x19xf32>
    %cst_26 = arith.constant dense<0.000000e+00> : vector<19x19xf32>
    %73 = tpu.matmul %69, %72, %cst_26 {dimension_numbers = #tpu.dot_dimension_numbers<[1], [0], [0], [1], [0, 0, 1, 1], [], []>} : vector<19x8xf32>, vector<8x19xf32>, vector<19x19xf32> -> vector<19x19xf32>
    %cst_27 = arith.constant dense<0xFF800000> : vector<19xf32>
    %74 = vector.multi_reduction <maximumf>, %73, %cst_27 [1] : vector<19x19xf32> to vector<19xf32>
    %75 = vector.shape_cast %74 : vector<19xf32> to vector<19x1xf32>
    %76 = vector.broadcast %75 : vector<19x1xf32> to vector<19x19xf32>
    %77 = arith.subf %73, %76 : vector<19x19xf32>
    %78 = math.exp %77 : vector<19x19xf32>
    %cst_28 = arith.constant dense<0.000000e+00> : vector<19xf32>
    %79 = vector.multi_reduction <add>, %78, %cst_28 [1] : vector<19x19xf32> to vector<19xf32>
    %80 = vector.shape_cast %79 : vector<19xf32> to vector<19x1xf32>
    %81 = tpu.reciprocal %80 {approx = true} : vector<19x1xf32> -> vector<19x1xf32>
    %82 = vector.broadcast %81 : vector<19x1xf32> to vector<19x19xf32>
    %83 = arith.mulf %78, %82 : vector<19x19xf32>
    %cst_29 = arith.constant dense<0.000000e+00> : vector<19x8xf32>
    %84 = tpu.matmul %83, %71, %cst_29 {dimension_numbers = #tpu.dot_dimension_numbers<[1], [0], [0], [1], [0, 0, 1, 1], [], []>} : vector<19x19xf32>, vector<19x8xf32>, vector<19x8xf32> -> vector<19x8xf32>
    %85 = vector.extract_strided_slice %30 {offsets = [0, 24], sizes = [19, 8], strides = [1, 1]} : vector<19x96xf32> to vector<19x8xf32>
    %cst_30 = arith.constant 0.353553385 : f32
    %86 = vector.broadcast %cst_30 : f32 to vector<19x8xf32>
    %87 = arith.mulf %85, %86 : vector<19x8xf32>
    %88 = vector.extract_strided_slice %30 {offsets = [0, 56], sizes = [19, 8], strides = [1, 1]} : vector<19x96xf32> to vector<19x8xf32>
    %89 = vector.extract_strided_slice %30 {offsets = [0, 88], sizes = [19, 8], strides = [1, 1]} : vector<19x96xf32> to vector<19x8xf32>
    %90 = tpu.transpose %88, [1, 0] : vector<19x8xf32> -> vector<8x19xf32>
    %cst_31 = arith.constant dense<0.000000e+00> : vector<19x19xf32>
    %91 = tpu.matmul %87, %90, %cst_31 {dimension_numbers = #tpu.dot_dimension_numbers<[1], [0], [0], [1], [0, 0, 1, 1], [], []>} : vector<19x8xf32>, vector<8x19xf32>, vector<19x19xf32> -> vector<19x19xf32>
    %cst_32 = arith.constant dense<0xFF800000> : vector<19xf32>
    %92 = vector.multi_reduction <maximumf>, %91, %cst_32 [1] : vector<19x19xf32> to vector<19xf32>
    %93 = vector.shape_cast %92 : vector<19xf32> to vector<19x1xf32>
    %94 = vector.broadcast %93 : vector<19x1xf32> to vector<19x19xf32>
    %95 = arith.subf %91, %94 : vector<19x19xf32>
    %96 = math.exp %95 : vector<19x19xf32>
    %cst_33 = arith.constant dense<0.000000e+00> : vector<19xf32>
    %97 = vector.multi_reduction <add>, %96, %cst_33 [1] : vector<19x19xf32> to vector<19xf32>
    %98 = vector.shape_cast %97 : vector<19xf32> to vector<19x1xf32>
    %99 = tpu.reciprocal %98 {approx = true} : vector<19x1xf32> -> vector<19x1xf32>
    %100 = vector.broadcast %99 : vector<19x1xf32> to vector<19x19xf32>
    %101 = arith.mulf %96, %100 : vector<19x19xf32>
    %cst_34 = arith.constant dense<0.000000e+00> : vector<19x8xf32>
    %102 = tpu.matmul %101, %89, %cst_34 {dimension_numbers = #tpu.dot_dimension_numbers<[1], [0], [0], [1], [0, 0, 1, 1], [], []>} : vector<19x19xf32>, vector<19x8xf32>, vector<19x8xf32> -> vector<19x8xf32>
    %103 = tpu.concatenate %48, %66, %84, %102 in 1 : vector<19x8xf32>, vector<19x8xf32>, vector<19x8xf32>, vector<19x8xf32> -> vector<19x32xf32>
    %c0_35 = arith.constant 0 : index
    %c0_36 = arith.constant 0 : index
    %104 = vector.load %arg6[%c0_35, %c0_36] : memref<32x32xf32, #tpu.memory_space<vmem>>, vector<32x32xf32>
    %cst_37 = arith.constant dense<0.000000e+00> : vector<19x32xf32>
    %105 = tpu.matmul %103, %104, %cst_37 {dimension_numbers = #tpu.dot_dimension_numbers<[1], [0], [0], [1], [0, 0, 1, 1], [], []>} : vector<19x32xf32>, vector<32x32xf32>, vector<19x32xf32> -> vector<19x32xf32>
    %c0_38 = arith.constant 0 : index
    %c0_39 = arith.constant 0 : index
    %106 = vector.load %arg7[%c0_38, %c0_39] : memref<1x32xf32, #tpu.memory_space<vmem>>, vector<1x32xf32>
    %107 = vector.broadcast %106 : vector<1x32xf32> to vector<19x32xf32>
    %108 = arith.addf %105, %107 : vector<19x32xf32>
    %109 = arith.addf %1, %108 : vector<19x32xf32>
    %c0_40 = arith.constant 0 : index
    %c0_41 = arith.constant 0 : index
    %110 = vector.load %arg8[%c0_40, %c0_41] : memref<1x32xf32, #tpu.memory_space<vmem>>, vector<1x32xf32>
    %c0_42 = arith.constant 0 : index
    %c0_43 = arith.constant 0 : index
    %111 = vector.load %arg9[%c0_42, %c0_43] : memref<1x32xf32, #tpu.memory_space<vmem>>, vector<1x32xf32>
    %cst_44 = arith.constant dense<0.000000e+00> : vector<19xf32>
    %112 = vector.multi_reduction <add>, %109, %cst_44 [1] : vector<19x32xf32> to vector<19xf32>
    %113 = vector.shape_cast %112 : vector<19xf32> to vector<19x1xf32>
    %cst_45 = arith.constant 3.200000e+01 : f32
    %114 = vector.broadcast %cst_45 : f32 to vector<19x1xf32>
    %115 = arith.divf %113, %114 : vector<19x1xf32>
    %116 = vector.broadcast %115 : vector<19x1xf32> to vector<19x32xf32>
    %117 = arith.subf %109, %116 : vector<19x32xf32>
    %118 = arith.mulf %117, %117 : vector<19x32xf32>
    %cst_46 = arith.constant dense<0.000000e+00> : vector<19xf32>
    %119 = vector.multi_reduction <add>, %118, %cst_46 [1] : vector<19x32xf32> to vector<19xf32>
    %120 = vector.shape_cast %119 : vector<19xf32> to vector<19x1xf32>
    %cst_47 = arith.constant 3.200000e+01 : f32
    %121 = vector.broadcast %cst_47 : f32 to vector<19x1xf32>
    %122 = arith.divf %120, %121 : vector<19x1xf32>
    %123 = vector.broadcast %115 : vector<19x1xf32> to vector<19x32xf32>
    %124 = arith.subf %109, %123 : vector<19x32xf32>
    %cst_48 = arith.constant 9.99999974E-6 : f32
    %125 = vector.broadcast %cst_48 : f32 to vector<19x1xf32>
    %126 = arith.addf %122, %125 : vector<19x1xf32>
    %127 = math.rsqrt %126 : vector<19x1xf32>
    %128 = vector.broadcast %127 : vector<19x1xf32> to vector<19x32xf32>
    %129 = arith.mulf %124, %128 : vector<19x32xf32>
    %130 = vector.broadcast %110 : vector<1x32xf32> to vector<19x32xf32>
    %131 = arith.mulf %129, %130 : vector<19x32xf32>
    %132 = vector.broadcast %111 : vector<1x32xf32> to vector<19x32xf32>
    %133 = arith.addf %131, %132 : vector<19x32xf32>
    %c0_49 = arith.constant 0 : index
    %c0_50 = arith.constant 0 : index
    %134 = vector.load %arg10[%c0_49, %c0_50] : memref<32x64xf32, #tpu.memory_space<vmem>>, vector<32x64xf32>
    %cst_51 = arith.constant dense<0.000000e+00> : vector<19x64xf32>
    %135 = tpu.matmul %133, %134, %cst_51 {dimension_numbers = #tpu.dot_dimension_numbers<[1], [0], [0], [1], [0, 0, 1, 1], [], []>} : vector<19x32xf32>, vector<32x64xf32>, vector<19x64xf32> -> vector<19x64xf32>
    %c0_52 = arith.constant 0 : index
    %c0_53 = arith.constant 0 : index
    %136 = vector.load %arg11[%c0_52, %c0_53] : memref<1x64xf32, #tpu.memory_space<vmem>>, vector<1x64xf32>
    %137 = vector.broadcast %136 : vector<1x64xf32> to vector<19x64xf32>
    %138 = arith.addf %135, %137 : vector<19x64xf32>
    %139 = arith.mulf %138, %138 : vector<19x64xf32>
    %140 = arith.mulf %138, %139 : vector<19x64xf32>
    %cst_54 = arith.constant 4.471500e-02 : f32
    %141 = vector.broadcast %cst_54 : f32 to vector<19x64xf32>
    %142 = arith.mulf %141, %140 : vector<19x64xf32>
    %143 = arith.addf %138, %142 : vector<19x64xf32>
    %cst_55 = arith.constant 0.797884583 : f32
    %144 = vector.broadcast %cst_55 : f32 to vector<19x64xf32>
    %145 = arith.mulf %144, %143 : vector<19x64xf32>
    %146 = math.tanh %145 : vector<19x64xf32>
    %cst_56 = arith.constant 1.000000e+00 : f32
    %147 = vector.broadcast %cst_56 : f32 to vector<19x64xf32>
    %148 = arith.addf %147, %146 : vector<19x64xf32>
    %cst_57 = arith.constant 5.000000e-01 : f32
    %149 = vector.broadcast %cst_57 : f32 to vector<19x64xf32>
    %150 = arith.mulf %149, %148 : vector<19x64xf32>
    %151 = arith.mulf %138, %150 : vector<19x64xf32>
    %c0_58 = arith.constant 0 : index
    %c0_59 = arith.constant 0 : index
    %152 = vector.load %arg12[%c0_58, %c0_59] : memref<64x32xf32, #tpu.memory_space<vmem>>, vector<64x32xf32>
    %cst_60 = arith.constant dense<0.000000e+00> : vector<19x32xf32>
    %153 = tpu.matmul %151, %152, %cst_60 {dimension_numbers = #tpu.dot_dimension_numbers<[1], [0], [0], [1], [0, 0, 1, 1], [], []>} : vector<19x64xf32>, vector<64x32xf32>, vector<19x32xf32> -> vector<19x32xf32>
    %c0_61 = arith.constant 0 : index
    %c0_62 = arith.constant 0 : index
    %154 = vector.load %arg13[%c0_61, %c0_62] : memref<1x32xf32, #tpu.memory_space<vmem>>, vector<1x32xf32>
    %155 = vector.broadcast %154 : vector<1x32xf32> to vector<19x32xf32>
    %156 = arith.addf %153, %155 : vector<19x32xf32>
    %157 = arith.addf %109, %156 : vector<19x32xf32>
    %c0_63 = arith.constant 0 : index
    %c0_64 = arith.constant 0 : index
    %c0_65 = arith.constant 0 : index
    %158 = vector.load %arg14[%c0_63, %c0_64, %c0_65] : memref<1x19x32xf32, #tpu.memory_space<vmem>>, vector<1x19x32xf32>
    %159 = vector.shape_cast %158 : vector<1x19x32xf32> to vector<19x32xf32>
    %160 = vector.shape_cast %157 : vector<19x32xf32> to vector<1x19x32xf32>
    tpu.vector_store %arg14[%c0_63, %c0_64, %c0_65], %160 {strides = array<i32>} : memref<1x19x32xf32, #tpu.memory_space<vmem>>, vector<1x19x32xf32>,
    return
  }
  func.func @transform_0(%arg0: i32) -> (i32, i32, i32) {
    %c0_i32 = arith.constant 0 : i32
    %c0_i32_0 = arith.constant 0 : i32
    %c0_i32_1 = arith.constant 0 : i32
    return %arg0, %c0_i32, %c0_i32_0 : i32, i32, i32
  }
  func.func @transform_1(%arg0: i32) -> (i32, i32) {
    %c0_i32 = arith.constant 0 : i32
    %c0_i32_0 = arith.constant 0 : i32
    %c0_i32_1 = arith.constant 0 : i32
    return %c0_i32, %c0_i32_0 : i32, i32
  }
  func.func @transform_2(%arg0: i32) -> (i32, i32) {
    %c0_i32 = arith.constant 0 : i32
    %c0_i32_0 = arith.constant 0 : i32
    %c0_i32_1 = arith.constant 0 : i32
    return %c0_i32, %c0_i32_0 : i32, i32
  }
  func.func @transform_3(%arg0: i32) -> (i32, i32) {
    %c0_i32 = arith.constant 0 : i32
    %c0_i32_0 = arith.constant 0 : i32
    %c0_i32_1 = arith.constant 0 : i32
    return %c0_i32, %c0_i32_0 : i32, i32
  }
  func.func @transform_4(%arg0: i32) -> (i32, i32) {
    %c0_i32 = arith.constant 0 : i32
    %c0_i32_0 = arith.constant 0 : i32
    %c0_i32_1 = arith.constant 0 : i32
    return %c0_i32, %c0_i32_0 : i32, i32
  }
  func.func @transform_5(%arg0: i32) -> (i32, i32) {
    %c0_i32 = arith.constant 0 : i32
    %c0_i32_0 = arith.constant 0 : i32
    %c0_i32_1 = arith.constant 0 : i32
    return %c0_i32, %c0_i32_0 : i32, i32
  }
  func.func @transform_6(%arg0: i32) -> (i32, i32) {
    %c0_i32 = arith.constant 0 : i32
    %c0_i32_0 = arith.constant 0 : i32
    %c0_i32_1 = arith.constant 0 : i32
    return %c0_i32, %c0_i32_0 : i32, i32
  }
  func.func @transform_7(%arg0: i32) -> (i32, i32) {
    %c0_i32 = arith.constant 0 : i32
    %c0_i32_0 = arith.constant 0 : i32
    %c0_i32_1 = arith.constant 0 : i32
    return %c0_i32, %c0_i32_0 : i32, i32
  }
  func.func @transform_8(%arg0: i32) -> (i32, i32) {
    %c0_i32 = arith.constant 0 : i32
    %c0_i32_0 = arith.constant 0 : i32
    %c0_i32_1 = arith.constant 0 : i32
    return %c0_i32, %c0_i32_0 : i32, i32
  }
  func.func @transform_9(%arg0: i32) -> (i32, i32) {
    %c0_i32 = arith.constant 0 : i32
    %c0_i32_0 = arith.constant 0 : i32
    %c0_i32_1 = arith.constant 0 : i32
    return %c0_i32, %c0_i32_0 : i32, i32
  }
  func.func @transform_10(%arg0: i32) -> (i32, i32) {
    %c0_i32 = arith.constant 0 : i32
    %c0_i32_0 = arith.constant 0 : i32
    %c0_i32_1 = arith.constant 0 : i32
    return %c0_i32, %c0_i32_0 : i32, i32
  }
  func.func @transform_11(%arg0: i32) -> (i32, i32) {
    %c0_i32 = arith.constant 0 : i32
    %c0_i32_0 = arith.constant 0 : i32
    %c0_i32_1 = arith.constant 0 : i32
    return %c0_i32, %c0_i32_0 : i32, i32
  }
  func.func @transform_12(%arg0: i32) -> (i32, i32) {
    %c0_i32 = arith.constant 0 : i32
    %c0_i32_0 = arith.constant 0 : i32
    %c0_i32_1 = arith.constant 0 : i32
    return %c0_i32, %c0_i32_0 : i32, i32
  }
  func.func @transform_13(%arg0: i32) -> (i32, i32, i32) {
    %c0_i32 = arith.constant 0 : i32
    %c0_i32_0 = arith.constant 0 : i32
    %c0_i32_1 = arith.constant 0 : i32
    return %arg0, %c0_i32, %c0_i32_0 : i32, i32, i32
  }
}

module attributes {stable_mosaic.version = 11 : i64} {
  func.func @_final_kernel(%arg0: i32, %arg1: memref<2x19x32xf32, #tpu.memory_space<vmem>>, %arg2: memref<1x32xf32, #tpu.memory_space<vmem>>, %arg3: memref<1x32xf32, #tpu.memory_space<vmem>>, %arg4: memref<32x5xf32, #tpu.memory_space<vmem>>, %arg5: memref<1x5xf32, #tpu.memory_space<vmem>>, %arg6: memref<2x5xf32, #tpu.memory_space<vmem>>) attributes {dimension_semantics = [#tpu.dimension_semantics<arbitrary>], iteration_bounds = array<i64: 1>, scalar_prefetch = 0 : i64, scratch_operands = 0 : i64, tpu.core_type = #tpu.core_type<tc>, window_params = [{pipeline_mode = #tpu.pipeline_mode<synchronous>, transform_indices = @transform_0, window_bounds = array<i64: 2, 19, 32>}, {pipeline_mode = #tpu.pipeline_mode<synchronous>, transform_indices = @transform_1, window_bounds = array<i64: 1, 32>}, {pipeline_mode = #tpu.pipeline_mode<synchronous>, transform_indices = @transform_2, window_bounds = array<i64: 1, 32>}, {pipeline_mode = #tpu.pipeline_mode<synchronous>, transform_indices = @transform_3, window_bounds = array<i64: 32, 5>}, {pipeline_mode = #tpu.pipeline_mode<synchronous>, transform_indices = @transform_4, window_bounds = array<i64: 1, 5>}, {pipeline_mode = #tpu.pipeline_mode<synchronous>, transform_indices = @transform_5, window_bounds = array<i64: 2, 5>}]} {
    %c0 = arith.constant 0 : index
    %c0_0 = arith.constant 0 : index
    %c0_1 = arith.constant 0 : index
    %0 = vector.load %arg1[%c0, %c0_0, %c0_1] : memref<2x19x32xf32, #tpu.memory_space<vmem>>, vector<1x19x32xf32>
    %1 = vector.shape_cast %0 : vector<1x19x32xf32> to vector<19x32xf32>
    %c0_2 = arith.constant 0 : index
    %c0_3 = arith.constant 0 : index
    %2 = vector.load %arg2[%c0_2, %c0_3] : memref<1x32xf32, #tpu.memory_space<vmem>>, vector<1x32xf32>
    %c0_4 = arith.constant 0 : index
    %c0_5 = arith.constant 0 : index
    %3 = vector.load %arg3[%c0_4, %c0_5] : memref<1x32xf32, #tpu.memory_space<vmem>>, vector<1x32xf32>
    %cst = arith.constant dense<0.000000e+00> : vector<19xf32>
    %4 = vector.multi_reduction <add>, %1, %cst [1] : vector<19x32xf32> to vector<19xf32>
    %5 = vector.shape_cast %4 : vector<19xf32> to vector<19x1xf32>
    %cst_6 = arith.constant 3.200000e+01 : f32
    %6 = vector.broadcast %cst_6 : f32 to vector<19x1xf32>
    %7 = arith.divf %5, %6 : vector<19x1xf32>
    %8 = vector.broadcast %7 : vector<19x1xf32> to vector<19x32xf32>
    %9 = arith.subf %1, %8 : vector<19x32xf32>
    %10 = arith.mulf %9, %9 : vector<19x32xf32>
    %cst_7 = arith.constant dense<0.000000e+00> : vector<19xf32>
    %11 = vector.multi_reduction <add>, %10, %cst_7 [1] : vector<19x32xf32> to vector<19xf32>
    %12 = vector.shape_cast %11 : vector<19xf32> to vector<19x1xf32>
    %cst_8 = arith.constant 3.200000e+01 : f32
    %13 = vector.broadcast %cst_8 : f32 to vector<19x1xf32>
    %14 = arith.divf %12, %13 : vector<19x1xf32>
    %15 = vector.broadcast %7 : vector<19x1xf32> to vector<19x32xf32>
    %16 = arith.subf %1, %15 : vector<19x32xf32>
    %cst_9 = arith.constant 9.99999974E-6 : f32
    %17 = vector.broadcast %cst_9 : f32 to vector<19x1xf32>
    %18 = arith.addf %14, %17 : vector<19x1xf32>
    %19 = math.rsqrt %18 : vector<19x1xf32>
    %20 = vector.broadcast %19 : vector<19x1xf32> to vector<19x32xf32>
    %21 = arith.mulf %16, %20 : vector<19x32xf32>
    %22 = vector.broadcast %2 : vector<1x32xf32> to vector<19x32xf32>
    %23 = arith.mulf %21, %22 : vector<19x32xf32>
    %24 = vector.broadcast %3 : vector<1x32xf32> to vector<19x32xf32>
    %25 = arith.addf %23, %24 : vector<19x32xf32>
    %cst_10 = arith.constant dense<0.000000e+00> : vector<32xf32>
    %26 = vector.multi_reduction <add>, %25, %cst_10 [0] : vector<19x32xf32> to vector<32xf32>
    %27 = vector.shape_cast %26 : vector<32xf32> to vector<1x32xf32>
    %cst_11 = arith.constant 1.900000e+01 : f32
    %28 = vector.broadcast %cst_11 : f32 to vector<1x32xf32>
    %29 = arith.divf %27, %28 : vector<1x32xf32>
    %c1 = arith.constant 1 : index
    %c0_12 = arith.constant 0 : index
    %c0_13 = arith.constant 0 : index
    %30 = vector.load %arg1[%c1, %c0_12, %c0_13] : memref<2x19x32xf32, #tpu.memory_space<vmem>>, vector<1x19x32xf32>
    %31 = vector.shape_cast %30 : vector<1x19x32xf32> to vector<19x32xf32>
    %c0_14 = arith.constant 0 : index
    %c0_15 = arith.constant 0 : index
    %32 = vector.load %arg2[%c0_14, %c0_15] : memref<1x32xf32, #tpu.memory_space<vmem>>, vector<1x32xf32>
    %c0_16 = arith.constant 0 : index
    %c0_17 = arith.constant 0 : index
    %33 = vector.load %arg3[%c0_16, %c0_17] : memref<1x32xf32, #tpu.memory_space<vmem>>, vector<1x32xf32>
    %cst_18 = arith.constant dense<0.000000e+00> : vector<19xf32>
    %34 = vector.multi_reduction <add>, %31, %cst_18 [1] : vector<19x32xf32> to vector<19xf32>
    %35 = vector.shape_cast %34 : vector<19xf32> to vector<19x1xf32>
    %cst_19 = arith.constant 3.200000e+01 : f32
    %36 = vector.broadcast %cst_19 : f32 to vector<19x1xf32>
    %37 = arith.divf %35, %36 : vector<19x1xf32>
    %38 = vector.broadcast %37 : vector<19x1xf32> to vector<19x32xf32>
    %39 = arith.subf %31, %38 : vector<19x32xf32>
    %40 = arith.mulf %39, %39 : vector<19x32xf32>
    %cst_20 = arith.constant dense<0.000000e+00> : vector<19xf32>
    %41 = vector.multi_reduction <add>, %40, %cst_20 [1] : vector<19x32xf32> to vector<19xf32>
    %42 = vector.shape_cast %41 : vector<19xf32> to vector<19x1xf32>
    %cst_21 = arith.constant 3.200000e+01 : f32
    %43 = vector.broadcast %cst_21 : f32 to vector<19x1xf32>
    %44 = arith.divf %42, %43 : vector<19x1xf32>
    %45 = vector.broadcast %37 : vector<19x1xf32> to vector<19x32xf32>
    %46 = arith.subf %31, %45 : vector<19x32xf32>
    %cst_22 = arith.constant 9.99999974E-6 : f32
    %47 = vector.broadcast %cst_22 : f32 to vector<19x1xf32>
    %48 = arith.addf %44, %47 : vector<19x1xf32>
    %49 = math.rsqrt %48 : vector<19x1xf32>
    %50 = vector.broadcast %49 : vector<19x1xf32> to vector<19x32xf32>
    %51 = arith.mulf %46, %50 : vector<19x32xf32>
    %52 = vector.broadcast %32 : vector<1x32xf32> to vector<19x32xf32>
    %53 = arith.mulf %51, %52 : vector<19x32xf32>
    %54 = vector.broadcast %33 : vector<1x32xf32> to vector<19x32xf32>
    %55 = arith.addf %53, %54 : vector<19x32xf32>
    %cst_23 = arith.constant dense<0.000000e+00> : vector<32xf32>
    %56 = vector.multi_reduction <add>, %55, %cst_23 [0] : vector<19x32xf32> to vector<32xf32>
    %57 = vector.shape_cast %56 : vector<32xf32> to vector<1x32xf32>
    %cst_24 = arith.constant 1.900000e+01 : f32
    %58 = vector.broadcast %cst_24 : f32 to vector<1x32xf32>
    %59 = arith.divf %57, %58 : vector<1x32xf32>
    %60 = tpu.concatenate %29, %59 in 0 : vector<1x32xf32>, vector<1x32xf32> -> vector<2x32xf32>
    %c0_25 = arith.constant 0 : index
    %c0_26 = arith.constant 0 : index
    %61 = vector.load %arg4[%c0_25, %c0_26] : memref<32x5xf32, #tpu.memory_space<vmem>>, vector<32x5xf32>
    %cst_27 = arith.constant dense<0.000000e+00> : vector<2x5xf32>
    %62 = tpu.matmul %60, %61, %cst_27 {dimension_numbers = #tpu.dot_dimension_numbers<[1], [0], [0], [1], [0, 0, 1, 1], [], []>} : vector<2x32xf32>, vector<32x5xf32>, vector<2x5xf32> -> vector<2x5xf32>
    %c0_28 = arith.constant 0 : index
    %c0_29 = arith.constant 0 : index
    %63 = vector.load %arg5[%c0_28, %c0_29] : memref<1x5xf32, #tpu.memory_space<vmem>>, vector<1x5xf32>
    %64 = vector.broadcast %63 : vector<1x5xf32> to vector<2x5xf32>
    %65 = arith.addf %62, %64 : vector<2x5xf32>
    %c0_30 = arith.constant 0 : index
    %c0_31 = arith.constant 0 : index
    %66 = vector.load %arg6[%c0_30, %c0_31] : memref<2x5xf32, #tpu.memory_space<vmem>>, vector<2x5xf32>
    tpu.vector_store %arg6[%c0_30, %c0_31], %65 {strides = array<i32>} : memref<2x5xf32, #tpu.memory_space<vmem>>, vector<2x5xf32>,
    return
  }
  func.func @transform_0(%arg0: i32) -> (i32, i32, i32) {
    %c0_i32 = arith.constant 0 : i32
    %c0_i32_0 = arith.constant 0 : i32
    %c0_i32_1 = arith.constant 0 : i32
    %c0_i32_2 = arith.constant 0 : i32
    return %c0_i32, %c0_i32_0, %c0_i32_1 : i32, i32, i32
  }
  func.func @transform_1(%arg0: i32) -> (i32, i32) {
    %c0_i32 = arith.constant 0 : i32
    %c0_i32_0 = arith.constant 0 : i32
    %c0_i32_1 = arith.constant 0 : i32
    return %c0_i32, %c0_i32_0 : i32, i32
  }
  func.func @transform_2(%arg0: i32) -> (i32, i32) {
    %c0_i32 = arith.constant 0 : i32
    %c0_i32_0 = arith.constant 0 : i32
    %c0_i32_1 = arith.constant 0 : i32
    return %c0_i32, %c0_i32_0 : i32, i32
  }
  func.func @transform_3(%arg0: i32) -> (i32, i32) {
    %c0_i32 = arith.constant 0 : i32
    %c0_i32_0 = arith.constant 0 : i32
    %c0_i32_1 = arith.constant 0 : i32
    return %c0_i32, %c0_i32_0 : i32, i32
  }
  func.func @transform_4(%arg0: i32) -> (i32, i32) {
    %c0_i32 = arith.constant 0 : i32
    %c0_i32_0 = arith.constant 0 : i32
    %c0_i32_1 = arith.constant 0 : i32
    return %c0_i32, %c0_i32_0 : i32, i32
  }
  func.func @transform_5(%arg0: i32) -> (i32, i32) {
    %c0_i32 = arith.constant 0 : i32
    %c0_i32_0 = arith.constant 0 : i32
    %c0_i32_1 = arith.constant 0 : i32
    return %c0_i32, %c0_i32_0 : i32, i32
  }
}

</mosaic_0001>

<llo_original>
// kernel: hubert_ft_forward.8
$region0: #{hubert_ft_forward.8}
  #allocation0 [shape = 'u32[]', space=smem, size = 0x4, offset = 0x4, fixed_abs, tag = 'smem constant byte address 0x4 - core index']
  #allocation1 [shape = 'u32[144,128]{1,0:T(1,128)}', space=vmem, size = 0x12000, scoped, tag = 'internal scratch']
  %s0 = inlined_call_operand.vmem [shape: f32[158,10], index: 0, kind: input, shape index: {}]
  %s1 = inlined_call_operand.vmem [shape: f32[10,16], index: 1, kind: input, shape index: {}]
  %s2 = inlined_call_operand.vmem [shape: f32[1,16], index: 2, kind: input, shape index: {}]
  %s3 = inlined_call_operand.vmem [shape: f32[1,16], index: 3, kind: input, shape index: {}]
  %s4 = inlined_call_operand.vmem [shape: f32[1,16], index: 4, kind: input, shape index: {}]
  %s5 = inlined_call_operand.vmem [shape: f32[158,16], index: 5, kind: output, shape index: {}]
  %s6 = sld [smem:[#allocation0]]
  $region30: #{hubert_ft_forward.8} parent=0
    _
  %s8 = ssub.s32 1, %s6
  %s9 = scalar_select 0, %s8, %s6
  // Predicated region
  $region2: #{hubert_ft_forward.8} parent=0 // pred_check
    _
  $region3: #{hubert_ft_forward.8} parent=0 // pred_check_branch
    %11 = sbr.rel (0) target = $region5
  $region4: #{hubert_ft_forward.8} parent=0 // pred_region
    _
  $region5: #{hubert_ft_forward.8} parent=0 // pred_fallthru
    _
  // Predicated region
  $region6: #{hubert_ft_forward.8} parent=0 // pred_check
    _
  $region7: #{hubert_ft_forward.8} parent=0 // pred_check_branch
    %13 = sbr.rel (0) target = $region9
  $region8: #{hubert_ft_forward.8} parent=0 // pred_region
    _
  $region9: #{hubert_ft_forward.8} parent=0 // pred_fallthru
    _
  // Predicated region
  $region10: #{hubert_ft_forward.8} parent=0 // pred_check
    _
  $region11: #{hubert_ft_forward.8} parent=0 // pred_check_branch
    %15 = sbr.rel (0) target = $region13
  $region12: #{hubert_ft_forward.8} parent=0 // pred_region
    _
  $region13: #{hubert_ft_forward.8} parent=0 // pred_fallthru
    _
  // Predicated region
  $region14: #{hubert_ft_forward.8} parent=0 // pred_check
    _
  $region15: #{hubert_ft_forward.8} parent=0 // pred_check_branch
    %17 = sbr.rel (0) target = $region17
  $region16: #{hubert_ft_forward.8} parent=0 // pred_region
    _
  $region17: #{hubert_ft_forward.8} parent=0 // pred_fallthru
    _
  // Predicated region
  $region18: #{hubert_ft_forward.8} parent=0 // pred_check
    _
  $region19: #{hubert_ft_forward.8} parent=0 // pred_check_branch
    %19 = sbr.rel (0) target = $region21
  $region20: #{hubert_ft_forward.8} parent=0 // pred_region
    _
  $region21: #{hubert_ft_forward.8} parent=0 // pred_fallthru
    _
  %v20 = vld [vmem:[%s0] sm:$0xff]
  %v21 = vld [vmem:[%s0 + $0x8] sm:$0xff]
  %v22 = vld [vmem:[%s0 + $0x10] sm:$0xff]
  %v23 = vld [vmem:[%s0 + $0x18] sm:$0xff]
  %v24 = vld [vmem:[%s0 + $0x20] sm:$0xff]
  %v25 = vld [vmem:[%s0 + $0x28] sm:$0xff]
  %v26 = vld [vmem:[%s0 + $0x30] sm:$0xff]
  %v27 = vld [vmem:[%s0 + $0x38] sm:$0xff]
  %v28 = vld [vmem:[%s0 + $0x40] sm:$0xff]
  %v29 = vld [vmem:[%s0 + $0x48] sm:$0xff]
  %v30 = vld [vmem:[%s0 + $0x50] sm:$0xff]
  %v31 = vld [vmem:[%s0 + $0x58] sm:$0xff]
  %v32 = vld [vmem:[%s0 + $0x60] sm:$0xff]
  %v33 = vld [vmem:[%s0 + $0x68] sm:$0xff]
  %v34 = vld [vmem:[%s0 + $0x70] sm:$0xff]
  %v35 = vld [vmem:[%s0 + $0x78] sm:$0xff]
  %v36 = vld [vmem:[%s0 + $0x80] sm:$0xff]
  %v37 = vld [vmem:[%s0 + $0x88] sm:$0xff]
  %v38 = vld [vmem:[%s0 + $0x90] sm:$0xff]
  %v39 = vld [vmem:[%s0 + $0x98] sm:$0x3f]
  %v40 = vld [vmem:[%s1] sm:$0xff]
  %v41 = vld [vmem:[%s1 + $0x8] sm:$0x3]
  %v42 = vld [vmem:[%s2] sm:$0x1]
  %v44 = vlaneseq
  %v45 = vshrl.u32 %v44, 7
  %v46 = vsub.s32 0, %v45
  %v47 = vrot.slane %v42, %v46
  %vm49 = vcmask 80896
  %v51 = vsel %vm49, %v20, 0
  %v54 = vsel %vm49, %v21, 0
  %v57 = vsel %vm49, %v22, 0
  %v60 = vsel %vm49, %v23, 0
  %v63 = vsel %vm49, %v24, 0
  %v66 = vsel %vm49, %v25, 0
  %v69 = vsel %vm49, %v26, 0
  %v72 = vsel %vm49, %v27, 0
  %v75 = vsel %vm49, %v28, 0
  %v78 = vsel %vm49, %v29, 0
  %v81 = vsel %vm49, %v30, 0
  %v84 = vsel %vm49, %v31, 0
  %v87 = vsel %vm49, %v32, 0
  %v90 = vsel %vm49, %v33, 0
  %v93 = vsel %vm49, %v34, 0
  %v96 = vsel %vm49, %v35, 0
  %v99 = vsel %vm49, %v36, 0
  %v102 = vsel %vm49, %v37, 0
  %v105 = vsel %vm49, %v38, 0
  %v108 = vsel %vm49, %v39, 0
  %vm110 = vcmask 1041408
  %v112 = vsel %vm110, %v41, 0
  %114 = vmatprep.subr.mxu0 0.0
  %115 = vmatpush1.msra.mxu0 0.0
  %116 = vmatprep.subr.mxu0 0.0
  %117 = vmatpush1.msra.mxu0 0.0
  %118 = vmatprep.subr.mxu0 0.0
  %119 = vmatpush1.msra.mxu0 0.0
  %120 = vmatprep.subr.mxu0 0.0
  %121 = vmatpush1.msra.mxu0 0.0
  %122 = vmatprep.subr.mxu0 0.0
  %123 = vmatpush1.msra.mxu0 0.0
  %124 = vmatprep.subr.mxu0 0.0
  %125 = vmatpush1.msra.mxu0 0.0
  %126 = vmatprep.subr.mxu0 0.0
  %127 = vmatpush1.msra.mxu0 0.0
  %128 = vmatprep.subr.mxu0 0.0
  %129 = vmatpush1.msra.mxu0 0.0
  %130 = vmatprep.subr.mxu0 0.0
  %131 = vmatpush1.msra.mxu0 0.0
  %132 = vmatprep.subr.mxu0 0.0
  %133 = vmatpush1.msra.mxu0 0.0
  %134 = vmatprep.subr.mxu0 0.0
  %135 = vmatpush1.msra.mxu0 0.0
  %136 = vmatprep.subr.mxu0 0.0
  %137 = vmatpush1.msra.mxu0 0.0
  %138 = vmatprep.subr.mxu0 0.0
  %139 = vmatpush1.msra.mxu0 0.0
  %140 = vmatprep.subr.mxu0 0.0
  %141 = vmatpush1.msra.mxu0 0.0
  %142 = vmatprep.subr.mxu0 0.0
  %143 = vmatpush1.msra.mxu0 %v112
  %144 = vmatprep.subr.mxu0 0.0
  %145 = vmatpush1.msra.mxu0 %v40
  %146 = vmatprep.subr.mxu0 0.0
  %147 = vmatpush2.msra.mxu0 0.0
  %148 = vmatprep.subr.mxu0 0.0
  %149 = vmatpush2.msra.mxu0 0.0
  %150 = vmatprep.subr.mxu0 0.0
  %151 = vmatpush2.msra.mxu0 0.0
  %152 = vmatprep.subr.mxu0 0.0
  %153 = vmatpush2.msra.mxu0 0.0
  %154 = vmatprep.subr.mxu0 0.0
  %155 = vmatpush2.msra.mxu0 0.0
  %156 = vmatprep.subr.mxu0 0.0
  %157 = vmatpush2.msra.mxu0 0.0
  %158 = vmatprep.subr.mxu0 0.0
  %159 = vmatpush2.msra.mxu0 0.0
  %160 = vmatprep.subr.mxu0 0.0
  %161 = vmatpush2.msra.mxu0 0.0
  %162 = vmatprep.subr.mxu0 0.0
  %163 = vmatpush2.msra.mxu0 0.0
  %164 = vmatprep.subr.mxu0 0.0
  %165 = vmatpush2.msra.mxu0 0.0
  %166 = vmatprep.subr.mxu0 0.0
  %167 = vmatpush2.msra.mxu0 0.0
  %168 = vmatprep.subr.mxu0 0.0
  %169 = vmatpush2.msra.mxu0 0.0
  %170 = vmatprep.subr.mxu0 0.0
  %171 = vmatpush2.msra.mxu0 0.0
  %172 = vmatprep.subr.mxu0 0.0
  %173 = vmatpush2.msra.mxu0 0.0
  %174 = vmatprep.subr.mxu0 0.0
  %175 = vmatpush2.msra.mxu0 0.0
  %176 = vmatprep.subr.mxu0 0.0
  %177 = vmatpush2.msra.mxu0 0.0
  %178 = vmatprep.mubr.f32.mxu0 0.0
  %179 = vmatmul.mubr.f32.gmra.mxu0 %v51
  %v180 = vpop.f32.mrf.mxu0
  %v181 = vadd.f32 %v47, %v180
  %v182 = vpop.f32.mrf.mxu0
  %183 = vmatprep.mubr.f32.mxu0 0.0
  %184 = vmatmul.mubr.f32.gmra.mxu0 %v54
  %v185 = vpop.f32.mrf.mxu0
  %v186 = vadd.f32 %v47, %v185
  %v187 = vpop.f32.mrf.mxu0
  %188 = vmatprep.mubr.f32.mxu0 0.0
  %189 = vmatmul.mubr.f32.gmra.mxu0 %v57
  %v190 = vpop.f32.mrf.mxu0
  %v191 = vadd.f32 %v47, %v190
  %v192 = vpop.f32.mrf.mxu0
  %193 = vmatprep.mubr.f32.mxu0 0.0
  %194 = vmatmul.mubr.f32.gmra.mxu0 %v60
  %v195 = vpop.f32.mrf.mxu0
  %v196 = vadd.f32 %v47, %v195
  %v197 = vpop.f32.mrf.mxu0
  %198 = vmatprep.mubr.f32.mxu0 0.0
  %199 = vmatmul.mubr.f32.gmra.mxu0 %v63
  %v200 = vpop.f32.mrf.mxu0
  %v201 = vadd.f32 %v47, %v200
  %v202 = vpop.f32.mrf.mxu0
  %203 = vmatprep.mubr.f32.mxu0 0.0
  %204 = vmatmul.mubr.f32.gmra.mxu0 %v66
  %v205 = vpop.f32.mrf.mxu0
  %v206 = vadd.f32 %v47, %v205
  %v207 = vpop.f32.mrf.mxu0
  %208 = vmatprep.mubr.f32.mxu0 0.0
  %209 = vmatmul.mubr.f32.gmra.mxu0 %v69
  %v210 = vpop.f32.mrf.mxu0
  %v211 = vadd.f32 %v47, %v210
  %v212 = vpop.f32.mrf.mxu0
  %213 = vmatprep.mubr.f32.mxu0 0.0
  %214 = vmatmul.mubr.f32.gmra.mxu0 %v72
  %v215 = vpop.f32.mrf.mxu0
  %v216 = vadd.f32 %v47, %v215
  %v217 = vpop.f32.mrf.mxu0
  %218 = vmatprep.mubr.f32.mxu0 0.0
  %219 = vmatmul.mubr.f32.gmra.mxu0 %v75
  %v220 = vpop.f32.mrf.mxu0
  %v221 = vadd.f32 %v47, %v220
  %v222 = vpop.f32.mrf.mxu0
  %223 = vmatprep.mubr.f32.mxu0 0.0
  %224 = vmatmul.mubr.f32.gmra.mxu0 %v78
  %v225 = vpop.f32.mrf.mxu0
  %v226 = vadd.f32 %v47, %v225
  %v227 = vpop.f32.mrf.mxu0
  %228 = vmatprep.mubr.f32.mxu0 0.0
  %229 = vmatmul.mubr.f32.gmra.mxu0 %v81
  %v230 = vpop.f32.mrf.mxu0
  %v231 = vadd.f32 %v47, %v230
  %v232 = vpop.f32.mrf.mxu0
  %233 = vmatprep.mubr.f32.mxu0 0.0
  %234 = vmatmul.mubr.f32.gmra.mxu0 %v84
  %v235 = vpop.f32.mrf.mxu0
  %v236 = vadd.f32 %v47, %v235
  %v237 = vpop.f32.mrf.mxu0
  %238 = vmatprep.mubr.f32.mxu0 0.0
  %239 = vmatmul.mubr.f32.gmra.mxu0 %v87
  %v240 = vpop.f32.mrf.mxu0
  %v241 = vadd.f32 %v47, %v240
  %v242 = vpop.f32.mrf.mxu0
  %243 = vmatprep.mubr.f32.mxu0 0.0
  %244 = vmatmul.mubr.f32.gmra.mxu0 %v90
  %v245 = vpop.f32.mrf.mxu0
  %v246 = vadd.f32 %v47, %v245
  %v247 = vpop.f32.mrf.mxu0
  %248 = vmatprep.mubr.f32.mxu0 0.0
  %249 = vmatmul.mubr.f32.gmra.mxu0 %v93
  %v250 = vpop.f32.mrf.mxu0
  %v251 = vadd.f32 %v47, %v250
  %v252 = vpop.f32.mrf.mxu0
  %253 = vmatprep.mubr.f32.mxu0 0.0
  %254 = vmatmul.mubr.f32.gmra.mxu0 %v96
  %v255 = vpop.f32.mrf.mxu0
  %v256 = vadd.f32 %v47, %v255
  %v257 = vpop.f32.mrf.mxu0
  %258 = vmatprep.mubr.f32.mxu0 0.0
  %259 = vmatmul.mubr.f32.gmra.mxu0 %v99
  %v260 = vpop.f32.mrf.mxu0
  %v261 = vadd.f32 %v47, %v260
  %v262 = vpop.f32.mrf.mxu0
  %263 = vmatprep.mubr.f32.mxu0 0.0
  %264 = vmatmul.mubr.f32.gmra.mxu0 %v102
  %v265 = vpop.f32.mrf.mxu0
  %v266 = vadd.f32 %v47, %v265
  %v267 = vpop.f32.mrf.mxu0
  %268 = vmatprep.mubr.f32.mxu0 0.0
  %269 = vmatmul.mubr.f32.gmra.mxu0 %v105
  %v270 = vpop.f32.mrf.mxu0
  %v271 = vadd.f32 %v47, %v270
  %v272 = vpop.f32.mrf.mxu0
  %273 = vmatprep.mubr.f32.mxu0 0.0
  %274 = vmatmul.mubr.f32.gmra.mxu0 %v108
  %v275 = vpop.f32.mrf.mxu0
  %v276 = vadd.f32 %v47, %v275
  %v277 = vpop.f32.mrf.mxu0
  %278 = vdwg.mxu0
  %v279 = vld [vmem:[%s3] sm:$0x1]
  %v280 = vld [vmem:[%s4] sm:$0x1]
  %vm281 = vcmask 130048
  %v282 = vsel %vm281, %v181, 0.0
  %283 = vadd.xlane.f32.xlu0 %v282
  %v284 = vpop.xlane.xlu0 %283
  %v285 = vsel %vm281, %v186, 0.0
  %286 = vadd.xlane.f32.xlu0 %v285
  %v287 = vpop.xlane.xlu0 %286
  %v288 = vsel %vm281, %v191, 0.0
  %289 = vadd.xlane.f32.xlu0 %v288
  %v290 = vpop.xlane.xlu0 %289
  %v291 = vsel %vm281, %v196, 0.0
  %292 = vadd.xlane.f32.xlu0 %v291
  %v293 = vpop.xlane.xlu0 %292
  %v294 = vsel %vm281, %v201, 0.0
  %295 = vadd.xlane.f32.xlu0 %v294
  %v296 = vpop.xlane.xlu0 %295
  %v297 = vsel %vm281, %v206, 0.0
  %298 = vadd.xlane.f32.xlu0 %v297
  %v299 = vpop.xlane.xlu0 %298
  %v300 = vsel %vm281, %v211, 0.0
  %301 = vadd.xlane.f32.xlu0 %v300
  %v302 = vpop.xlane.xlu0 %301
  %v303 = vsel %vm281, %v216, 0.0
  %304 = vadd.xlane.f32.xlu0 %v303
  %v305 = vpop.xlane.xlu0 %304
  %v306 = vsel %vm281, %v221, 0.0
  %307 = vadd.xlane.f32.xlu0 %v306
  %v308 = vpop.xlane.xlu0 %307
  %v309 = vsel %vm281, %v226, 0.0
  %310 = vadd.xlane.f32.xlu0 %v309
  %v311 = vpop.xlane.xlu0 %310
  %v312 = vsel %vm281, %v231, 0.0
  %313 = vadd.xlane.f32.xlu0 %v312
  %v314 = vpop.xlane.xlu0 %313
  %v315 = vsel %vm281, %v236, 0.0
  %316 = vadd.xlane.f32.xlu0 %v315
  %v317 = vpop.xlane.xlu0 %316
  %v318 = vsel %vm281, %v241, 0.0
  %319 = vadd.xlane.f32.xlu0 %v318
  %v320 = vpop.xlane.xlu0 %319
  %v321 = vsel %vm281, %v246, 0.0
  %322 = vadd.xlane.f32.xlu0 %v321
  %v323 = vpop.xlane.xlu0 %322
  %v324 = vsel %vm281, %v251, 0.0
  %325 = vadd.xlane.f32.xlu0 %v324
  %v326 = vpop.xlane.xlu0 %325
  %v327 = vsel %vm281, %v256, 0.0
  %328 = vadd.xlane.f32.xlu0 %v327
  %v329 = vpop.xlane.xlu0 %328
  %v330 = vsel %vm281, %v261, 0.0
  %331 = vadd.xlane.f32.xlu0 %v330
  %v332 = vpop.xlane.xlu0 %331
  %v333 = vsel %vm281, %v266, 0.0
  %334 = vadd.xlane.f32.xlu0 %v333
  %v335 = vpop.xlane.xlu0 %334
  %v336 = vsel %vm281, %v271, 0.0
  %337 = vadd.xlane.f32.xlu0 %v336
  %v338 = vpop.xlane.xlu0 %337
  %vm339 = vcmask 128000
  %v340 = vsel %vm339, %v276, 0.0
  %341 = vadd.xlane.f32.xlu0 %v340
  %v342 = vpop.xlane.xlu0 %341
  %v343 = vrcp.pop 16.0
  %v344 = vmul.f32 %v284, %v343
  %v345 = vmul.f32 %v287, %v343
  %v346 = vmul.f32 %v290, %v343
  %v347 = vmul.f32 %v293, %v343
  %v348 = vmul.f32 %v296, %v343
  %v349 = vmul.f32 %v299, %v343
  %v350 = vmul.f32 %v302, %v343
  %v351 = vmul.f32 %v305, %v343
  %v352 = vmul.f32 %v308, %v343
  %v353 = vmul.f32 %v311, %v343
  %v354 = vmul.f32 %v314, %v343
  %v355 = vmul.f32 %v317, %v343
  %v356 = vmul.f32 %v320, %v343
  %v357 = vmul.f32 %v323, %v343
  %v358 = vmul.f32 %v326, %v343
  %v359 = vmul.f32 %v329, %v343
  %v360 = vmul.f32 %v332, %v343
  %v361 = vmul.f32 %v335, %v343
  %v362 = vmul.f32 %v338, %v343
  %v363 = vmul.f32 %v342, %v343
  %v364 = vsub.f32 %v181, %v344
  %v365 = vsub.f32 %v186, %v345
  %v366 = vsub.f32 %v191, %v346
  %v367 = vsub.f32 %v196, %v347
  %v368 = vsub.f32 %v201, %v348
  %v369 = vsub.f32 %v206, %v349
  %v370 = vsub.f32 %v211, %v350
  %v371 = vsub.f32 %v216, %v351
  %v372 = vsub.f32 %v221, %v352
  %v373 = vsub.f32 %v226, %v353
  %v374 = vsub.f32 %v231, %v354
  %v375 = vsub.f32 %v236, %v355
  %v376 = vsub.f32 %v241, %v356
  %v377 = vsub.f32 %v246, %v357
  %v378 = vsub.f32 %v251, %v358
  %v379 = vsub.f32 %v256, %v359
  %v380 = vsub.f32 %v261, %v360
  %v381 = vsub.f32 %v266, %v361
  %v382 = vsub.f32 %v271, %v362
  %v383 = vsub.f32 %v276, %v363
  %v384 = vmul.f32 %v364, %v364
  %v385 = vmul.f32 %v365, %v365
  %v386 = vmul.f32 %v366, %v366
  %v387 = vmul.f32 %v367, %v367
  %v388 = vmul.f32 %v368, %v368
  %v389 = vmul.f32 %v369, %v369
  %v390 = vmul.f32 %v370, %v370
  %v391 = vmul.f32 %v371, %v371
  %v392 = vmul.f32 %v372, %v372
  %v393 = vmul.f32 %v373, %v373
  %v394 = vmul.f32 %v374, %v374
  %v395 = vmul.f32 %v375, %v375
  %v396 = vmul.f32 %v376, %v376
  %v397 = vmul.f32 %v377, %v377
  %v398 = vmul.f32 %v378, %v378
  %v399 = vmul.f32 %v379, %v379
  %v400 = vmul.f32 %v380, %v380
  %v401 = vmul.f32 %v381, %v381
  %v402 = vmul.f32 %v382, %v382
  %v403 = vmul.f32 %v383, %v383
  %v404 = vsel %vm281, %v384, 0.0
  %405 = vadd.xlane.f32.xlu0 %v404
  %v406 = vpop.xlane.xlu0 %405
  %v407 = vsel %vm281, %v385, 0.0
  %408 = vadd.xlane.f32.xlu0 %v407
  %v409 = vpop.xlane.xlu0 %408
  %v410 = vsel %vm281, %v386, 0.0
  %411 = vadd.xlane.f32.xlu0 %v410
  %v412 = vpop.xlane.xlu0 %411
  %v413 = vsel %vm281, %v387, 0.0
  %414 = vadd.xlane.f32.xlu0 %v413
  %v415 = vpop.xlane.xlu0 %414
  %v416 = vsel %vm281, %v388, 0.0
  %417 = vadd.xlane.f32.xlu0 %v416
  %v418 = vpop.xlane.xlu0 %417
  %v419 = vsel %vm281, %v389, 0.0
  %420 = vadd.xlane.f32.xlu0 %v419
  %v421 = vpop.xlane.xlu0 %420
  %v422 = vsel %vm281, %v390, 0.0
  %423 = vadd.xlane.f32.xlu0 %v422
  %v424 = vpop.xlane.xlu0 %423
  %v425 = vsel %vm281, %v391, 0.0
  %426 = vadd.xlane.f32.xlu0 %v425
  %v427 = vpop.xlane.xlu0 %426
  %v428 = vsel %vm281, %v392, 0.0
  %429 = vadd.xlane.f32.xlu0 %v428
  %v430 = vpop.xlane.xlu0 %429
  %v431 = vsel %vm281, %v393, 0.0
  %432 = vadd.xlane.f32.xlu0 %v431
  %v433 = vpop.xlane.xlu0 %432
  %v434 = vsel %vm281, %v394, 0.0
  %435 = vadd.xlane.f32.xlu0 %v434
  %v436 = vpop.xlane.xlu0 %435
  %v437 = vsel %vm281, %v395, 0.0
  %438 = vadd.xlane.f32.xlu0 %v437
  %v439 = vpop.xlane.xlu0 %438
  %v440 = vsel %vm281, %v396, 0.0
  %441 = vadd.xlane.f32.xlu0 %v440
  %v442 = vpop.xlane.xlu0 %441
  %v443 = vsel %vm281, %v397, 0.0
  %444 = vadd.xlane.f32.xlu0 %v443
  %v445 = vpop.xlane.xlu0 %444
  %v446 = vsel %vm281, %v398, 0.0
  %447 = vadd.xlane.f32.xlu0 %v446
  %v448 = vpop.xlane.xlu0 %447
  %v449 = vsel %vm281, %v399, 0.0
  %450 = vadd.xlane.f32.xlu0 %v449
  %v451 = vpop.xlane.xlu0 %450
  %v452 = vsel %vm281, %v400, 0.0
  %453 = vadd.xlane.f32.xlu0 %v452
  %v454 = vpop.xlane.xlu0 %453
  %v455 = vsel %vm281, %v401, 0.0
  %456 = vadd.xlane.f32.xlu0 %v455
  %v457 = vpop.xlane.xlu0 %456
  %v458 = vsel %vm281, %v402, 0.0
  %459 = vadd.xlane.f32.xlu0 %v458
  %v460 = vpop.xlane.xlu0 %459
  %v461 = vsel %vm339, %v403, 0.0
  %462 = vadd.xlane.f32.xlu0 %v461
  %v463 = vpop.xlane.xlu0 %462
  %v464 = vmul.f32 %v406, %v343
  %v465 = vmul.f32 %v409, %v343
  %v466 = vmul.f32 %v412, %v343
  %v467 = vmul.f32 %v415, %v343
  %v468 = vmul.f32 %v418, %v343
  %v469 = vmul.f32 %v421, %v343
  %v470 = vmul.f32 %v424, %v343
  %v471 = vmul.f32 %v427, %v343
  %v472 = vmul.f32 %v430, %v343
  %v473 = vmul.f32 %v433, %v343
  %v474 = vmul.f32 %v436, %v343
  %v475 = vmul.f32 %v439, %v343
  %v476 = vmul.f32 %v442, %v343
  %v477 = vmul.f32 %v445, %v343
  %v478 = vmul.f32 %v448, %v343
  %v479 = vmul.f32 %v451, %v343
  %v480 = vmul.f32 %v454, %v343
  %v481 = vmul.f32 %v457, %v343
  %v482 = vmul.f32 %v460, %v343
  %v483 = vmul.f32 %v463, %v343
  %v484 = vadd.f32 %v464, 1e-05
  %v485 = vadd.f32 %v465, 1e-05
  %v486 = vadd.f32 %v466, 1e-05
  %v487 = vadd.f32 %v467, 1e-05
  %v488 = vadd.f32 %v468, 1e-05
  %v489 = vadd.f32 %v469, 1e-05
  %v490 = vadd.f32 %v470, 1e-05
  %v491 = vadd.f32 %v471, 1e-05
  %v492 = vadd.f32 %v472, 1e-05
  %v493 = vadd.f32 %v473, 1e-05
  %v494 = vadd.f32 %v474, 1e-05
  %v495 = vadd.f32 %v475, 1e-05
  %v496 = vadd.f32 %v476, 1e-05
  %v497 = vadd.f32 %v477, 1e-05
  %v498 = vadd.f32 %v478, 1e-05
  %v499 = vadd.f32 %v479, 1e-05
  %v500 = vadd.f32 %v480, 1e-05
  %v501 = vadd.f32 %v481, 1e-05
  %v502 = vadd.f32 %v482, 1e-05
  %v503 = vadd.f32 %v483, 1e-05
  %v504 = vrsqrt.pop %v484
  %v505 = vrsqrt.pop %v485
  %v506 = vrsqrt.pop %v486
  %v507 = vrsqrt.pop %v487
  %v508 = vrsqrt.pop %v488
  %v509 = vrsqrt.pop %v489
  %v510 = vrsqrt.pop %v490
  %v511 = vrsqrt.pop %v491
  %v512 = vrsqrt.pop %v492
  %v513 = vrsqrt.pop %v493
  %v514 = vrsqrt.pop %v494
  %v515 = vrsqrt.pop %v495
  %v516 = vrsqrt.pop %v496
  %v517 = vrsqrt.pop %v497
  %v518 = vrsqrt.pop %v498
  %v519 = vrsqrt.pop %v499
  %v520 = vrsqrt.pop %v500
  %v521 = vrsqrt.pop %v501
  %v522 = vrsqrt.pop %v502
  %v523 = vrsqrt.pop %v503
  %v524 = vmul.f32 %v364, %v504
  %v525 = vmul.f32 %v365, %v505
  %v526 = vmul.f32 %v366, %v506
  %v527 = vmul.f32 %v367, %v507
  %v528 = vmul.f32 %v368, %v508
  %v529 = vmul.f32 %v369, %v509
  %v530 = vmul.f32 %v370, %v510
  %v531 = vmul.f32 %v371, %v511
  %v532 = vmul.f32 %v372, %v512
  %v533 = vmul.f32 %v373, %v513
  %v534 = vmul.f32 %v374, %v514
  %v535 = vmul.f32 %v375, %v515
  %v536 = vmul.f32 %v376, %v516
  %v537 = vmul.f32 %v377, %v517
  %v538 = vmul.f32 %v378, %v518
  %v539 = vmul.f32 %v379, %v519
  %v540 = vmul.f32 %v380, %v520
  %v541 = vmul.f32 %v381, %v521
  %v542 = vmul.f32 %v382, %v522
  %v543 = vmul.f32 %v383, %v523
  %v545 = vlaneseq
  %v546 = vshrl.u32 %v545, 7
  %v547 = vsub.s32 0, %v546
  %v548 = vrot.slane %v279, %v547
  %v550 = vmul.f32 %v524, %v548
  %v551 = vmul.f32 %v525, %v548
  %v552 = vmul.f32 %v526, %v548
  %v553 = vmul.f32 %v527, %v548
  %v554 = vmul.f32 %v528, %v548
  %v555 = vmul.f32 %v529, %v548
  %v556 = vmul.f32 %v530, %v548
  %v557 = vmul.f32 %v531, %v548
  %v558 = vmul.f32 %v532, %v548
  %v559 = vmul.f32 %v533, %v548
  %v560 = vmul.f32 %v534, %v548
  %v561 = vmul.f32 %v535, %v548
  %v562 = vmul.f32 %v536, %v548
  %v563 = vmul.f32 %v537, %v548
  %v564 = vmul.f32 %v538, %v548
  %v565 = vmul.f32 %v539, %v548
  %v566 = vmul.f32 %v540, %v548
  %v567 = vmul.f32 %v541, %v548
  %v568 = vmul.f32 %v542, %v548
  %v569 = vmul.f32 %v543, %v548
  %v571 = vlaneseq
  %v572 = vshrl.u32 %v571, 7
  %v573 = vsub.s32 0, %v572
  %v574 = vrot.slane %v280, %v573
  %v576 = vadd.f32 %v550, %v574
  %v577 = vadd.f32 %v551, %v574
  %v578 = vadd.f32 %v552, %v574
  %v579 = vadd.f32 %v553, %v574
  %v580 = vadd.f32 %v554, %v574
  %v581 = vadd.f32 %v555, %v574
  %v582 = vadd.f32 %v556, %v574
  %v583 = vadd.f32 %v557, %v574
  %v584 = vadd.f32 %v558, %v574
  %v585 = vadd.f32 %v559, %v574
  %v586 = vadd.f32 %v560, %v574
  %v587 = vadd.f32 %v561, %v574
  %v588 = vadd.f32 %v562, %v574
  %v589 = vadd.f32 %v563, %v574
  %v590 = vadd.f32 %v564, %v574
  %v591 = vadd.f32 %v565, %v574
  %v592 = vadd.f32 %v566, %v574
  %v593 = vadd.f32 %v567, %v574
  %v594 = vadd.f32 %v568, %v574
  %v595 = vadd.f32 %v569, %v574
  %v596 = vmul.f32 %v576, %v576
  %v597 = vmul.f32 %v577, %v577
  %v598 = vmul.f32 %v578, %v578
  %v599 = vmul.f32 %v579, %v579
  %v600 = vmul.f32 %v580, %v580
  %v601 = vmul.f32 %v581, %v581
  %v602 = vmul.f32 %v582, %v582
  %v603 = vmul.f32 %v583, %v583
  %v604 = vmul.f32 %v584, %v584
  %v605 = vmul.f32 %v585, %v585
  %v606 = vmul.f32 %v586, %v586
  %v607 = vmul.f32 %v587, %v587
  %v608 = vmul.f32 %v588, %v588
  %v609 = vmul.f32 %v589, %v589
  %v610 = vmul.f32 %v590, %v590
  %v611 = vmul.f32 %v591, %v591
  %v612 = vmul.f32 %v592, %v592
  %v613 = vmul.f32 %v593, %v593
  %v614 = vmul.f32 %v594, %v594
  %v615 = vmul.f32 %v595, %v595
  %v616 = vmul.f32 %v576, %v596
  %v617 = vmul.f32 %v577, %v597
  %v618 = vmul.f32 %v578, %v598
  %v619 = vmul.f32 %v579, %v599
  %v620 = vmul.f32 %v580, %v600
  %v621 = vmul.f32 %v581, %v601
  %v622 = vmul.f32 %v582, %v602
  %v623 = vmul.f32 %v583, %v603
  %v624 = vmul.f32 %v584, %v604
  %v625 = vmul.f32 %v585, %v605
  %v626 = vmul.f32 %v586, %v606
  %v627 = vmul.f32 %v587, %v607
  %v628 = vmul.f32 %v588, %v608
  %v629 = vmul.f32 %v589, %v609
  %v630 = vmul.f32 %v590, %v610
  %v631 = vmul.f32 %v591, %v611
  %v632 = vmul.f32 %v592, %v612
  %v633 = vmul.f32 %v593, %v613
  %v634 = vmul.f32 %v594, %v614
  %v635 = vmul.f32 %v595, %v615
  %v636 = vmul.f32 %v616, 0.044715
  %v637 = vmul.f32 %v617, 0.044715
  %v638 = vmul.f32 %v618, 0.044715
  %v639 = vmul.f32 %v619, 0.044715
  %v640 = vmul.f32 %v620, 0.044715
  %v641 = vmul.f32 %v621, 0.044715
  %v642 = vmul.f32 %v622, 0.044715
  %v643 = vmul.f32 %v623, 0.044715
  %v644 = vmul.f32 %v624, 0.044715
  %v645 = vmul.f32 %v625, 0.044715
  %v646 = vmul.f32 %v626, 0.044715
  %v647 = vmul.f32 %v627, 0.044715
  %v648 = vmul.f32 %v628, 0.044715
  %v649 = vmul.f32 %v629, 0.044715
  %v650 = vmul.f32 %v630, 0.044715
  %v651 = vmul.f32 %v631, 0.044715
  %v652 = vmul.f32 %v632, 0.044715
  %v653 = vmul.f32 %v633, 0.044715
  %v654 = vmul.f32 %v634, 0.044715
  %v655 = vmul.f32 %v635, 0.044715
  %v656 = vadd.f32 %v576, %v636
  %v657 = vadd.f32 %v577, %v637
  %v658 = vadd.f32 %v578, %v638
  %v659 = vadd.f32 %v579, %v639
  %v660 = vadd.f32 %v580, %v640
  %v661 = vadd.f32 %v581, %v641
  %v662 = vadd.f32 %v582, %v642
  %v663 = vadd.f32 %v583, %v643
  %v664 = vadd.f32 %v584, %v644
  %v665 = vadd.f32 %v585, %v645
  %v666 = vadd.f32 %v586, %v646
  %v667 = vadd.f32 %v587, %v647
  %v668 = vadd.f32 %v588, %v648
  %v669 = vadd.f32 %v589, %v649
  %v670 = vadd.f32 %v590, %v650
  %v671 = vadd.f32 %v591, %v651
  %v672 = vadd.f32 %v592, %v652
  %v673 = vadd.f32 %v593, %v653
  %v674 = vadd.f32 %v594, %v654
  %v675 = vadd.f32 %v595, %v655
  %v676 = vmul.f32 %v656, 0.7978846
  %v677 = vmul.f32 %v657, 0.7978846
  %v678 = vmul.f32 %v658, 0.7978846
  %v679 = vmul.f32 %v659, 0.7978846
  %v680 = vmul.f32 %v660, 0.7978846
  %v681 = vmul.f32 %v661, 0.7978846
  %v682 = vmul.f32 %v662, 0.7978846
  %v683 = vmul.f32 %v663, 0.7978846
  %v684 = vmul.f32 %v664, 0.7978846
  %v685 = vmul.f32 %v665, 0.7978846
  %v686 = vmul.f32 %v666, 0.7978846
  %v687 = vmul.f32 %v667, 0.7978846
  %v688 = vmul.f32 %v668, 0.7978846
  %v689 = vmul.f32 %v669, 0.7978846
  %v690 = vmul.f32 %v670, 0.7978846
  %v691 = vmul.f32 %v671, 0.7978846
  %v692 = vmul.f32 %v672, 0.7978846
  %v693 = vmul.f32 %v673, 0.7978846
  %v694 = vmul.f32 %v674, 0.7978846
  %v695 = vmul.f32 %v675, 0.7978846
  %v696 = vtanh.pop %v676
  %v697 = vtanh.pop %v677
  %v698 = vtanh.pop %v678
  %v699 = vtanh.pop %v679
  %v700 = vtanh.pop %v680
  %v701 = vtanh.pop %v681
  %v702 = vtanh.pop %v682
  %v703 = vtanh.pop %v683
  %v704 = vtanh.pop %v684
  %v705 = vtanh.pop %v685
  %v706 = vtanh.pop %v686
  %v707 = vtanh.pop %v687
  %v708 = vtanh.pop %v688
  %v709 = vtanh.pop %v689
  %v710 = vtanh.pop %v690
  %v711 = vtanh.pop %v691
  %v712 = vtanh.pop %v692
  %v713 = vtanh.pop %v693
  %v714 = vtanh.pop %v694
  %v715 = vtanh.pop %v695
  %v716 = vadd.f32 %v696, 1.0
  %v717 = vadd.f32 %v697, 1.0
  %v718 = vadd.f32 %v698, 1.0
  %v719 = vadd.f32 %v699, 1.0
  %v720 = vadd.f32 %v700, 1.0
  %v721 = vadd.f32 %v701, 1.0
  %v722 = vadd.f32 %v702, 1.0
  %v723 = vadd.f32 %v703, 1.0
  %v724 = vadd.f32 %v704, 1.0
  %v725 = vadd.f32 %v705, 1.0
  %v726 = vadd.f32 %v706, 1.0
  %v727 = vadd.f32 %v707, 1.0
  %v728 = vadd.f32 %v708, 1.0
  %v729 = vadd.f32 %v709, 1.0
  %v730 = vadd.f32 %v710, 1.0
  %v731 = vadd.f32 %v711, 1.0
  %v732 = vadd.f32 %v712, 1.0
  %v733 = vadd.f32 %v713, 1.0
  %v734 = vadd.f32 %v714, 1.0
  %v735 = vadd.f32 %v715, 1.0
  %v736 = vmul.f32 %v716, 0.5
  %v737 = vmul.f32 %v717, 0.5
  %v738 = vmul.f32 %v718, 0.5
  %v739 = vmul.f32 %v719, 0.5
  %v740 = vmul.f32 %v720, 0.5
  %v741 = vmul.f32 %v721, 0.5
  %v742 = vmul.f32 %v722, 0.5
  %v743 = vmul.f32 %v723, 0.5
  %v744 = vmul.f32 %v724, 0.5
  %v745 = vmul.f32 %v725, 0.5
  %v746 = vmul.f32 %v726, 0.5
  %v747 = vmul.f32 %v727, 0.5
  %v748 = vmul.f32 %v728, 0.5
  %v749 = vmul.f32 %v729, 0.5
  %v750 = vmul.f32 %v730, 0.5
  %v751 = vmul.f32 %v731, 0.5
  %v752 = vmul.f32 %v732, 0.5
  %v753 = vmul.f32 %v733, 0.5
  %v754 = vmul.f32 %v734, 0.5
  %v755 = vmul.f32 %v735, 0.5
  %v756 = vmul.f32 %v576, %v736
  %v757 = vmul.f32 %v577, %v737
  %v758 = vmul.f32 %v578, %v738
  %v759 = vmul.f32 %v579, %v739
  %v760 = vmul.f32 %v580, %v740
  %v761 = vmul.f32 %v581, %v741
  %v762 = vmul.f32 %v582, %v742
  %v763 = vmul.f32 %v583, %v743
  %v764 = vmul.f32 %v584, %v744
  %v765 = vmul.f32 %v585, %v745
  %v766 = vmul.f32 %v586, %v746
  %v767 = vmul.f32 %v587, %v747
  %v768 = vmul.f32 %v588, %v748
  %v769 = vmul.f32 %v589, %v749
  %v770 = vmul.f32 %v590, %v750
  %v771 = vmul.f32 %v591, %v751
  %v772 = vmul.f32 %v592, %v752
  %v773 = vmul.f32 %v593, %v753
  %v774 = vmul.f32 %v594, %v754
  %v775 = vmul.f32 %v595, %v755
  %776 = vst.msk [vmem:[%s5] sm:$0xff] %vm281, %v756
  %777 = vst.msk [vmem:[%s5 + $0x8] sm:$0xff] %vm281, %v757
  %778 = vst.msk [vmem:[%s5 + $0x10] sm:$0xff] %vm281, %v758
  %779 = vst.msk [vmem:[%s5 + $0x18] sm:$0xff] %vm281, %v759
  %780 = vst.msk [vmem:[%s5 + $0x20] sm:$0xff] %vm281, %v760
  %781 = vst.msk [vmem:[%s5 + $0x28] sm:$0xff] %vm281, %v761
  %782 = vst.msk [vmem:[%s5 + $0x30] sm:$0xff] %vm281, %v762
  %783 = vst.msk [vmem:[%s5 + $0x38] sm:$0xff] %vm281, %v763
  %784 = vst.msk [vmem:[%s5 + $0x40] sm:$0xff] %vm281, %v764
  %785 = vst.msk [vmem:[%s5 + $0x48] sm:$0xff] %vm281, %v765
  %786 = vst.msk [vmem:[%s5 + $0x50] sm:$0xff] %vm281, %v766
  %787 = vst.msk [vmem:[%s5 + $0x58] sm:$0xff] %vm281, %v767
  %788 = vst.msk [vmem:[%s5 + $0x60] sm:$0xff] %vm281, %v768
  %789 = vst.msk [vmem:[%s5 + $0x68] sm:$0xff] %vm281, %v769
  %790 = vst.msk [vmem:[%s5 + $0x70] sm:$0xff] %vm281, %v770
  %791 = vst.msk [vmem:[%s5 + $0x78] sm:$0xff] %vm281, %v771
  %792 = vst.msk [vmem:[%s5 + $0x80] sm:$0xff] %vm281, %v772
  %793 = vst.msk [vmem:[%s5 + $0x88] sm:$0xff] %vm281, %v773
  %794 = vst.msk [vmem:[%s5 + $0x90] sm:$0xff] %vm281, %v774
  %795 = vst.msk [vmem:[%s5 + $0x98] sm:$0x3f] %vm339, %v775
  // Predicated region
  $region22: #{hubert_ft_forward.8} parent=0 // pred_check
    _
  $region23: #{hubert_ft_forward.8} parent=0 // pred_check_branch
    %797 = sbr.rel (0) target = $region25
  $region24: #{hubert_ft_forward.8} parent=0 // pred_region
    _
  $region25: #{hubert_ft_forward.8} parent=0 // pred_fallthru
    _
  // Predicated region
  $region26: #{hubert_ft_forward.8} parent=0 // pred_check
    _
  $region27: #{hubert_ft_forward.8} parent=0 // pred_check_branch
    %799 = sbr.rel (0) target = $region29
  $region28: #{hubert_ft_forward.8} parent=0 // pred_region
    _
  $region29: #{hubert_ft_forward.8} parent=0 // pred_fallthru
    _

// kernel: hubert_ft_forward.9
$region0: #{hubert_ft_forward.9}
  #allocation0 [shape = 'u32[]', space=smem, size = 0x4, offset = 0x4, fixed_abs, tag = 'smem constant byte address 0x4 - core index']
  #allocation1 [shape = 'u32[144,128]{1,0:T(1,128)}', space=vmem, size = 0x12000, scoped, tag = 'internal scratch']
  %s0 = inlined_call_operand.vmem [shape: f32[78,48], index: 0, kind: input, shape index: {}]
  %s1 = inlined_call_operand.vmem [shape: f32[48,32], index: 1, kind: input, shape index: {}]
  %s2 = inlined_call_operand.vmem [shape: f32[1,32], index: 2, kind: input, shape index: {}]
  %s3 = inlined_call_operand.vmem [shape: f32[1,32], index: 3, kind: input, shape index: {}]
  %s4 = inlined_call_operand.vmem [shape: f32[1,32], index: 4, kind: input, shape index: {}]
  %s5 = inlined_call_operand.vmem [shape: f32[78,32], index: 5, kind: output, shape index: {}]
  %s6 = sld [smem:[#allocation0]]
  $region30: #{hubert_ft_forward.9} parent=0
    _
  %s8 = ssub.s32 1, %s6
  %s9 = scalar_select 0, %s8, %s6
  // Predicated region
  $region2: #{hubert_ft_forward.9} parent=0 // pred_check
    _
  $region3: #{hubert_ft_forward.9} parent=0 // pred_check_branch
    %11 = sbr.rel (0) target = $region5
  $region4: #{hubert_ft_forward.9} parent=0 // pred_region
    _
  $region5: #{hubert_ft_forward.9} parent=0 // pred_fallthru
    _
  // Predicated region
  $region6: #{hubert_ft_forward.9} parent=0 // pred_check
    _
  $region7: #{hubert_ft_forward.9} parent=0 // pred_check_branch
    %13 = sbr.rel (0) target = $region9
  $region8: #{hubert_ft_forward.9} parent=0 // pred_region
    _
  $region9: #{hubert_ft_forward.9} parent=0 // pred_fallthru
    _
  // Predicated region
  $region10: #{hubert_ft_forward.9} parent=0 // pred_check
    _
  $region11: #{hubert_ft_forward.9} parent=0 // pred_check_branch
    %15 = sbr.rel (0) target = $region13
  $region12: #{hubert_ft_forward.9} parent=0 // pred_region
    _
  $region13: #{hubert_ft_forward.9} parent=0 // pred_fallthru
    _
  // Predicated region
  $region14: #{hubert_ft_forward.9} parent=0 // pred_check
    _
  $region15: #{hubert_ft_forward.9} parent=0 // pred_check_branch
    %17 = sbr.rel (0) target = $region17
  $region16: #{hubert_ft_forward.9} parent=0 // pred_region
    _
  $region17: #{hubert_ft_forward.9} parent=0 // pred_fallthru
    _
  // Predicated region
  $region18: #{hubert_ft_forward.9} parent=0 // pred_check
    _
  $region19: #{hubert_ft_forward.9} parent=0 // pred_check_branch
    %19 = sbr.rel (0) target = $region21
  $region20: #{hubert_ft_forward.9} parent=0 // pred_region
    _
  $region21: #{hubert_ft_forward.9} parent=0 // pred_fallthru
    _
  %v20 = vld [vmem:[%s0] sm:$0xff]
  %v21 = vld [vmem:[%s0 + $0x8] sm:$0xff]
  %v22 = vld [vmem:[%s0 + $0x10] sm:$0xff]
  %v23 = vld [vmem:[%s0 + $0x18] sm:$0xff]
  %v24 = vld [vmem:[%s0 + $0x20] sm:$0xff]
  %v25 = vld [vmem:[%s0 + $0x28] sm:$0xff]
  %v26 = vld [vmem:[%s0 + $0x30] sm:$0xff]
  %v27 = vld [vmem:[%s0 + $0x38] sm:$0xff]
  %v28 = vld [vmem:[%s0 + $0x40] sm:$0xff]
  %v29 = vld [vmem:[%s0 + $0x48] sm:$0x3f]
  %v30 = vld [vmem:[%s1] sm:$0xff]
  %v31 = vld [vmem:[%s1 + $0x8] sm:$0xff]
  %v32 = vld [vmem:[%s1 + $0x10] sm:$0xff]
  %v33 = vld [vmem:[%s1 + $0x18] sm:$0xff]
  %v34 = vld [vmem:[%s1 + $0x20] sm:$0xff]
  %v35 = vld [vmem:[%s1 + $0x28] sm:$0xff]
  %v36 = vld [vmem:[%s2] sm:$0x1]
  %v38 = vlaneseq
  %v39 = vshrl.u32 %v38, 7
  %v40 = vsub.s32 0, %v39
  %v41 = vrot.slane %v36, %v40
  %vm43 = vcmask 392192
  %v45 = vsel %vm43, %v20, 0
  %v48 = vsel %vm43, %v21, 0
  %v51 = vsel %vm43, %v22, 0
  %v54 = vsel %vm43, %v23, 0
  %v57 = vsel %vm43, %v24, 0
  %v60 = vsel %vm43, %v25, 0
  %v63 = vsel %vm43, %v26, 0
  %v66 = vsel %vm43, %v27, 0
  %v69 = vsel %vm43, %v28, 0
  %v72 = vsel %vm43, %v29, 0
  %74 = vmatprep.subr.mxu0 0.0
  %75 = vmatpush1.msra.mxu0 0.0
  %76 = vmatprep.subr.mxu0 0.0
  %77 = vmatpush1.msra.mxu0 0.0
  %78 = vmatprep.subr.mxu0 0.0
  %79 = vmatpush1.msra.mxu0 0.0
  %80 = vmatprep.subr.mxu0 0.0
  %81 = vmatpush1.msra.mxu0 0.0
  %82 = vmatprep.subr.mxu0 0.0
  %83 = vmatpush1.msra.mxu0 0.0
  %84 = vmatprep.subr.mxu0 0.0
  %85 = vmatpush1.msra.mxu0 0.0
  %86 = vmatprep.subr.mxu0 0.0
  %87 = vmatpush1.msra.mxu0 0.0
  %88 = vmatprep.subr.mxu0 0.0
  %89 = vmatpush1.msra.mxu0 0.0
  %90 = vmatprep.subr.mxu0 0.0
  %91 = vmatpush1.msra.mxu0 0.0
  %92 = vmatprep.subr.mxu0 0.0
  %93 = vmatpush1.msra.mxu0 0.0
  %94 = vmatprep.subr.mxu0 0.0
  %95 = vmatpush1.msra.mxu0 %v35
  %96 = vmatprep.subr.mxu0 0.0
  %97 = vmatpush1.msra.mxu0 %v34
  %98 = vmatprep.subr.mxu0 0.0
  %99 = vmatpush1.msra.mxu0 %v33
  %100 = vmatprep.subr.mxu0 0.0
  %101 = vmatpush1.msra.mxu0 %v32
  %102 = vmatprep.subr.mxu0 0.0
  %103 = vmatpush1.msra.mxu0 %v31
  %104 = vmatprep.subr.mxu0 0.0
  %105 = vmatpush1.msra.mxu0 %v30
  %106 = vmatprep.subr.mxu0 0.0
  %107 = vmatpush2.msra.mxu0 0.0
  %108 = vmatprep.subr.mxu0 0.0
  %109 = vmatpush2.msra.mxu0 0.0
  %110 = vmatprep.subr.mxu0 0.0
  %111 = vmatpush2.msra.mxu0 0.0
  %112 = vmatprep.subr.mxu0 0.0
  %113 = vmatpush2.msra.mxu0 0.0
  %114 = vmatprep.subr.mxu0 0.0
  %115 = vmatpush2.msra.mxu0 0.0
  %116 = vmatprep.subr.mxu0 0.0
  %117 = vmatpush2.msra.mxu0 0.0
  %118 = vmatprep.subr.mxu0 0.0
  %119 = vmatpush2.msra.mxu0 0.0
  %120 = vmatprep.subr.mxu0 0.0
  %121 = vmatpush2.msra.mxu0 0.0
  %122 = vmatprep.subr.mxu0 0.0
  %123 = vmatpush2.msra.mxu0 0.0
  %124 = vmatprep.subr.mxu0 0.0
  %125 = vmatpush2.msra.mxu0 0.0
  %126 = vmatprep.subr.mxu0 0.0
  %127 = vmatpush2.msra.mxu0 0.0
  %128 = vmatprep.subr.mxu0 0.0
  %129 = vmatpush2.msra.mxu0 0.0
  %130 = vmatprep.subr.mxu0 0.0
  %131 = vmatpush2.msra.mxu0 0.0
  %132 = vmatprep.subr.mxu0 0.0
  %133 = vmatpush2.msra.mxu0 0.0
  %134 = vmatprep.subr.mxu0 0.0
  %135 = vmatpush2.msra.mxu0 0.0
  %136 = vmatprep.subr.mxu0 0.0
  %137 = vmatpush2.msra.mxu0 0.0
  %138 = vmatprep.mubr.f32.mxu0 0.0
  %139 = vmatmul.mubr.f32.gmra.mxu0 %v45
  %v140 = vpop.f32.mrf.mxu0
  %v141 = vadd.f32 %v41, %v140
  %v142 = vpop.f32.mrf.mxu0
  %143 = vmatprep.mubr.f32.mxu0 0.0
  %144 = vmatmul.mubr.f32.gmra.mxu0 %v48
  %v145 = vpop.f32.mrf.mxu0
  %v146 = vadd.f32 %v41, %v145
  %v147 = vpop.f32.mrf.mxu0
  %148 = vmatprep.mubr.f32.mxu0 0.0
  %149 = vmatmul.mubr.f32.gmra.mxu0 %v51
  %v150 = vpop.f32.mrf.mxu0
  %v151 = vadd.f32 %v41, %v150
  %v152 = vpop.f32.mrf.mxu0
  %153 = vmatprep.mubr.f32.mxu0 0.0
  %154 = vmatmul.mubr.f32.gmra.mxu0 %v54
  %v155 = vpop.f32.mrf.mxu0
  %v156 = vadd.f32 %v41, %v155
  %v157 = vpop.f32.mrf.mxu0
  %158 = vmatprep.mubr.f32.mxu0 0.0
  %159 = vmatmul.mubr.f32.gmra.mxu0 %v57
  %v160 = vpop.f32.mrf.mxu0
  %v161 = vadd.f32 %v41, %v160
  %v162 = vpop.f32.mrf.mxu0
  %163 = vmatprep.mubr.f32.mxu0 0.0
  %164 = vmatmul.mubr.f32.gmra.mxu0 %v60
  %v165 = vpop.f32.mrf.mxu0
  %v166 = vadd.f32 %v41, %v165
  %v167 = vpop.f32.mrf.mxu0
  %168 = vmatprep.mubr.f32.mxu0 0.0
  %169 = vmatmul.mubr.f32.gmra.mxu0 %v63
  %v170 = vpop.f32.mrf.mxu0
  %v171 = vadd.f32 %v41, %v170
  %v172 = vpop.f32.mrf.mxu0
  %173 = vmatprep.mubr.f32.mxu0 0.0
  %174 = vmatmul.mubr.f32.gmra.mxu0 %v66
  %v175 = vpop.f32.mrf.mxu0
  %v176 = vadd.f32 %v41, %v175
  %v177 = vpop.f32.mrf.mxu0
  %178 = vmatprep.mubr.f32.mxu0 0.0
  %179 = vmatmul.mubr.f32.gmra.mxu0 %v69
  %v180 = vpop.f32.mrf.mxu0
  %v181 = vadd.f32 %v41, %v180
  %v182 = vpop.f32.mrf.mxu0
  %183 = vmatprep.mubr.f32.mxu0 0.0
  %184 = vmatmul.mubr.f32.gmra.mxu0 %v72
  %v185 = vpop.f32.mrf.mxu0
  %v186 = vadd.f32 %v41, %v185
  %v187 = vpop.f32.mrf.mxu0
  %188 = vdwg.mxu0
  %v189 = vld [vmem:[%s3] sm:$0x1]
  %v190 = vld [vmem:[%s4] sm:$0x1]
  %vm191 = vcmask 261120
  %v192 = vsel %vm191, %v141, 0.0
  %193 = vadd.xlane.f32.xlu0 %v192
  %v194 = vpop.xlane.xlu0 %193
  %v195 = vsel %vm191, %v146, 0.0
  %196 = vadd.xlane.f32.xlu0 %v195
  %v197 = vpop.xlane.xlu0 %196
  %v198 = vsel %vm191, %v151, 0.0
  %199 = vadd.xlane.f32.xlu0 %v198
  %v200 = vpop.xlane.xlu0 %199
  %v201 = vsel %vm191, %v156, 0.0
  %202 = vadd.xlane.f32.xlu0 %v201
  %v203 = vpop.xlane.xlu0 %202
  %v204 = vsel %vm191, %v161, 0.0
  %205 = vadd.xlane.f32.xlu0 %v204
  %v206 = vpop.xlane.xlu0 %205
  %v207 = vsel %vm191, %v166, 0.0
  %208 = vadd.xlane.f32.xlu0 %v207
  %v209 = vpop.xlane.xlu0 %208
  %v210 = vsel %vm191, %v171, 0.0
  %211 = vadd.xlane.f32.xlu0 %v210
  %v212 = vpop.xlane.xlu0 %211
  %v213 = vsel %vm191, %v176, 0.0
  %214 = vadd.xlane.f32.xlu0 %v213
  %v215 = vpop.xlane.xlu0 %214
  %v216 = vsel %vm191, %v181, 0.0
  %217 = vadd.xlane.f32.xlu0 %v216
  %v218 = vpop.xlane.xlu0 %217
  %vm219 = vcmask 259072
  %v220 = vsel %vm219, %v186, 0.0
  %221 = vadd.xlane.f32.xlu0 %v220
  %v222 = vpop.xlane.xlu0 %221
  %v223 = vrcp.pop 32.0
  %v224 = vmul.f32 %v194, %v223
  %v225 = vmul.f32 %v197, %v223
  %v226 = vmul.f32 %v200, %v223
  %v227 = vmul.f32 %v203, %v223
  %v228 = vmul.f32 %v206, %v223
  %v229 = vmul.f32 %v209, %v223
  %v230 = vmul.f32 %v212, %v223
  %v231 = vmul.f32 %v215, %v223
  %v232 = vmul.f32 %v218, %v223
  %v233 = vmul.f32 %v222, %v223
  %v234 = vsub.f32 %v141, %v224
  %v235 = vsub.f32 %v146, %v225
  %v236 = vsub.f32 %v151, %v226
  %v237 = vsub.f32 %v156, %v227
  %v238 = vsub.f32 %v161, %v228
  %v239 = vsub.f32 %v166, %v229
  %v240 = vsub.f32 %v171, %v230
  %v241 = vsub.f32 %v176, %v231
  %v242 = vsub.f32 %v181, %v232
  %v243 = vsub.f32 %v186, %v233
  %v244 = vmul.f32 %v234, %v234
  %v245 = vmul.f32 %v235, %v235
  %v246 = vmul.f32 %v236, %v236
  %v247 = vmul.f32 %v237, %v237
  %v248 = vmul.f32 %v238, %v238
  %v249 = vmul.f32 %v239, %v239
  %v250 = vmul.f32 %v240, %v240
  %v251 = vmul.f32 %v241, %v241
  %v252 = vmul.f32 %v242, %v242
  %v253 = vmul.f32 %v243, %v243
  %v254 = vsel %vm191, %v244, 0.0
  %255 = vadd.xlane.f32.xlu0 %v254
  %v256 = vpop.xlane.xlu0 %255
  %v257 = vsel %vm191, %v245, 0.0
  %258 = vadd.xlane.f32.xlu0 %v257
  %v259 = vpop.xlane.xlu0 %258
  %v260 = vsel %vm191, %v246, 0.0
  %261 = vadd.xlane.f32.xlu0 %v260
  %v262 = vpop.xlane.xlu0 %261
  %v263 = vsel %vm191, %v247, 0.0
  %264 = vadd.xlane.f32.xlu0 %v263
  %v265 = vpop.xlane.xlu0 %264
  %v266 = vsel %vm191, %v248, 0.0
  %267 = vadd.xlane.f32.xlu0 %v266
  %v268 = vpop.xlane.xlu0 %267
  %v269 = vsel %vm191, %v249, 0.0
  %270 = vadd.xlane.f32.xlu0 %v269
  %v271 = vpop.xlane.xlu0 %270
  %v272 = vsel %vm191, %v250, 0.0
  %273 = vadd.xlane.f32.xlu0 %v272
  %v274 = vpop.xlane.xlu0 %273
  %v275 = vsel %vm191, %v251, 0.0
  %276 = vadd.xlane.f32.xlu0 %v275
  %v277 = vpop.xlane.xlu0 %276
  %v278 = vsel %vm191, %v252, 0.0
  %279 = vadd.xlane.f32.xlu0 %v278
  %v280 = vpop.xlane.xlu0 %279
  %v281 = vsel %vm219, %v253, 0.0
  %282 = vadd.xlane.f32.xlu0 %v281
  %v283 = vpop.xlane.xlu0 %282
  %v284 = vmul.f32 %v256, %v223
  %v285 = vmul.f32 %v259, %v223
  %v286 = vmul.f32 %v262, %v223
  %v287 = vmul.f32 %v265, %v223
  %v288 = vmul.f32 %v268, %v223
  %v289 = vmul.f32 %v271, %v223
  %v290 = vmul.f32 %v274, %v223
  %v291 = vmul.f32 %v277, %v223
  %v292 = vmul.f32 %v280, %v223
  %v293 = vmul.f32 %v283, %v223
  %v294 = vadd.f32 %v284, 1e-05
  %v295 = vadd.f32 %v285, 1e-05
  %v296 = vadd.f32 %v286, 1e-05
  %v297 = vadd.f32 %v287, 1e-05
  %v298 = vadd.f32 %v288, 1e-05
  %v299 = vadd.f32 %v289, 1e-05
  %v300 = vadd.f32 %v290, 1e-05
  %v301 = vadd.f32 %v291, 1e-05
  %v302 = vadd.f32 %v292, 1e-05
  %v303 = vadd.f32 %v293, 1e-05
  %v304 = vrsqrt.pop %v294
  %v305 = vrsqrt.pop %v295
  %v306 = vrsqrt.pop %v296
  %v307 = vrsqrt.pop %v297
  %v308 = vrsqrt.pop %v298
  %v309 = vrsqrt.pop %v299
  %v310 = vrsqrt.pop %v300
  %v311 = vrsqrt.pop %v301
  %v312 = vrsqrt.pop %v302
  %v313 = vrsqrt.pop %v303
  %v314 = vmul.f32 %v234, %v304
  %v315 = vmul.f32 %v235, %v305
  %v316 = vmul.f32 %v236, %v306
  %v317 = vmul.f32 %v237, %v307
  %v318 = vmul.f32 %v238, %v308
  %v319 = vmul.f32 %v239, %v309
  %v320 = vmul.f32 %v240, %v310
  %v321 = vmul.f32 %v241, %v311
  %v322 = vmul.f32 %v242, %v312
  %v323 = vmul.f32 %v243, %v313
  %v325 = vlaneseq
  %v326 = vshrl.u32 %v325, 7
  %v327 = vsub.s32 0, %v326
  %v328 = vrot.slane %v189, %v327
  %v330 = vmul.f32 %v314, %v328
  %v331 = vmul.f32 %v315, %v328
  %v332 = vmul.f32 %v316, %v328
  %v333 = vmul.f32 %v317, %v328
  %v334 = vmul.f32 %v318, %v328
  %v335 = vmul.f32 %v319, %v328
  %v336 = vmul.f32 %v320, %v328
  %v337 = vmul.f32 %v321, %v328
  %v338 = vmul.f32 %v322, %v328
  %v339 = vmul.f32 %v323, %v328
  %v341 = vlaneseq
  %v342 = vshrl.u32 %v341, 7
  %v343 = vsub.s32 0, %v342
  %v344 = vrot.slane %v190, %v343
  %v346 = vadd.f32 %v330, %v344
  %v347 = vadd.f32 %v331, %v344
  %v348 = vadd.f32 %v332, %v344
  %v349 = vadd.f32 %v333, %v344
  %v350 = vadd.f32 %v334, %v344
  %v351 = vadd.f32 %v335, %v344
  %v352 = vadd.f32 %v336, %v344
  %v353 = vadd.f32 %v337, %v344
  %v354 = vadd.f32 %v338, %v344
  %v355 = vadd.f32 %v339, %v344
  %v356 = vmul.f32 %v346, %v346
  %v357 = vmul.f32 %v347, %v347
  %v358 = vmul.f32 %v348, %v348
  %v359 = vmul.f32 %v349, %v349
  %v360 = vmul.f32 %v350, %v350
  %v361 = vmul.f32 %v351, %v351
  %v362 = vmul.f32 %v352, %v352
  %v363 = vmul.f32 %v353, %v353
  %v364 = vmul.f32 %v354, %v354
  %v365 = vmul.f32 %v355, %v355
  %v366 = vmul.f32 %v346, %v356
  %v367 = vmul.f32 %v347, %v357
  %v368 = vmul.f32 %v348, %v358
  %v369 = vmul.f32 %v349, %v359
  %v370 = vmul.f32 %v350, %v360
  %v371 = vmul.f32 %v351, %v361
  %v372 = vmul.f32 %v352, %v362
  %v373 = vmul.f32 %v353, %v363
  %v374 = vmul.f32 %v354, %v364
  %v375 = vmul.f32 %v355, %v365
  %v376 = vmul.f32 %v366, 0.044715
  %v377 = vmul.f32 %v367, 0.044715
  %v378 = vmul.f32 %v368, 0.044715
  %v379 = vmul.f32 %v369, 0.044715
  %v380 = vmul.f32 %v370, 0.044715
  %v381 = vmul.f32 %v371, 0.044715
  %v382 = vmul.f32 %v372, 0.044715
  %v383 = vmul.f32 %v373, 0.044715
  %v384 = vmul.f32 %v374, 0.044715
  %v385 = vmul.f32 %v375, 0.044715
  %v386 = vadd.f32 %v346, %v376
  %v387 = vadd.f32 %v347, %v377
  %v388 = vadd.f32 %v348, %v378
  %v389 = vadd.f32 %v349, %v379
  %v390 = vadd.f32 %v350, %v380
  %v391 = vadd.f32 %v351, %v381
  %v392 = vadd.f32 %v352, %v382
  %v393 = vadd.f32 %v353, %v383
  %v394 = vadd.f32 %v354, %v384
  %v395 = vadd.f32 %v355, %v385
  %v396 = vmul.f32 %v386, 0.7978846
  %v397 = vmul.f32 %v387, 0.7978846
  %v398 = vmul.f32 %v388, 0.7978846
  %v399 = vmul.f32 %v389, 0.7978846
  %v400 = vmul.f32 %v390, 0.7978846
  %v401 = vmul.f32 %v391, 0.7978846
  %v402 = vmul.f32 %v392, 0.7978846
  %v403 = vmul.f32 %v393, 0.7978846
  %v404 = vmul.f32 %v394, 0.7978846
  %v405 = vmul.f32 %v395, 0.7978846
  %v406 = vtanh.pop %v396
  %v407 = vtanh.pop %v397
  %v408 = vtanh.pop %v398
  %v409 = vtanh.pop %v399
  %v410 = vtanh.pop %v400
  %v411 = vtanh.pop %v401
  %v412 = vtanh.pop %v402
  %v413 = vtanh.pop %v403
  %v414 = vtanh.pop %v404
  %v415 = vtanh.pop %v405
  %v416 = vadd.f32 %v406, 1.0
  %v417 = vadd.f32 %v407, 1.0
  %v418 = vadd.f32 %v408, 1.0
  %v419 = vadd.f32 %v409, 1.0
  %v420 = vadd.f32 %v410, 1.0
  %v421 = vadd.f32 %v411, 1.0
  %v422 = vadd.f32 %v412, 1.0
  %v423 = vadd.f32 %v413, 1.0
  %v424 = vadd.f32 %v414, 1.0
  %v425 = vadd.f32 %v415, 1.0
  %v426 = vmul.f32 %v416, 0.5
  %v427 = vmul.f32 %v417, 0.5
  %v428 = vmul.f32 %v418, 0.5
  %v429 = vmul.f32 %v419, 0.5
  %v430 = vmul.f32 %v420, 0.5
  %v431 = vmul.f32 %v421, 0.5
  %v432 = vmul.f32 %v422, 0.5
  %v433 = vmul.f32 %v423, 0.5
  %v434 = vmul.f32 %v424, 0.5
  %v435 = vmul.f32 %v425, 0.5
  %v436 = vmul.f32 %v346, %v426
  %v437 = vmul.f32 %v347, %v427
  %v438 = vmul.f32 %v348, %v428
  %v439 = vmul.f32 %v349, %v429
  %v440 = vmul.f32 %v350, %v430
  %v441 = vmul.f32 %v351, %v431
  %v442 = vmul.f32 %v352, %v432
  %v443 = vmul.f32 %v353, %v433
  %v444 = vmul.f32 %v354, %v434
  %v445 = vmul.f32 %v355, %v435
  %446 = vst.msk [vmem:[%s5] sm:$0xff] %vm191, %v436
  %447 = vst.msk [vmem:[%s5 + $0x8] sm:$0xff] %vm191, %v437
  %448 = vst.msk [vmem:[%s5 + $0x10] sm:$0xff] %vm191, %v438
  %449 = vst.msk [vmem:[%s5 + $0x18] sm:$0xff] %vm191, %v439
  %450 = vst.msk [vmem:[%s5 + $0x20] sm:$0xff] %vm191, %v440
  %451 = vst.msk [vmem:[%s5 + $0x28] sm:$0xff] %vm191, %v441
  %452 = vst.msk [vmem:[%s5 + $0x30] sm:$0xff] %vm191, %v442
  %453 = vst.msk [vmem:[%s5 + $0x38] sm:$0xff] %vm191, %v443
  %454 = vst.msk [vmem:[%s5 + $0x40] sm:$0xff] %vm191, %v444
  %455 = vst.msk [vmem:[%s5 + $0x48] sm:$0x3f] %vm219, %v445
  // Predicated region
  $region22: #{hubert_ft_forward.9} parent=0 // pred_check
    _
  $region23: #{hubert_ft_forward.9} parent=0 // pred_check_branch
    %457 = sbr.rel (0) target = $region25
  $region24: #{hubert_ft_forward.9} parent=0 // pred_region
    _
  $region25: #{hubert_ft_forward.9} parent=0 // pred_fallthru
    _
  // Predicated region
  $region26: #{hubert_ft_forward.9} parent=0 // pred_check
    _
  $region27: #{hubert_ft_forward.9} parent=0 // pred_check_branch
    %459 = sbr.rel (0) target = $region29
  $region28: #{hubert_ft_forward.9} parent=0 // pred_region
    _
  $region29: #{hubert_ft_forward.9} parent=0 // pred_fallthru
    _

// kernel: hubert_ft_forward.10
$region0: #{hubert_ft_forward.10}
  #allocation0 [shape = 'u32[]', space=smem, size = 0x4, offset = 0x4, fixed_abs, tag = 'smem constant byte address 0x4 - core index']
  #allocation1 [shape = 'u32[144,128]{1,0:T(1,128)}', space=vmem, size = 0x12000, scoped, tag = 'internal scratch']
  %s0 = inlined_call_operand.vmem [shape: f32[38,96], index: 0, kind: input, shape index: {}]
  %s1 = inlined_call_operand.vmem [shape: f32[96,32], index: 1, kind: input, shape index: {}]
  %s2 = inlined_call_operand.vmem [shape: f32[1,32], index: 2, kind: input, shape index: {}]
  %s3 = inlined_call_operand.vmem [shape: f32[1,32], index: 3, kind: input, shape index: {}]
  %s4 = inlined_call_operand.vmem [shape: f32[1,32], index: 4, kind: input, shape index: {}]
  %s5 = inlined_call_operand.vmem [shape: f32[38,32], index: 5, kind: output, shape index: {}]
  %s6 = sld [smem:[#allocation0]]
  $region30: #{hubert_ft_forward.10} parent=0
    _
  %s8 = ssub.s32 1, %s6
  %s9 = scalar_select 0, %s8, %s6
  // Predicated region
  $region2: #{hubert_ft_forward.10} parent=0 // pred_check
    _
  $region3: #{hubert_ft_forward.10} parent=0 // pred_check_branch
    %11 = sbr.rel (0) target = $region5
  $region4: #{hubert_ft_forward.10} parent=0 // pred_region
    _
  $region5: #{hubert_ft_forward.10} parent=0 // pred_fallthru
    _
  // Predicated region
  $region6: #{hubert_ft_forward.10} parent=0 // pred_check
    _
  $region7: #{hubert_ft_forward.10} parent=0 // pred_check_branch
    %13 = sbr.rel (0) target = $region9
  $region8: #{hubert_ft_forward.10} parent=0 // pred_region
    _
  $region9: #{hubert_ft_forward.10} parent=0 // pred_fallthru
    _
  // Predicated region
  $region10: #{hubert_ft_forward.10} parent=0 // pred_check
    _
  $region11: #{hubert_ft_forward.10} parent=0 // pred_check_branch
    %15 = sbr.rel (0) target = $region13
  $region12: #{hubert_ft_forward.10} parent=0 // pred_region
    _
  $region13: #{hubert_ft_forward.10} parent=0 // pred_fallthru
    _
  // Predicated region
  $region14: #{hubert_ft_forward.10} parent=0 // pred_check
    _
  $region15: #{hubert_ft_forward.10} parent=0 // pred_check_branch
    %17 = sbr.rel (0) target = $region17
  $region16: #{hubert_ft_forward.10} parent=0 // pred_region
    _
  $region17: #{hubert_ft_forward.10} parent=0 // pred_fallthru
    _
  // Predicated region
  $region18: #{hubert_ft_forward.10} parent=0 // pred_check
    _
  $region19: #{hubert_ft_forward.10} parent=0 // pred_check_branch
    %19 = sbr.rel (0) target = $region21
  $region20: #{hubert_ft_forward.10} parent=0 // pred_region
    _
  $region21: #{hubert_ft_forward.10} parent=0 // pred_fallthru
    _
  %v20 = vld [vmem:[%s0] sm:$0xff]
  %v21 = vld [vmem:[%s0 + $0x8] sm:$0xff]
  %v22 = vld [vmem:[%s0 + $0x10] sm:$0xff]
  %v23 = vld [vmem:[%s0 + $0x18] sm:$0xff]
  %v24 = vld [vmem:[%s0 + $0x20] sm:$0x3f]
  %v25 = vld [vmem:[%s1] sm:$0xff]
  %v26 = vld [vmem:[%s1 + $0x8] sm:$0xff]
  %v27 = vld [vmem:[%s1 + $0x10] sm:$0xff]
  %v28 = vld [vmem:[%s1 + $0x18] sm:$0xff]
  %v29 = vld [vmem:[%s1 + $0x20] sm:$0xff]
  %v30 = vld [vmem:[%s1 + $0x28] sm:$0xff]
  %v31 = vld [vmem:[%s1 + $0x30] sm:$0xff]
  %v32 = vld [vmem:[%s1 + $0x38] sm:$0xff]
  %v33 = vld [vmem:[%s1 + $0x40] sm:$0xff]
  %v34 = vld [vmem:[%s1 + $0x48] sm:$0xff]
  %v35 = vld [vmem:[%s1 + $0x50] sm:$0xff]
  %v36 = vld [vmem:[%s1 + $0x58] sm:$0xff]
  %v37 = vld [vmem:[%s2] sm:$0x1]
  %v39 = vlaneseq
  %v40 = vshrl.u32 %v39, 7
  %v41 = vsub.s32 0, %v40
  %v42 = vrot.slane %v37, %v41
  %vm44 = vcmask 785408
  %v46 = vsel %vm44, %v20, 0
  %v49 = vsel %vm44, %v21, 0
  %v52 = vsel %vm44, %v22, 0
  %v55 = vsel %vm44, %v23, 0
  %v58 = vsel %vm44, %v24, 0
  %60 = vmatprep.subr.mxu0 0.0
  %61 = vmatpush1.msra.mxu0 0.0
  %62 = vmatprep.subr.mxu0 0.0
  %63 = vmatpush1.msra.mxu0 0.0
  %64 = vmatprep.subr.mxu0 0.0
  %65 = vmatpush1.msra.mxu0 0.0
  %66 = vmatprep.subr.mxu0 0.0
  %67 = vmatpush1.msra.mxu0 0.0
  %68 = vmatprep.subr.mxu0 0.0
  %69 = vmatpush1.msra.mxu0 %v36
  %70 = vmatprep.subr.mxu0 0.0
  %71 = vmatpush1.msra.mxu0 %v35
  %72 = vmatprep.subr.mxu0 0.0
  %73 = vmatpush1.msra.mxu0 %v34
  %74 = vmatprep.subr.mxu0 0.0
  %75 = vmatpush1.msra.mxu0 %v33
  %76 = vmatprep.subr.mxu0 0.0
  %77 = vmatpush1.msra.mxu0 %v32
  %78 = vmatprep.subr.mxu0 0.0
  %79 = vmatpush1.msra.mxu0 %v31
  %80 = vmatprep.subr.mxu0 0.0
  %81 = vmatpush1.msra.mxu0 %v30
  %82 = vmatprep.subr.mxu0 0.0
  %83 = vmatpush1.msra.mxu0 %v29
  %84 = vmatprep.subr.mxu0 0.0
  %85 = vmatpush1.msra.mxu0 %v28
  %86 = vmatprep.subr.mxu0 0.0
  %87 = vmatpush1.msra.mxu0 %v27
  %88 = vmatprep.subr.mxu0 0.0
  %89 = vmatpush1.msra.mxu0 %v26
  %90 = vmatprep.subr.mxu0 0.0
  %91 = vmatpush1.msra.mxu0 %v25
  %92 = vmatprep.subr.mxu0 0.0
  %93 = vmatpush2.msra.mxu0 0.0
  %94 = vmatprep.subr.mxu0 0.0
  %95 = vmatpush2.msra.mxu0 0.0
  %96 = vmatprep.subr.mxu0 0.0
  %97 = vmatpush2.msra.mxu0 0.0
  %98 = vmatprep.subr.mxu0 0.0
  %99 = vmatpush2.msra.mxu0 0.0
  %100 = vmatprep.subr.mxu0 0.0
  %101 = vmatpush2.msra.mxu0 0.0
  %102 = vmatprep.subr.mxu0 0.0
  %103 = vmatpush2.msra.mxu0 0.0
  %104 = vmatprep.subr.mxu0 0.0
  %105 = vmatpush2.msra.mxu0 0.0
  %106 = vmatprep.subr.mxu0 0.0
  %107 = vmatpush2.msra.mxu0 0.0
  %108 = vmatprep.subr.mxu0 0.0
  %109 = vmatpush2.msra.mxu0 0.0
  %110 = vmatprep.subr.mxu0 0.0
  %111 = vmatpush2.msra.mxu0 0.0
  %112 = vmatprep.subr.mxu0 0.0
  %113 = vmatpush2.msra.mxu0 0.0
  %114 = vmatprep.subr.mxu0 0.0
  %115 = vmatpush2.msra.mxu0 0.0
  %116 = vmatprep.subr.mxu0 0.0
  %117 = vmatpush2.msra.mxu0 0.0
  %118 = vmatprep.subr.mxu0 0.0
  %119 = vmatpush2.msra.mxu0 0.0
  %120 = vmatprep.subr.mxu0 0.0
  %121 = vmatpush2.msra.mxu0 0.0
  %122 = vmatprep.subr.mxu0 0.0
  %123 = vmatpush2.msra.mxu0 0.0
  %124 = vmatprep.mubr.f32.mxu0 0.0
  %125 = vmatmul.mubr.f32.gmra.mxu0 %v46
  %v126 = vpop.f32.mrf.mxu0
  %v127 = vadd.f32 %v42, %v126
  %v128 = vpop.f32.mrf.mxu0
  %129 = vmatprep.mubr.f32.mxu0 0.0
  %130 = vmatmul.mubr.f32.gmra.mxu0 %v49
  %v131 = vpop.f32.mrf.mxu0
  %v132 = vadd.f32 %v42, %v131
  %v133 = vpop.f32.mrf.mxu0
  %134 = vmatprep.mubr.f32.mxu0 0.0
  %135 = vmatmul.mubr.f32.gmra.mxu0 %v52
  %v136 = vpop.f32.mrf.mxu0
  %v137 = vadd.f32 %v42, %v136
  %v138 = vpop.f32.mrf.mxu0
  %139 = vmatprep.mubr.f32.mxu0 0.0
  %140 = vmatmul.mubr.f32.gmra.mxu0 %v55
  %v141 = vpop.f32.mrf.mxu0
  %v142 = vadd.f32 %v42, %v141
  %v143 = vpop.f32.mrf.mxu0
  %144 = vmatprep.mubr.f32.mxu0 0.0
  %145 = vmatmul.mubr.f32.gmra.mxu0 %v58
  %v146 = vpop.f32.mrf.mxu0
  %v147 = vadd.f32 %v42, %v146
  %v148 = vpop.f32.mrf.mxu0
  %149 = vdwg.mxu0
  %v150 = vld [vmem:[%s3] sm:$0x1]
  %v151 = vld [vmem:[%s4] sm:$0x1]
  %vm152 = vcmask 261120
  %v153 = vsel %vm152, %v127, 0.0
  %154 = vadd.xlane.f32.xlu0 %v153
  %v155 = vpop.xlane.xlu0 %154
  %v156 = vsel %vm152, %v132, 0.0
  %157 = vadd.xlane.f32.xlu0 %v156
  %v158 = vpop.xlane.xlu0 %157
  %v159 = vsel %vm152, %v137, 0.0
  %160 = vadd.xlane.f32.xlu0 %v159
  %v161 = vpop.xlane.xlu0 %160
  %v162 = vsel %vm152, %v142, 0.0
  %163 = vadd.xlane.f32.xlu0 %v162
  %v164 = vpop.xlane.xlu0 %163
  %vm165 = vcmask 259072
  %v166 = vsel %vm165, %v147, 0.0
  %167 = vadd.xlane.f32.xlu0 %v166
  %v168 = vpop.xlane.xlu0 %167
  %v169 = vrcp.pop 32.0
  %v170 = vmul.f32 %v155, %v169
  %v171 = vmul.f32 %v158, %v169
  %v172 = vmul.f32 %v161, %v169
  %v173 = vmul.f32 %v164, %v169
  %v174 = vmul.f32 %v168, %v169
  %v175 = vsub.f32 %v127, %v170
  %v176 = vsub.f32 %v132, %v171
  %v177 = vsub.f32 %v137, %v172
  %v178 = vsub.f32 %v142, %v173
  %v179 = vsub.f32 %v147, %v174
  %v180 = vmul.f32 %v175, %v175
  %v181 = vmul.f32 %v176, %v176
  %v182 = vmul.f32 %v177, %v177
  %v183 = vmul.f32 %v178, %v178
  %v184 = vmul.f32 %v179, %v179
  %v185 = vsel %vm152, %v180, 0.0
  %186 = vadd.xlane.f32.xlu0 %v185
  %v187 = vpop.xlane.xlu0 %186
  %v188 = vsel %vm152, %v181, 0.0
  %189 = vadd.xlane.f32.xlu0 %v188
  %v190 = vpop.xlane.xlu0 %189
  %v191 = vsel %vm152, %v182, 0.0
  %192 = vadd.xlane.f32.xlu0 %v191
  %v193 = vpop.xlane.xlu0 %192
  %v194 = vsel %vm152, %v183, 0.0
  %195 = vadd.xlane.f32.xlu0 %v194
  %v196 = vpop.xlane.xlu0 %195
  %v197 = vsel %vm165, %v184, 0.0
  %198 = vadd.xlane.f32.xlu0 %v197
  %v199 = vpop.xlane.xlu0 %198
  %v200 = vmul.f32 %v187, %v169
  %v201 = vmul.f32 %v190, %v169
  %v202 = vmul.f32 %v193, %v169
  %v203 = vmul.f32 %v196, %v169
  %v204 = vmul.f32 %v199, %v169
  %v205 = vadd.f32 %v200, 1e-05
  %v206 = vadd.f32 %v201, 1e-05
  %v207 = vadd.f32 %v202, 1e-05
  %v208 = vadd.f32 %v203, 1e-05
  %v209 = vadd.f32 %v204, 1e-05
  %v210 = vrsqrt.pop %v205
  %v211 = vrsqrt.pop %v206
  %v212 = vrsqrt.pop %v207
  %v213 = vrsqrt.pop %v208
  %v214 = vrsqrt.pop %v209
  %v215 = vmul.f32 %v175, %v210
  %v216 = vmul.f32 %v176, %v211
  %v217 = vmul.f32 %v177, %v212
  %v218 = vmul.f32 %v178, %v213
  %v219 = vmul.f32 %v179, %v214
  %v221 = vlaneseq
  %v222 = vshrl.u32 %v221, 7
  %v223 = vsub.s32 0, %v222
  %v224 = vrot.slane %v150, %v223
  %v226 = vmul.f32 %v215, %v224
  %v227 = vmul.f32 %v216, %v224
  %v228 = vmul.f32 %v217, %v224
  %v229 = vmul.f32 %v218, %v224
  %v230 = vmul.f32 %v219, %v224
  %v232 = vlaneseq
  %v233 = vshrl.u32 %v232, 7
  %v234 = vsub.s32 0, %v233
  %v235 = vrot.slane %v151, %v234
  %v237 = vadd.f32 %v226, %v235
  %v238 = vadd.f32 %v227, %v235
  %v239 = vadd.f32 %v228, %v235
  %v240 = vadd.f32 %v229, %v235
  %v241 = vadd.f32 %v230, %v235
  %v242 = vmul.f32 %v237, %v237
  %v243 = vmul.f32 %v238, %v238
  %v244 = vmul.f32 %v239, %v239
  %v245 = vmul.f32 %v240, %v240
  %v246 = vmul.f32 %v241, %v241
  %v247 = vmul.f32 %v237, %v242
  %v248 = vmul.f32 %v238, %v243
  %v249 = vmul.f32 %v239, %v244
  %v250 = vmul.f32 %v240, %v245
  %v251 = vmul.f32 %v241, %v246
  %v252 = vmul.f32 %v247, 0.044715
  %v253 = vmul.f32 %v248, 0.044715
  %v254 = vmul.f32 %v249, 0.044715
  %v255 = vmul.f32 %v250, 0.044715
  %v256 = vmul.f32 %v251, 0.044715
  %v257 = vadd.f32 %v237, %v252
  %v258 = vadd.f32 %v238, %v253
  %v259 = vadd.f32 %v239, %v254
  %v260 = vadd.f32 %v240, %v255
  %v261 = vadd.f32 %v241, %v256
  %v262 = vmul.f32 %v257, 0.7978846
  %v263 = vmul.f32 %v258, 0.7978846
  %v264 = vmul.f32 %v259, 0.7978846
  %v265 = vmul.f32 %v260, 0.7978846
  %v266 = vmul.f32 %v261, 0.7978846
  %v267 = vtanh.pop %v262
  %v268 = vtanh.pop %v263
  %v269 = vtanh.pop %v264
  %v270 = vtanh.pop %v265
  %v271 = vtanh.pop %v266
  %v272 = vadd.f32 %v267, 1.0
  %v273 = vadd.f32 %v268, 1.0
  %v274 = vadd.f32 %v269, 1.0
  %v275 = vadd.f32 %v270, 1.0
  %v276 = vadd.f32 %v271, 1.0
  %v277 = vmul.f32 %v272, 0.5
  %v278 = vmul.f32 %v273, 0.5
  %v279 = vmul.f32 %v274, 0.5
  %v280 = vmul.f32 %v275, 0.5
  %v281 = vmul.f32 %v276, 0.5
  %v282 = vmul.f32 %v237, %v277
  %v283 = vmul.f32 %v238, %v278
  %v284 = vmul.f32 %v239, %v279
  %v285 = vmul.f32 %v240, %v280
  %v286 = vmul.f32 %v241, %v281
  %287 = vst.msk [vmem:[%s5] sm:$0xff] %vm152, %v282
  %288 = vst.msk [vmem:[%s5 + $0x8] sm:$0xff] %vm152, %v283
  %289 = vst.msk [vmem:[%s5 + $0x10] sm:$0xff] %vm152, %v284
  %290 = vst.msk [vmem:[%s5 + $0x18] sm:$0xff] %vm152, %v285
  %291 = vst.msk [vmem:[%s5 + $0x20] sm:$0x3f] %vm165, %v286
  // Predicated region
  $region22: #{hubert_ft_forward.10} parent=0 // pred_check
    _
  $region23: #{hubert_ft_forward.10} parent=0 // pred_check_branch
    %293 = sbr.rel (0) target = $region25
  $region24: #{hubert_ft_forward.10} parent=0 // pred_region
    _
  $region25: #{hubert_ft_forward.10} parent=0 // pred_fallthru
    _
  // Predicated region
  $region26: #{hubert_ft_forward.10} parent=0 // pred_check
    _
  $region27: #{hubert_ft_forward.10} parent=0 // pred_check_branch
    %295 = sbr.rel (0) target = $region29
  $region28: #{hubert_ft_forward.10} parent=0 // pred_region
    _
  $region29: #{hubert_ft_forward.10} parent=0 // pred_fallthru
    _

// kernel: hubert_ft_forward.11
$region0: #{hubert_ft_forward.11}
  #allocation0 [shape = 'u32[]', space=smem, size = 0x4, offset = 0x4, fixed_abs, tag = 'smem constant byte address 0x4 - core index']
  #allocation1 [shape = 'u32[144,128]{1,0:T(1,128)}', space=vmem, size = 0x12000, scoped, tag = 'internal scratch']
  %s0 = inlined_call_operand.vmem [shape: f32[38,32], index: 0, kind: input, shape index: {}]
  %s1 = inlined_call_operand.vmem [shape: f32[1,32], index: 1, kind: input, shape index: {}]
  %s2 = inlined_call_operand.vmem [shape: f32[1,32], index: 2, kind: input, shape index: {}]
  %s3 = inlined_call_operand.vmem [shape: f32[32,32], index: 3, kind: input, shape index: {}]
  %s4 = inlined_call_operand.vmem [shape: f32[1,32], index: 4, kind: input, shape index: {}]
  %s5 = inlined_call_operand.vmem [shape: f32[38,32], index: 5, kind: output, shape index: {}]
  %s6 = sld [smem:[#allocation0]]
  $region30: #{hubert_ft_forward.11} parent=0
    _
  %s8 = ssub.s32 1, %s6
  %s9 = scalar_select 0, %s8, %s6
  // Predicated region
  $region2: #{hubert_ft_forward.11} parent=0 // pred_check
    _
  $region3: #{hubert_ft_forward.11} parent=0 // pred_check_branch
    %11 = sbr.rel (0) target = $region5
  $region4: #{hubert_ft_forward.11} parent=0 // pred_region
    _
  $region5: #{hubert_ft_forward.11} parent=0 // pred_fallthru
    _
  // Predicated region
  $region6: #{hubert_ft_forward.11} parent=0 // pred_check
    _
  $region7: #{hubert_ft_forward.11} parent=0 // pred_check_branch
    %13 = sbr.rel (0) target = $region9
  $region8: #{hubert_ft_forward.11} parent=0 // pred_region
    _
  $region9: #{hubert_ft_forward.11} parent=0 // pred_fallthru
    _
  // Predicated region
  $region10: #{hubert_ft_forward.11} parent=0 // pred_check
    _
  $region11: #{hubert_ft_forward.11} parent=0 // pred_check_branch
    %15 = sbr.rel (0) target = $region13
  $region12: #{hubert_ft_forward.11} parent=0 // pred_region
    _
  $region13: #{hubert_ft_forward.11} parent=0 // pred_fallthru
    _
  // Predicated region
  $region14: #{hubert_ft_forward.11} parent=0 // pred_check
    _
  $region15: #{hubert_ft_forward.11} parent=0 // pred_check_branch
    %17 = sbr.rel (0) target = $region17
  $region16: #{hubert_ft_forward.11} parent=0 // pred_region
    _
  $region17: #{hubert_ft_forward.11} parent=0 // pred_fallthru
    _
  // Predicated region
  $region18: #{hubert_ft_forward.11} parent=0 // pred_check
    _
  $region19: #{hubert_ft_forward.11} parent=0 // pred_check_branch
    %19 = sbr.rel (0) target = $region21
  $region20: #{hubert_ft_forward.11} parent=0 // pred_region
    _
  $region21: #{hubert_ft_forward.11} parent=0 // pred_fallthru
    _
  %v20 = vld [vmem:[%s0] sm:$0xff]
  %v21 = vld [vmem:[%s0 + $0x8] sm:$0xff]
  %v22 = vld [vmem:[%s0 + $0x10] sm:$0xff]
  %v23 = vld [vmem:[%s0 + $0x18] sm:$0xff]
  %v24 = vld [vmem:[%s0 + $0x20] sm:$0x3f]
  %v25 = vld [vmem:[%s1] sm:$0x1]
  %v26 = vld [vmem:[%s2] sm:$0x1]
  %vm27 = vcmask 261120
  %v28 = vsel %vm27, %v20, 0.0
  %29 = vadd.xlane.f32.xlu0 %v28
  %v30 = vpop.xlane.xlu0 %29
  %v31 = vsel %vm27, %v21, 0.0
  %32 = vadd.xlane.f32.xlu0 %v31
  %v33 = vpop.xlane.xlu0 %32
  %v34 = vsel %vm27, %v22, 0.0
  %35 = vadd.xlane.f32.xlu0 %v34
  %v36 = vpop.xlane.xlu0 %35
  %v37 = vsel %vm27, %v23, 0.0
  %38 = vadd.xlane.f32.xlu0 %v37
  %v39 = vpop.xlane.xlu0 %38
  %vm40 = vcmask 259072
  %v41 = vsel %vm40, %v24, 0.0
  %42 = vadd.xlane.f32.xlu0 %v41
  %v43 = vpop.xlane.xlu0 %42
  %v44 = vrcp.pop 32.0
  %v45 = vmul.f32 %v30, %v44
  %v46 = vmul.f32 %v33, %v44
  %v47 = vmul.f32 %v36, %v44
  %v48 = vmul.f32 %v39, %v44
  %v49 = vmul.f32 %v43, %v44
  %v50 = vsub.f32 %v20, %v45
  %v51 = vsub.f32 %v21, %v46
  %v52 = vsub.f32 %v22, %v47
  %v53 = vsub.f32 %v23, %v48
  %v54 = vsub.f32 %v24, %v49
  %v55 = vmul.f32 %v50, %v50
  %v56 = vmul.f32 %v51, %v51
  %v57 = vmul.f32 %v52, %v52
  %v58 = vmul.f32 %v53, %v53
  %v59 = vmul.f32 %v54, %v54
  %v60 = vsel %vm27, %v55, 0.0
  %61 = vadd.xlane.f32.xlu0 %v60
  %v62 = vpop.xlane.xlu0 %61
  %v63 = vsel %vm27, %v56, 0.0
  %64 = vadd.xlane.f32.xlu0 %v63
  %v65 = vpop.xlane.xlu0 %64
  %v66 = vsel %vm27, %v57, 0.0
  %67 = vadd.xlane.f32.xlu0 %v66
  %v68 = vpop.xlane.xlu0 %67
  %v69 = vsel %vm27, %v58, 0.0
  %70 = vadd.xlane.f32.xlu0 %v69
  %v71 = vpop.xlane.xlu0 %70
  %v72 = vsel %vm40, %v59, 0.0
  %73 = vadd.xlane.f32.xlu0 %v72
  %v74 = vpop.xlane.xlu0 %73
  %v75 = vmul.f32 %v62, %v44
  %v76 = vmul.f32 %v65, %v44
  %v77 = vmul.f32 %v68, %v44
  %v78 = vmul.f32 %v71, %v44
  %v79 = vmul.f32 %v74, %v44
  %v80 = vadd.f32 %v75, 1e-05
  %v81 = vadd.f32 %v76, 1e-05
  %v82 = vadd.f32 %v77, 1e-05
  %v83 = vadd.f32 %v78, 1e-05
  %v84 = vadd.f32 %v79, 1e-05
  %v85 = vrsqrt.pop %v80
  %v86 = vrsqrt.pop %v81
  %v87 = vrsqrt.pop %v82
  %v88 = vrsqrt.pop %v83
  %v89 = vrsqrt.pop %v84
  %v90 = vmul.f32 %v50, %v85
  %v91 = vmul.f32 %v51, %v86
  %v92 = vmul.f32 %v52, %v87
  %v93 = vmul.f32 %v53, %v88
  %v94 = vmul.f32 %v54, %v89
  %v96 = vlaneseq
  %v97 = vshrl.u32 %v96, 7
  %v98 = vsub.s32 0, %v97
  %v99 = vrot.slane %v25, %v98
  %v101 = vmul.f32 %v90, %v99
  %v102 = vmul.f32 %v91, %v99
  %v103 = vmul.f32 %v92, %v99
  %v104 = vmul.f32 %v93, %v99
  %v105 = vmul.f32 %v94, %v99
  %v107 = vlaneseq
  %v108 = vshrl.u32 %v107, 7
  %v109 = vsub.s32 0, %v108
  %v110 = vrot.slane %v26, %v109
  %v112 = vadd.f32 %v101, %v110
  %v113 = vadd.f32 %v102, %v110
  %v114 = vadd.f32 %v103, %v110
  %v115 = vadd.f32 %v104, %v110
  %v116 = vadd.f32 %v105, %v110
  %v117 = vld [vmem:[%s3] sm:$0xff]
  %v118 = vld [vmem:[%s3 + $0x8] sm:$0xff]
  %v119 = vld [vmem:[%s3 + $0x10] sm:$0xff]
  %v120 = vld [vmem:[%s3 + $0x18] sm:$0xff]
  %v121 = vld [vmem:[%s4] sm:$0x1]
  %v123 = vlaneseq
  %v124 = vshrl.u32 %v123, 7
  %v125 = vsub.s32 0, %v124
  %v126 = vrot.slane %v121, %v125
  %v129 = vsel %vm27, %v112, 0
  %v132 = vsel %vm27, %v113, 0
  %v135 = vsel %vm27, %v114, 0
  %v138 = vsel %vm27, %v115, 0
  %v141 = vsel %vm27, %v116, 0
  %143 = vmatprep.subr.mxu0 0.0
  %144 = vmatpush1.msra.mxu0 0.0
  %145 = vmatprep.subr.mxu0 0.0
  %146 = vmatpush1.msra.mxu0 0.0
  %147 = vmatprep.subr.mxu0 0.0
  %148 = vmatpush1.msra.mxu0 0.0
  %149 = vmatprep.subr.mxu0 0.0
  %150 = vmatpush1.msra.mxu0 0.0
  %151 = vmatprep.subr.mxu0 0.0
  %152 = vmatpush1.msra.mxu0 0.0
  %153 = vmatprep.subr.mxu0 0.0
  %154 = vmatpush1.msra.mxu0 0.0
  %155 = vmatprep.subr.mxu0 0.0
  %156 = vmatpush1.msra.mxu0 0.0
  %157 = vmatprep.subr.mxu0 0.0
  %158 = vmatpush1.msra.mxu0 0.0
  %159 = vmatprep.subr.mxu0 0.0
  %160 = vmatpush1.msra.mxu0 0.0
  %161 = vmatprep.subr.mxu0 0.0
  %162 = vmatpush1.msra.mxu0 0.0
  %163 = vmatprep.subr.mxu0 0.0
  %164 = vmatpush1.msra.mxu0 0.0
  %165 = vmatprep.subr.mxu0 0.0
  %166 = vmatpush1.msra.mxu0 0.0
  %167 = vmatprep.subr.mxu0 0.0
  %168 = vmatpush1.msra.mxu0 %v120
  %169 = vmatprep.subr.mxu0 0.0
  %170 = vmatpush1.msra.mxu0 %v119
  %171 = vmatprep.subr.mxu0 0.0
  %172 = vmatpush1.msra.mxu0 %v118
  %173 = vmatprep.subr.mxu0 0.0
  %174 = vmatpush1.msra.mxu0 %v117
  %175 = vmatprep.subr.mxu0 0.0
  %176 = vmatpush2.msra.mxu0 0.0
  %177 = vmatprep.subr.mxu0 0.0
  %178 = vmatpush2.msra.mxu0 0.0
  %179 = vmatprep.subr.mxu0 0.0
  %180 = vmatpush2.msra.mxu0 0.0
  %181 = vmatprep.subr.mxu0 0.0
  %182 = vmatpush2.msra.mxu0 0.0
  %183 = vmatprep.subr.mxu0 0.0
  %184 = vmatpush2.msra.mxu0 0.0
  %185 = vmatprep.subr.mxu0 0.0
  %186 = vmatpush2.msra.mxu0 0.0
  %187 = vmatprep.subr.mxu0 0.0
  %188 = vmatpush2.msra.mxu0 0.0
  %189 = vmatprep.subr.mxu0 0.0
  %190 = vmatpush2.msra.mxu0 0.0
  %191 = vmatprep.subr.mxu0 0.0
  %192 = vmatpush2.msra.mxu0 0.0
  %193 = vmatprep.subr.mxu0 0.0
  %194 = vmatpush2.msra.mxu0 0.0
  %195 = vmatprep.subr.mxu0 0.0
  %196 = vmatpush2.msra.mxu0 0.0
  %197 = vmatprep.subr.mxu0 0.0
  %198 = vmatpush2.msra.mxu0 0.0
  %199 = vmatprep.subr.mxu0 0.0
  %200 = vmatpush2.msra.mxu0 0.0
  %201 = vmatprep.subr.mxu0 0.0
  %202 = vmatpush2.msra.mxu0 0.0
  %203 = vmatprep.subr.mxu0 0.0
  %204 = vmatpush2.msra.mxu0 0.0
  %205 = vmatprep.subr.mxu0 0.0
  %206 = vmatpush2.msra.mxu0 0.0
  %207 = vmatprep.mubr.f32.mxu0 0.0
  %208 = vmatmul.mubr.f32.gmra.mxu0 %v129
  %v209 = vpop.f32.mrf.mxu0
  %v210 = vadd.f32 %v126, %v209
  %v211 = vpop.f32.mrf.mxu0
  %212 = vmatprep.mubr.f32.mxu0 0.0
  %213 = vmatmul.mubr.f32.gmra.mxu0 %v132
  %v214 = vpop.f32.mrf.mxu0
  %v215 = vadd.f32 %v126, %v214
  %v216 = vpop.f32.mrf.mxu0
  %217 = vmatprep.mubr.f32.mxu0 0.0
  %218 = vmatmul.mubr.f32.gmra.mxu0 %v135
  %v219 = vpop.f32.mrf.mxu0
  %v220 = vadd.f32 %v126, %v219
  %v221 = vpop.f32.mrf.mxu0
  %222 = vmatprep.mubr.f32.mxu0 0.0
  %223 = vmatmul.mubr.f32.gmra.mxu0 %v138
  %v224 = vpop.f32.mrf.mxu0
  %v225 = vadd.f32 %v126, %v224
  %v226 = vpop.f32.mrf.mxu0
  %227 = vmatprep.mubr.f32.mxu0 0.0
  %228 = vmatmul.mubr.f32.gmra.mxu0 %v141
  %v229 = vpop.f32.mrf.mxu0
  %v230 = vadd.f32 %v126, %v229
  %v231 = vpop.f32.mrf.mxu0
  %232 = vdwg.mxu0
  %233 = vst.msk [vmem:[%s5] sm:$0xff] %vm27, %v210
  %234 = vst.msk [vmem:[%s5 + $0x8] sm:$0xff] %vm27, %v215
  %235 = vst.msk [vmem:[%s5 + $0x10] sm:$0xff] %vm27, %v220
  %236 = vst.msk [vmem:[%s5 + $0x18] sm:$0xff] %vm27, %v225
  %237 = vst.msk [vmem:[%s5 + $0x20] sm:$0x3f] %vm40, %v230
  // Predicated region
  $region22: #{hubert_ft_forward.11} parent=0 // pred_check
    _
  $region23: #{hubert_ft_forward.11} parent=0 // pred_check_branch
    %239 = sbr.rel (0) target = $region25
  $region24: #{hubert_ft_forward.11} parent=0 // pred_region
    _
  $region25: #{hubert_ft_forward.11} parent=0 // pred_fallthru
    _
  // Predicated region
  $region26: #{hubert_ft_forward.11} parent=0 // pred_check
    _
  $region27: #{hubert_ft_forward.11} parent=0 // pred_check_branch
    %241 = sbr.rel (0) target = $region29
  $region28: #{hubert_ft_forward.11} parent=0 // pred_region
    _
  $region29: #{hubert_ft_forward.11} parent=0 // pred_fallthru
    _

// kernel: hubert_ft_forward.12
$region0: #{hubert_ft_forward.12}
  #allocation0 [shape = 'u32[]', space=smem, size = 0x4, offset = 0x4, fixed_abs, tag = 'smem constant byte address 0x4 - core index']
  #allocation1 [shape = 'u32[144,128]{1,0:T(1,128)}', space=vmem, size = 0x12000, scoped, tag = 'internal scratch']
  %s0 = inlined_call_operand.vmem [shape: f32[38,32], index: 0, kind: input, shape index: {}]
  %s1 = inlined_call_operand.vmem [shape: f32[38,512], index: 1, kind: input, shape index: {}]
  %s2 = inlined_call_operand.vmem [shape: f32[512,32], index: 2, kind: input, shape index: {}]
  %s3 = inlined_call_operand.vmem [shape: f32[1,32], index: 3, kind: input, shape index: {}]
  %s4 = inlined_call_operand.vmem [shape: f32[38,32], index: 4, kind: output, shape index: {}]
  %s5 = sld [smem:[#allocation0]]
  $region26: #{hubert_ft_forward.12} parent=0
    _
  %s7 = ssub.s32 1, %s5
  %s8 = scalar_select 0, %s7, %s5
  // Predicated region
  $region2: #{hubert_ft_forward.12} parent=0 // pred_check
    _
  $region3: #{hubert_ft_forward.12} parent=0 // pred_check_branch
    %10 = sbr.rel (0) target = $region5
  $region4: #{hubert_ft_forward.12} parent=0 // pred_region
    _
  $region5: #{hubert_ft_forward.12} parent=0 // pred_fallthru
    _
  // Predicated region
  $region6: #{hubert_ft_forward.12} parent=0 // pred_check
    _
  $region7: #{hubert_ft_forward.12} parent=0 // pred_check_branch
    %12 = sbr.rel (0) target = $region9
  $region8: #{hubert_ft_forward.12} parent=0 // pred_region
    _
  $region9: #{hubert_ft_forward.12} parent=0 // pred_fallthru
    _
  // Predicated region
  $region10: #{hubert_ft_forward.12} parent=0 // pred_check
    _
  $region11: #{hubert_ft_forward.12} parent=0 // pred_check_branch
    %14 = sbr.rel (0) target = $region13
  $region12: #{hubert_ft_forward.12} parent=0 // pred_region
    _
  $region13: #{hubert_ft_forward.12} parent=0 // pred_fallthru
    _
  // Predicated region
  $region14: #{hubert_ft_forward.12} parent=0 // pred_check
    _
  $region15: #{hubert_ft_forward.12} parent=0 // pred_check_branch
    %16 = sbr.rel (0) target = $region17
  $region16: #{hubert_ft_forward.12} parent=0 // pred_region
    _
  $region17: #{hubert_ft_forward.12} parent=0 // pred_fallthru
    _
  %v17 = vld [vmem:[%s1] sm:$0xff]
  %v18 = vld [vmem:[%s1 + $0x8] sm:$0xff]
  %v19 = vld [vmem:[%s1 + $0x10] sm:$0xff]
  %v20 = vld [vmem:[%s1 + $0x18] sm:$0xff]
  %v21 = vld [vmem:[%s1 + $0x20] sm:$0xff]
  %v22 = vld [vmem:[%s1 + $0x28] sm:$0xff]
  %v23 = vld [vmem:[%s1 + $0x30] sm:$0xff]
  %v24 = vld [vmem:[%s1 + $0x38] sm:$0xff]
  %v25 = vld [vmem:[%s1 + $0x40] sm:$0xff]
  %v26 = vld [vmem:[%s1 + $0x48] sm:$0xff]
  %v27 = vld [vmem:[%s1 + $0x50] sm:$0xff]
  %v28 = vld [vmem:[%s1 + $0x58] sm:$0xff]
  %v29 = vld [vmem:[%s1 + $0x60] sm:$0xff]
  %v30 = vld [vmem:[%s1 + $0x68] sm:$0xff]
  %v31 = vld [vmem:[%s1 + $0x70] sm:$0xff]
  %v32 = vld [vmem:[%s1 + $0x78] sm:$0xff]
  %v33 = vld [vmem:[%s1 + $0x80] sm:$0x3f]
  %v34 = vld [vmem:[%s1 + $0x88] sm:$0x3f]
  %v35 = vld [vmem:[%s1 + $0x90] sm:$0x3f]
  %v36 = vld [vmem:[%s1 + $0x98] sm:$0x3f]
  %v37 = vld [vmem:[%s2] sm:$0xff]
  %v38 = vld [vmem:[%s2 + $0x8] sm:$0xff]
  %v39 = vld [vmem:[%s2 + $0x10] sm:$0xff]
  %v40 = vld [vmem:[%s2 + $0x18] sm:$0xff]
  %v41 = vld [vmem:[%s2 + $0x20] sm:$0xff]
  %v42 = vld [vmem:[%s2 + $0x28] sm:$0xff]
  %v43 = vld [vmem:[%s2 + $0x30] sm:$0xff]
  %v44 = vld [vmem:[%s2 + $0x38] sm:$0xff]
  %v45 = vld [vmem:[%s2 + $0x40] sm:$0xff]
  %v46 = vld [vmem:[%s2 + $0x48] sm:$0xff]
  %v47 = vld [vmem:[%s2 + $0x50] sm:$0xff]
  %v48 = vld [vmem:[%s2 + $0x58] sm:$0xff]
  %v49 = vld [vmem:[%s2 + $0x60] sm:$0xff]
  %v50 = vld [vmem:[%s2 + $0x68] sm:$0xff]
  %v51 = vld [vmem:[%s2 + $0x70] sm:$0xff]
  %v52 = vld [vmem:[%s2 + $0x78] sm:$0xff]
  %v53 = vld [vmem:[%s2 + $0x80] sm:$0xff]
  %v54 = vld [vmem:[%s2 + $0x88] sm:$0xff]
  %v55 = vld [vmem:[%s2 + $0x90] sm:$0xff]
  %v56 = vld [vmem:[%s2 + $0x98] sm:$0xff]
  %v57 = vld [vmem:[%s2 + $0xa0] sm:$0xff]
  %v58 = vld [vmem:[%s2 + $0xa8] sm:$0xff]
  %v59 = vld [vmem:[%s2 + $0xb0] sm:$0xff]
  %v60 = vld [vmem:[%s2 + $0xb8] sm:$0xff]
  %v61 = vld [vmem:[%s2 + $0xc0] sm:$0xff]
  %v62 = vld [vmem:[%s2 + $0xc8] sm:$0xff]
  %v63 = vld [vmem:[%s2 + $0xd0] sm:$0xff]
  %v64 = vld [vmem:[%s2 + $0xd8] sm:$0xff]
  %v65 = vld [vmem:[%s2 + $0xe0] sm:$0xff]
  %v66 = vld [vmem:[%s2 + $0xe8] sm:$0xff]
  %v67 = vld [vmem:[%s2 + $0xf0] sm:$0xff]
  %v68 = vld [vmem:[%s2 + $0xf8] sm:$0xff]
  %v69 = vld [vmem:[%s2 + $0x100] sm:$0xff]
  %v70 = vld [vmem:[%s2 + $0x108] sm:$0xff]
  %v71 = vld [vmem:[%s2 + $0x110] sm:$0xff]
  %v72 = vld [vmem:[%s2 + $0x118] sm:$0xff]
  %v73 = vld [vmem:[%s2 + $0x120] sm:$0xff]
  %v74 = vld [vmem:[%s2 + $0x128] sm:$0xff]
  %v75 = vld [vmem:[%s2 + $0x130] sm:$0xff]
  %v76 = vld [vmem:[%s2 + $0x138] sm:$0xff]
  %v77 = vld [vmem:[%s2 + $0x140] sm:$0xff]
  %v78 = vld [vmem:[%s2 + $0x148] sm:$0xff]
  %v79 = vld [vmem:[%s2 + $0x150] sm:$0xff]
  %v80 = vld [vmem:[%s2 + $0x158] sm:$0xff]
  %v81 = vld [vmem:[%s2 + $0x160] sm:$0xff]
  %v82 = vld [vmem:[%s2 + $0x168] sm:$0xff]
  %v83 = vld [vmem:[%s2 + $0x170] sm:$0xff]
  %v84 = vld [vmem:[%s2 + $0x178] sm:$0xff]
  %v85 = vld [vmem:[%s2 + $0x180] sm:$0xff]
  %v86 = vld [vmem:[%s2 + $0x188] sm:$0xff]
  %v87 = vld [vmem:[%s2 + $0x190] sm:$0xff]
  %v88 = vld [vmem:[%s2 + $0x198] sm:$0xff]
  %v89 = vld [vmem:[%s2 + $0x1a0] sm:$0xff]
  %v90 = vld [vmem:[%s2 + $0x1a8] sm:$0xff]
  %v91 = vld [vmem:[%s2 + $0x1b0] sm:$0xff]
  %v92 = vld [vmem:[%s2 + $0x1b8] sm:$0xff]
  %v93 = vld [vmem:[%s2 + $0x1c0] sm:$0xff]
  %v94 = vld [vmem:[%s2 + $0x1c8] sm:$0xff]
  %v95 = vld [vmem:[%s2 + $0x1d0] sm:$0xff]
  %v96 = vld [vmem:[%s2 + $0x1d8] sm:$0xff]
  %v97 = vld [vmem:[%s2 + $0x1e0] sm:$0xff]
  %v98 = vld [vmem:[%s2 + $0x1e8] sm:$0xff]
  %v99 = vld [vmem:[%s2 + $0x1f0] sm:$0xff]
  %v100 = vld [vmem:[%s2 + $0x1f8] sm:$0xff]
  %v101 = vld [vmem:[%s3] sm:$0x1]
  %v103 = vlaneseq
  %v104 = vshrl.u32 %v103, 7
  %v105 = vsub.s32 0, %v104
  %v106 = vrot.slane %v101, %v105
  %108 = vmatprep.subr.mxu0 0.0
  %109 = vmatpush1.msra.mxu0 %v52
  %110 = vmatprep.subr.mxu0 0.0
  %111 = vmatpush1.msra.mxu0 %v51
  %112 = vmatprep.subr.mxu0 0.0
  %113 = vmatpush1.msra.mxu0 %v50
  %114 = vmatprep.subr.mxu0 0.0
  %115 = vmatpush1.msra.mxu0 %v49
  %116 = vmatprep.subr.mxu0 0.0
  %117 = vmatpush1.msra.mxu0 %v48
  %118 = vmatprep.subr.mxu0 0.0
  %119 = vmatpush1.msra.mxu0 %v47
  %120 = vmatprep.subr.mxu0 0.0
  %121 = vmatpush1.msra.mxu0 %v46
  %122 = vmatprep.subr.mxu0 0.0
  %123 = vmatpush1.msra.mxu0 %v45
  %124 = vmatprep.subr.mxu0 0.0
  %125 = vmatpush1.msra.mxu0 %v44
  %126 = vmatprep.subr.mxu0 0.0
  %127 = vmatpush1.msra.mxu0 %v43
  %128 = vmatprep.subr.mxu0 0.0
  %129 = vmatpush1.msra.mxu0 %v42
  %130 = vmatprep.subr.mxu0 0.0
  %131 = vmatpush1.msra.mxu0 %v41
  %132 = vmatprep.subr.mxu0 0.0
  %133 = vmatpush1.msra.mxu0 %v40
  %134 = vmatprep.subr.mxu0 0.0
  %135 = vmatpush1.msra.mxu0 %v39
  %136 = vmatprep.subr.mxu0 0.0
  %137 = vmatpush1.msra.mxu0 %v38
  %138 = vmatprep.subr.mxu0 0.0
  %139 = vmatpush1.msra.mxu0 %v37
  %140 = vmatprep.subr.mxu0 0.0
  %141 = vmatpush2.msra.mxu0 %v68
  %142 = vmatprep.subr.mxu0 0.0
  %143 = vmatpush2.msra.mxu0 %v67
  %144 = vmatprep.subr.mxu0 0.0
  %145 = vmatpush2.msra.mxu0 %v66
  %146 = vmatprep.subr.mxu0 0.0
  %147 = vmatpush2.msra.mxu0 %v65
  %148 = vmatprep.subr.mxu0 0.0
  %149 = vmatpush2.msra.mxu0 %v64
  %150 = vmatprep.subr.mxu0 0.0
  %151 = vmatpush2.msra.mxu0 %v63
  %152 = vmatprep.subr.mxu0 0.0
  %153 = vmatpush2.msra.mxu0 %v62
  %154 = vmatprep.subr.mxu0 0.0
  %155 = vmatpush2.msra.mxu0 %v61
  %156 = vmatprep.subr.mxu0 0.0
  %157 = vmatpush2.msra.mxu0 %v60
  %158 = vmatprep.subr.mxu0 0.0
  %159 = vmatpush2.msra.mxu0 %v59
  %160 = vmatprep.subr.mxu0 0.0
  %161 = vmatpush2.msra.mxu0 %v58
  %162 = vmatprep.subr.mxu0 0.0
  %163 = vmatpush2.msra.mxu0 %v57
  %164 = vmatprep.subr.mxu0 0.0
  %165 = vmatpush2.msra.mxu0 %v56
  %166 = vmatprep.subr.mxu0 0.0
  %167 = vmatpush2.msra.mxu0 %v55
  %168 = vmatprep.subr.mxu0 0.0
  %169 = vmatpush2.msra.mxu0 %v54
  %170 = vmatprep.subr.mxu0 0.0
  %171 = vmatpush2.msra.mxu0 %v53
  %172 = vmatprep.mubr.f32.mxu0 %v18
  %173 = vmatmul.mubr.f32.gmra.mxu0 %v17
  %v174 = vpop.f32.mrf.mxu0
  %v175 = vadd.f32 %v106, %v174
  %v176 = vpop.f32.mrf.mxu0
  %177 = vmatprep.mubr.f32.mxu0 %v22
  %178 = vmatmul.mubr.f32.gmra.mxu0 %v21
  %v179 = vpop.f32.mrf.mxu0
  %v180 = vadd.f32 %v106, %v179
  %v181 = vpop.f32.mrf.mxu0
  %182 = vmatprep.mubr.f32.mxu0 %v26
  %183 = vmatmul.mubr.f32.gmra.mxu0 %v25
  %v184 = vpop.f32.mrf.mxu0
  %v185 = vadd.f32 %v106, %v184
  %v186 = vpop.f32.mrf.mxu0
  %187 = vmatprep.mubr.f32.mxu0 %v30
  %188 = vmatmul.mubr.f32.gmra.mxu0 %v29
  %v189 = vpop.f32.mrf.mxu0
  %v190 = vadd.f32 %v106, %v189
  %v191 = vpop.f32.mrf.mxu0
  %192 = vmatprep.mubr.f32.mxu0 %v34
  %193 = vmatmul.mubr.f32.gmra.mxu0 %v33
  %v194 = vpop.f32.mrf.mxu0
  %v195 = vadd.f32 %v106, %v194
  %v196 = vpop.f32.mrf.mxu0
  %197 = vdwg.mxu0
  %198 = vmatprep.subr.mxu0 0.0
  %199 = vmatpush1.msra.mxu0 %v84
  %200 = vmatprep.subr.mxu0 0.0
  %201 = vmatpush1.msra.mxu0 %v83
  %202 = vmatprep.subr.mxu0 0.0
  %203 = vmatpush1.msra.mxu0 %v82
  %204 = vmatprep.subr.mxu0 0.0
  %205 = vmatpush1.msra.mxu0 %v81
  %206 = vmatprep.subr.mxu0 0.0
  %207 = vmatpush1.msra.mxu0 %v80
  %208 = vmatprep.subr.mxu0 0.0
  %209 = vmatpush1.msra.mxu0 %v79
  %210 = vmatprep.subr.mxu0 0.0
  %211 = vmatpush1.msra.mxu0 %v78
  %212 = vmatprep.subr.mxu0 0.0
  %213 = vmatpush1.msra.mxu0 %v77
  %214 = vmatprep.subr.mxu0 0.0
  %215 = vmatpush1.msra.mxu0 %v76
  %216 = vmatprep.subr.mxu0 0.0
  %217 = vmatpush1.msra.mxu0 %v75
  %218 = vmatprep.subr.mxu0 0.0
  %219 = vmatpush1.msra.mxu0 %v74
  %220 = vmatprep.subr.mxu0 0.0
  %221 = vmatpush1.msra.mxu0 %v73
  %222 = vmatprep.subr.mxu0 0.0
  %223 = vmatpush1.msra.mxu0 %v72
  %224 = vmatprep.subr.mxu0 0.0
  %225 = vmatpush1.msra.mxu0 %v71
  %226 = vmatprep.subr.mxu0 0.0
  %227 = vmatpush1.msra.mxu0 %v70
  %228 = vmatprep.subr.mxu0 0.0
  %229 = vmatpush1.msra.mxu0 %v69
  %230 = vmatprep.subr.mxu0 0.0
  %231 = vmatpush2.msra.mxu0 %v100
  %232 = vmatprep.subr.mxu0 0.0
  %233 = vmatpush2.msra.mxu0 %v99
  %234 = vmatprep.subr.mxu0 0.0
  %235 = vmatpush2.msra.mxu0 %v98
  %236 = vmatprep.subr.mxu0 0.0
  %237 = vmatpush2.msra.mxu0 %v97
  %238 = vmatprep.subr.mxu0 0.0
  %239 = vmatpush2.msra.mxu0 %v96
  %240 = vmatprep.subr.mxu0 0.0
  %241 = vmatpush2.msra.mxu0 %v95
  %242 = vmatprep.subr.mxu0 0.0
  %243 = vmatpush2.msra.mxu0 %v94
  %244 = vmatprep.subr.mxu0 0.0
  %245 = vmatpush2.msra.mxu0 %v93
  %246 = vmatprep.subr.mxu0 0.0
  %247 = vmatpush2.msra.mxu0 %v92
  %248 = vmatprep.subr.mxu0 0.0
  %249 = vmatpush2.msra.mxu0 %v91
  %250 = vmatprep.subr.mxu0 0.0
  %251 = vmatpush2.msra.mxu0 %v90
  %252 = vmatprep.subr.mxu0 0.0
  %253 = vmatpush2.msra.mxu0 %v89
  %254 = vmatprep.subr.mxu0 0.0
  %255 = vmatpush2.msra.mxu0 %v88
  %256 = vmatprep.subr.mxu0 0.0
  %257 = vmatpush2.msra.mxu0 %v87
  %258 = vmatprep.subr.mxu0 0.0
  %259 = vmatpush2.msra.mxu0 %v86
  %260 = vmatprep.subr.mxu0 0.0
  %261 = vmatpush2.msra.mxu0 %v85
  %262 = vmatprep.mubr.f32.mxu0 %v20
  %263 = vmatmul.mubr.f32.gmra.mxu0 %v19
  %v264 = vpop.f32.mrf.mxu0
  %v265 = vadd.f32 %v175, %v264
  %v266 = vpop.f32.mrf.mxu0
  %267 = vmatprep.mubr.f32.mxu0 %v24
  %268 = vmatmul.mubr.f32.gmra.mxu0 %v23
  %v269 = vpop.f32.mrf.mxu0
  %v270 = vadd.f32 %v180, %v269
  %v271 = vpop.f32.mrf.mxu0
  %272 = vmatprep.mubr.f32.mxu0 %v28
  %273 = vmatmul.mubr.f32.gmra.mxu0 %v27
  %v274 = vpop.f32.mrf.mxu0
  %v275 = vadd.f32 %v185, %v274
  %v276 = vpop.f32.mrf.mxu0
  %277 = vmatprep.mubr.f32.mxu0 %v32
  %278 = vmatmul.mubr.f32.gmra.mxu0 %v31
  %v279 = vpop.f32.mrf.mxu0
  %v280 = vadd.f32 %v190, %v279
  %v281 = vpop.f32.mrf.mxu0
  %282 = vmatprep.mubr.f32.mxu0 %v36
  %283 = vmatmul.mubr.f32.gmra.mxu0 %v35
  %v284 = vpop.f32.mrf.mxu0
  %v285 = vadd.f32 %v195, %v284
  %v286 = vpop.f32.mrf.mxu0
  %287 = vdwg.mxu0
  %v288 = vmul.f32 %v265, %v265
  %v289 = vmul.f32 %v270, %v270
  %v290 = vmul.f32 %v275, %v275
  %v291 = vmul.f32 %v280, %v280
  %v292 = vmul.f32 %v285, %v285
  %v293 = vmul.f32 %v265, %v288
  %v294 = vmul.f32 %v270, %v289
  %v295 = vmul.f32 %v275, %v290
  %v296 = vmul.f32 %v280, %v291
  %v297 = vmul.f32 %v285, %v292
  %v298 = vmul.f32 %v293, 0.044715
  %v299 = vmul.f32 %v294, 0.044715
  %v300 = vmul.f32 %v295, 0.044715
  %v301 = vmul.f32 %v296, 0.044715
  %v302 = vmul.f32 %v297, 0.044715
  %v303 = vadd.f32 %v265, %v298
  %v304 = vadd.f32 %v270, %v299
  %v305 = vadd.f32 %v275, %v300
  %v306 = vadd.f32 %v280, %v301
  %v307 = vadd.f32 %v285, %v302
  %v308 = vmul.f32 %v303, 0.7978846
  %v309 = vmul.f32 %v304, 0.7978846
  %v310 = vmul.f32 %v305, 0.7978846
  %v311 = vmul.f32 %v306, 0.7978846
  %v312 = vmul.f32 %v307, 0.7978846
  %v313 = vtanh.pop %v308
  %v314 = vtanh.pop %v309
  %v315 = vtanh.pop %v310
  %v316 = vtanh.pop %v311
  %v317 = vtanh.pop %v312
  %v318 = vadd.f32 %v313, 1.0
  %v319 = vadd.f32 %v314, 1.0
  %v320 = vadd.f32 %v315, 1.0
  %v321 = vadd.f32 %v316, 1.0
  %v322 = vadd.f32 %v317, 1.0
  %v323 = vmul.f32 %v318, 0.5
  %v324 = vmul.f32 %v319, 0.5
  %v325 = vmul.f32 %v320, 0.5
  %v326 = vmul.f32 %v321, 0.5
  %v327 = vmul.f32 %v322, 0.5
  %v328 = vmul.f32 %v265, %v323
  %v329 = vmul.f32 %v270, %v324
  %v330 = vmul.f32 %v275, %v325
  %v331 = vmul.f32 %v280, %v326
  %v332 = vmul.f32 %v285, %v327
  %v333 = vld [vmem:[%s0] sm:$0xff]
  %v334 = vld [vmem:[%s0 + $0x8] sm:$0xff]
  %v335 = vld [vmem:[%s0 + $0x10] sm:$0xff]
  %v336 = vld [vmem:[%s0 + $0x18] sm:$0xff]
  %v337 = vld [vmem:[%s0 + $0x20] sm:$0x3f]
  %v338 = vadd.f32 %v333, %v328
  %v339 = vadd.f32 %v334, %v329
  %v340 = vadd.f32 %v335, %v330
  %v341 = vadd.f32 %v336, %v331
  %v342 = vadd.f32 %v337, %v332
  %vm343 = vcmask 261120
  %344 = vst.msk [vmem:[%s4] sm:$0xff] %vm343, %v338
  %345 = vst.msk [vmem:[%s4 + $0x8] sm:$0xff] %vm343, %v339
  %346 = vst.msk [vmem:[%s4 + $0x10] sm:$0xff] %vm343, %v340
  %347 = vst.msk [vmem:[%s4 + $0x18] sm:$0xff] %vm343, %v341
  %vm348 = vcmask 259072
  %349 = vst.msk [vmem:[%s4 + $0x20] sm:$0x3f] %vm348, %v342
  // Predicated region
  $region18: #{hubert_ft_forward.12} parent=0 // pred_check
    _
  $region19: #{hubert_ft_forward.12} parent=0 // pred_check_branch
    %351 = sbr.rel (0) target = $region21
  $region20: #{hubert_ft_forward.12} parent=0 // pred_region
    _
  $region21: #{hubert_ft_forward.12} parent=0 // pred_fallthru
    _
  // Predicated region
  $region22: #{hubert_ft_forward.12} parent=0 // pred_check
    _
  $region23: #{hubert_ft_forward.12} parent=0 // pred_check_branch
    %353 = sbr.rel (0) target = $region25
  $region24: #{hubert_ft_forward.12} parent=0 // pred_region
    _
  $region25: #{hubert_ft_forward.12} parent=0 // pred_fallthru
    _

// kernel: hubert_ft_forward.13
$region0: #{hubert_ft_forward.13}
  #allocation0 [shape = 'u32[]', space=smem, size = 0x4, offset = 0x4, fixed_abs, tag = 'smem constant byte address 0x4 - core index']
  #allocation1 [shape = 'u32[144,128]{1,0:T(1,128)}', space=vmem, size = 0x12000, scoped, tag = 'internal scratch']
  %s0 = inlined_call_operand.vmem [shape: f32[2,19,32], index: 0, kind: input, shape index: {}]
  %s1 = inlined_call_operand.vmem [shape: f32[1,32], index: 1, kind: input, shape index: {}]
  %s2 = inlined_call_operand.vmem [shape: f32[1,32], index: 2, kind: input, shape index: {}]
  %s3 = inlined_call_operand.vmem [shape: f32[32,96], index: 3, kind: input, shape index: {}]
  %s4 = inlined_call_operand.vmem [shape: f32[1,96], index: 4, kind: input, shape index: {}]
  %s5 = inlined_call_operand.vmem [shape: f32[32,32], index: 5, kind: input, shape index: {}]
  %s6 = inlined_call_operand.vmem [shape: f32[1,32], index: 6, kind: input, shape index: {}]
  %s7 = inlined_call_operand.vmem [shape: f32[1,32], index: 7, kind: input, shape index: {}]
  %s8 = inlined_call_operand.vmem [shape: f32[1,32], index: 8, kind: input, shape index: {}]
  %s9 = inlined_call_operand.vmem [shape: f32[32,64], index: 9, kind: input, shape index: {}]
  %s10 = inlined_call_operand.vmem [shape: f32[1,64], index: 10, kind: input, shape index: {}]
  %s11 = inlined_call_operand.vmem [shape: f32[64,32], index: 11, kind: input, shape index: {}]
  %s12 = inlined_call_operand.vmem [shape: f32[1,32], index: 12, kind: input, shape index: {}]
  %s13 = inlined_call_operand.vmem [shape: f32[2,19,32], index: 13, kind: output, shape index: {}]
  %s14 = sld [smem:[#allocation0]]
  $region85: #{hubert_ft_forward.13} parent=0
    _
  %s16 = ssub.s32 1, %s14
  %s17 = scalar_select 0, %s16, %s14
  loop: start=0, step=1, limit=4
  $region2: #{hubert_ft_forward.13} parent=0 // loop_pre_header
    _
  $region3: #{hubert_ft_forward.13} parent=0 // loop_header
    %s19 = sphi 0, %s23
    %p20 = scmp.ge.s32.totalorder %s19, 4
    %s29 = sphi 0, %s31
    %s32 = sphi 0, %s29
    %s33 = sphi 0, %s32
    %s49 = sphi 0, %s33
    %s53 = sphi 0, %s53
    %s55 = sphi 0, %s53
    %s56 = sphi 0, %s55
    %s70 = sphi 0, %s56
    %s74 = sphi 0, %s74
    %s76 = sphi 0, %s74
    %s77 = sphi 0, %s76
    %s91 = sphi 0, %s77
    %s95 = sphi 0, %s95
    %s97 = sphi 0, %s95
    %s98 = sphi 0, %s97
    %s112 = sphi 0, %s98
    %s116 = sphi 0, %s116
    %s118 = sphi 0, %s116
    %s119 = sphi 0, %s118
    %s133 = sphi 0, %s119
    %s137 = sphi 0, %s137
    %s139 = sphi 0, %s137
    %s140 = sphi 0, %s139
    %s154 = sphi 0, %s140
    %s158 = sphi 0, %s158
    %s160 = sphi 0, %s158
    %s161 = sphi 0, %s160
    %s175 = sphi 0, %s161
    %s179 = sphi 0, %s179
    %s181 = sphi 0, %s179
    %s182 = sphi 0, %s181
    %s196 = sphi 0, %s182
    %s200 = sphi 0, %s200
    %s202 = sphi 0, %s200
    %s203 = sphi 0, %s202
    %s217 = sphi 0, %s203
    %s221 = sphi 0, %s221
    %s223 = sphi 0, %s221
    %s224 = sphi 0, %s223
    %s238 = sphi 0, %s224
    %s242 = sphi 0, %s242
    %s244 = sphi 0, %s242
    %s245 = sphi 0, %s244
    %s259 = sphi 0, %s245
    %s263 = sphi 0, %s263
    %s265 = sphi 0, %s263
    %s266 = sphi 0, %s265
    %s280 = sphi 0, %s266
    %s284 = sphi 0, %s284
    %s286 = sphi 0, %s284
    %s287 = sphi 0, %s286
    %s301 = sphi 0, %s287
    %s307 = sphi 0, %s309
    %s310 = sphi 0, %s307
    %s311 = sphi 0, %s310
    %s327 = sphi 0, %s311
  $region4: #{hubert_ft_forward.13} parent=0 // loop_header_branch
    %22 = sbr.rel (%p20) target = $region8
  $region5: #{hubert_ft_forward.13} parent=0 // loop_body
    %s24 = ssub.s32 %s19, 1
    %s25 = ssub.s32 %s19, 2
    %s26 = sadd.s32 %s19, 1
    %s27 = ssub.s32 %s19, %s26
    %p28 = scmp.eq.s32.totalorder %s27, 0
    %s30 = sadd.s32 %s29, 1
    %s31 = scalar_select %p28, %s29, %s30
    %p34 = pneg %p28
    %p35 = scmp.eq.s32.totalorder %s19, 1
    %p36 = por %p34, %p35
    %p37 = scmp.ne.s32.totalorder %s29, %s32
    %p38 = scmp.eq.s32.totalorder %s19, 0
    %p39 = por %p37, %p38
    %p40 = scmp.ne.s32.totalorder %s29, %s32
    %p41 = scmp.eq.s32.totalorder %s24, 1
    %p42 = por %p40, %p41
    %p43 = scmp.ne.s32.totalorder %s32, %s33
    %p44 = scmp.eq.s32.totalorder %s24, 0
    %p45 = por %p43, %p44
    %p46 = scmp.ne.s32.totalorder %s32, %s33
    %p47 = scmp.eq.s32.totalorder %s25, 1
    %p48 = por %p46, %p47
    %p50 = scmp.ne.s32.totalorder %s33, %s49
    %p51 = scmp.eq.s32.totalorder %s25, 0
    %p52 = por %p50, %p51
    %s54 = sadd.s32 %s53, 1
    %p57 = scmp.eq.s32.totalorder %s19, 1
    %p58 = scmp.ne.s32.totalorder %s53, %s55
    %p59 = scmp.eq.s32.totalorder %s19, 0
    %p60 = por %p58, %p59
    %p61 = scmp.ne.s32.totalorder %s53, %s55
    %p62 = scmp.eq.s32.totalorder %s24, 1
    %p63 = por %p61, %p62
    %p64 = scmp.ne.s32.totalorder %s55, %s56
    %p65 = scmp.eq.s32.totalorder %s24, 0
    %p66 = por %p64, %p65
    %p67 = scmp.ne.s32.totalorder %s55, %s56
    %p68 = scmp.eq.s32.totalorder %s25, 1
    %p69 = por %p67, %p68
    %p71 = scmp.ne.s32.totalorder %s56, %s70
    %p72 = scmp.eq.s32.totalorder %s25, 0
    %p73 = por %p71, %p72
    %s75 = sadd.s32 %s74, 1
    %p78 = scmp.eq.s32.totalorder %s19, 1
    %p79 = scmp.ne.s32.totalorder %s74, %s76
    %p80 = scmp.eq.s32.totalorder %s19, 0
    %p81 = por %p79, %p80
    %p82 = scmp.ne.s32.totalorder %s74, %s76
    %p83 = scmp.eq.s32.totalorder %s24, 1
    %p84 = por %p82, %p83
    %p85 = scmp.ne.s32.totalorder %s76, %s77
    %p86 = scmp.eq.s32.totalorder %s24, 0
    %p87 = por %p85, %p86
    %p88 = scmp.ne.s32.totalorder %s76, %s77
    %p89 = scmp.eq.s32.totalorder %s25, 1
    %p90 = por %p88, %p89
    %p92 = scmp.ne.s32.totalorder %s77, %s91
    %p93 = scmp.eq.s32.totalorder %s25, 0
    %p94 = por %p92, %p93
    %s96 = sadd.s32 %s95, 1
    %p99 = scmp.eq.s32.totalorder %s19, 1
    %p100 = scmp.ne.s32.totalorder %s95, %s97
    %p101 = scmp.eq.s32.totalorder %s19, 0
    %p102 = por %p100, %p101
    %p103 = scmp.ne.s32.totalorder %s95, %s97
    %p104 = scmp.eq.s32.totalorder %s24, 1
    %p105 = por %p103, %p104
    %p106 = scmp.ne.s32.totalorder %s97, %s98
    %p107 = scmp.eq.s32.totalorder %s24, 0
    %p108 = por %p106, %p107
    %p109 = scmp.ne.s32.totalorder %s97, %s98
    %p110 = scmp.eq.s32.totalorder %s25, 1
    %p111 = por %p109, %p110
    %p113 = scmp.ne.s32.totalorder %s98, %s112
    %p114 = scmp.eq.s32.totalorder %s25, 0
    %p115 = por %p113, %p114
    %s117 = sadd.s32 %s116, 1
    %p120 = scmp.eq.s32.totalorder %s19, 1
    %p121 = scmp.ne.s32.totalorder %s116, %s118
    %p122 = scmp.eq.s32.totalorder %s19, 0
    %p123 = por %p121, %p122
    %p124 = scmp.ne.s32.totalorder %s116, %s118
    %p125 = scmp.eq.s32.totalorder %s24, 1
    %p126 = por %p124, %p125
    %p127 = scmp.ne.s32.totalorder %s118, %s119
    %p128 = scmp.eq.s32.totalorder %s24, 0
    %p129 = por %p127, %p128
    %p130 = scmp.ne.s32.totalorder %s118, %s119
    %p131 = scmp.eq.s32.totalorder %s25, 1
    %p132 = por %p130, %p131
    %p134 = scmp.ne.s32.totalorder %s119, %s133
    %p135 = scmp.eq.s32.totalorder %s25, 0
    %p136 = por %p134, %p135
    %s138 = sadd.s32 %s137, 1
    %p141 = scmp.eq.s32.totalorder %s19, 1
    %p142 = scmp.ne.s32.totalorder %s137, %s139
    %p143 = scmp.eq.s32.totalorder %s19, 0
    %p144 = por %p142, %p143
    %p145 = scmp.ne.s32.totalorder %s137, %s139
    %p146 = scmp.eq.s32.totalorder %s24, 1
    %p147 = por %p145, %p146
    %p148 = scmp.ne.s32.totalorder %s139, %s140
    %p149 = scmp.eq.s32.totalorder %s24, 0
    %p150 = por %p148, %p149
    %p151 = scmp.ne.s32.totalorder %s139, %s140
    %p152 = scmp.eq.s32.totalorder %s25, 1
    %p153 = por %p151, %p152
    %p155 = scmp.ne.s32.totalorder %s140, %s154
    %p156 = scmp.eq.s32.totalorder %s25, 0
    %p157 = por %p155, %p156
    %s159 = sadd.s32 %s158, 1
    %p162 = scmp.eq.s32.totalorder %s19, 1
    %p163 = scmp.ne.s32.totalorder %s158, %s160
    %p164 = scmp.eq.s32.totalorder %s19, 0
    %p165 = por %p163, %p164
    %p166 = scmp.ne.s32.totalorder %s158, %s160
    %p167 = scmp.eq.s32.totalorder %s24, 1
    %p168 = por %p166, %p167
    %p169 = scmp.ne.s32.totalorder %s160, %s161
    %p170 = scmp.eq.s32.totalorder %s24, 0
    %p171 = por %p169, %p170
    %p172 = scmp.ne.s32.totalorder %s160, %s161
    %p173 = scmp.eq.s32.totalorder %s25, 1
    %p174 = por %p172, %p173
    %p176 = scmp.ne.s32.totalorder %s161, %s175
    %p177 = scmp.eq.s32.totalorder %s25, 0
    %p178 = por %p176, %p177
    %s180 = sadd.s32 %s179, 1
    %p183 = scmp.eq.s32.totalorder %s19, 1
    %p184 = scmp.ne.s32.totalorder %s179, %s181
    %p185 = scmp.eq.s32.totalorder %s19, 0
    %p186 = por %p184, %p185
    %p187 = scmp.ne.s32.totalorder %s179, %s181
    %p188 = scmp.eq.s32.totalorder %s24, 1
    %p189 = por %p187, %p188
    %p190 = scmp.ne.s32.totalorder %s181, %s182
    %p191 = scmp.eq.s32.totalorder %s24, 0
    %p192 = por %p190, %p191
    %p193 = scmp.ne.s32.totalorder %s181, %s182
    %p194 = scmp.eq.s32.totalorder %s25, 1
    %p195 = por %p193, %p194
    %p197 = scmp.ne.s32.totalorder %s182, %s196
    %p198 = scmp.eq.s32.totalorder %s25, 0
    %p199 = por %p197, %p198
    %s201 = sadd.s32 %s200, 1
    %p204 = scmp.eq.s32.totalorder %s19, 1
    %p205 = scmp.ne.s32.totalorder %s200, %s202
    %p206 = scmp.eq.s32.totalorder %s19, 0
    %p207 = por %p205, %p206
    %p208 = scmp.ne.s32.totalorder %s200, %s202
    %p209 = scmp.eq.s32.totalorder %s24, 1
    %p210 = por %p208, %p209
    %p211 = scmp.ne.s32.totalorder %s202, %s203
    %p212 = scmp.eq.s32.totalorder %s24, 0
    %p213 = por %p211, %p212
    %p214 = scmp.ne.s32.totalorder %s202, %s203
    %p215 = scmp.eq.s32.totalorder %s25, 1
    %p216 = por %p214, %p215
    %p218 = scmp.ne.s32.totalorder %s203, %s217
    %p219 = scmp.eq.s32.totalorder %s25, 0
    %p220 = por %p218, %p219
    %s222 = sadd.s32 %s221, 1
    %p225 = scmp.eq.s32.totalorder %s19, 1
    %p226 = scmp.ne.s32.totalorder %s221, %s223
    %p227 = scmp.eq.s32.totalorder %s19, 0
    %p228 = por %p226, %p227
    %p229 = scmp.ne.s32.totalorder %s221, %s223
    %p230 = scmp.eq.s32.totalorder %s24, 1
    %p231 = por %p229, %p230
    %p232 = scmp.ne.s32.totalorder %s223, %s224
    %p233 = scmp.eq.s32.totalorder %s24, 0
    %p234 = por %p232, %p233
    %p235 = scmp.ne.s32.totalorder %s223, %s224
    %p236 = scmp.eq.s32.totalorder %s25, 1
    %p237 = por %p235, %p236
    %p239 = scmp.ne.s32.totalorder %s224, %s238
    %p240 = scmp.eq.s32.totalorder %s25, 0
    %p241 = por %p239, %p240
    %s243 = sadd.s32 %s242, 1
    %p246 = scmp.eq.s32.totalorder %s19, 1
    %p247 = scmp.ne.s32.totalorder %s242, %s244
    %p248 = scmp.eq.s32.totalorder %s19, 0
    %p249 = por %p247, %p248
    %p250 = scmp.ne.s32.totalorder %s242, %s244
    %p251 = scmp.eq.s32.totalorder %s24, 1
    %p252 = por %p250, %p251
    %p253 = scmp.ne.s32.totalorder %s244, %s245
    %p254 = scmp.eq.s32.totalorder %s24, 0
    %p255 = por %p253, %p254
    %p256 = scmp.ne.s32.totalorder %s244, %s245
    %p257 = scmp.eq.s32.totalorder %s25, 1
    %p258 = por %p256, %p257
    %p260 = scmp.ne.s32.totalorder %s245, %s259
    %p261 = scmp.eq.s32.totalorder %s25, 0
    %p262 = por %p260, %p261
    %s264 = sadd.s32 %s263, 1
    %p267 = scmp.eq.s32.totalorder %s19, 1
    %p268 = scmp.ne.s32.totalorder %s263, %s265
    %p269 = scmp.eq.s32.totalorder %s19, 0
    %p270 = por %p268, %p269
    %p271 = scmp.ne.s32.totalorder %s263, %s265
    %p272 = scmp.eq.s32.totalorder %s24, 1
    %p273 = por %p271, %p272
    %p274 = scmp.ne.s32.totalorder %s265, %s266
    %p275 = scmp.eq.s32.totalorder %s24, 0
    %p276 = por %p274, %p275
    %p277 = scmp.ne.s32.totalorder %s265, %s266
    %p278 = scmp.eq.s32.totalorder %s25, 1
    %p279 = por %p277, %p278
    %p281 = scmp.ne.s32.totalorder %s266, %s280
    %p282 = scmp.eq.s32.totalorder %s25, 0
    %p283 = por %p281, %p282
    %s285 = sadd.s32 %s284, 1
    %p288 = scmp.eq.s32.totalorder %s19, 1
    %p289 = scmp.ne.s32.totalorder %s284, %s286
    %p290 = scmp.eq.s32.totalorder %s19, 0
    %p291 = por %p289, %p290
    %p292 = scmp.ne.s32.totalorder %s284, %s286
    %p293 = scmp.eq.s32.totalorder %s24, 1
    %p294 = por %p292, %p293
    %p295 = scmp.ne.s32.totalorder %s286, %s287
    %p296 = scmp.eq.s32.totalorder %s24, 0
    %p297 = por %p295, %p296
    %p298 = scmp.ne.s32.totalorder %s286, %s287
    %p299 = scmp.eq.s32.totalorder %s25, 1
    %p300 = por %p298, %p299
    %p302 = scmp.ne.s32.totalorder %s287, %s301
    %p303 = scmp.eq.s32.totalorder %s25, 0
    %p304 = por %p302, %p303
    %s305 = ssub.s32 %s19, %s26
    %p306 = scmp.eq.s32.totalorder %s305, 0
    %s308 = sadd.s32 %s307, 1
    %s309 = scalar_select %p306, %s307, %s308
    %p312 = pneg %p306
    %p313 = scmp.eq.s32.totalorder %s19, 1
    %p314 = por %p312, %p313
    %p315 = scmp.ne.s32.totalorder %s307, %s310
    %p316 = scmp.eq.s32.totalorder %s19, 0
    %p317 = por %p315, %p316
    %p318 = scmp.ne.s32.totalorder %s307, %s310
    %p319 = scmp.eq.s32.totalorder %s24, 1
    %p320 = por %p318, %p319
    %p321 = scmp.ne.s32.totalorder %s310, %s311
    %p322 = scmp.eq.s32.totalorder %s24, 0
    %p323 = por %p321, %p322
    %p324 = scmp.ne.s32.totalorder %s310, %s311
    %p325 = scmp.eq.s32.totalorder %s25, 1
    %p326 = por %p324, %p325
    %p328 = scmp.ne.s32.totalorder %s311, %s327
    %p329 = scmp.eq.s32.totalorder %s25, 0
    %p330 = por %p328, %p329
    %p331 = scmp.le.s32.totalorder 1, %s19
    %p332 = scmp.lt.s32.totalorder %s19, 3
    %p333 = pnand %p331, %p332
    %p334 = pneg %p333
    // Predicated region
    $region9: #{hubert_ft_forward.13} parent=5 // pred_check
      _
    $region10: #{hubert_ft_forward.13} parent=5 // pred_check_branch
      %336 = sbr.rel (%p333) target = $region12
    $region11: #{hubert_ft_forward.13} parent=5 // pred_region
      %s337 = ssub.s32 %s19, 1
      // Predicated region
      $region13: #{hubert_ft_forward.13} parent=11 // pred_check
        %p338 = pneg %p66
      $region14: #{hubert_ft_forward.13} parent=11 // pred_check_branch
        %340 = sbr.rel (%p338) target = $region16
      $region15: #{hubert_ft_forward.13} parent=11 // pred_region
        _
      $region16: #{hubert_ft_forward.13} parent=11 // pred_fallthru
        _
      // Predicated region
      $region17: #{hubert_ft_forward.13} parent=11 // pred_check
        %p341 = pneg %p87
      $region18: #{hubert_ft_forward.13} parent=11 // pred_check_branch
        %343 = sbr.rel (%p341) target = $region20
      $region19: #{hubert_ft_forward.13} parent=11 // pred_region
        _
      $region20: #{hubert_ft_forward.13} parent=11 // pred_fallthru
        _
      // Predicated region
      $region21: #{hubert_ft_forward.13} parent=11 // pred_check
        %p344 = pneg %p108
      $region22: #{hubert_ft_forward.13} parent=11 // pred_check_branch
        %346 = sbr.rel (%p344) target = $region24
      $region23: #{hubert_ft_forward.13} parent=11 // pred_region
        _
      $region24: #{hubert_ft_forward.13} parent=11 // pred_fallthru
        _
      // Predicated region
      $region25: #{hubert_ft_forward.13} parent=11 // pred_check
        %p347 = pneg %p129
      $region26: #{hubert_ft_forward.13} parent=11 // pred_check_branch
        %349 = sbr.rel (%p347) target = $region28
      $region27: #{hubert_ft_forward.13} parent=11 // pred_region
        _
      $region28: #{hubert_ft_forward.13} parent=11 // pred_fallthru
        _
      // Predicated region
      $region29: #{hubert_ft_forward.13} parent=11 // pred_check
        %p350 = pneg %p150
      $region30: #{hubert_ft_forward.13} parent=11 // pred_check_branch
        %352 = sbr.rel (%p350) target = $region32
      $region31: #{hubert_ft_forward.13} parent=11 // pred_region
        _
      $region32: #{hubert_ft_forward.13} parent=11 // pred_fallthru
        _
      // Predicated region
      $region33: #{hubert_ft_forward.13} parent=11 // pred_check
        %p353 = pneg %p171
      $region34: #{hubert_ft_forward.13} parent=11 // pred_check_branch
        %355 = sbr.rel (%p353) target = $region36
      $region35: #{hubert_ft_forward.13} parent=11 // pred_region
        _
      $region36: #{hubert_ft_forward.13} parent=11 // pred_fallthru
        _
      // Predicated region
      $region37: #{hubert_ft_forward.13} parent=11 // pred_check
        %p356 = pneg %p192
      $region38: #{hubert_ft_forward.13} parent=11 // pred_check_branch
        %358 = sbr.rel (%p356) target = $region40
      $region39: #{hubert_ft_forward.13} parent=11 // pred_region
        _
      $region40: #{hubert_ft_forward.13} parent=11 // pred_fallthru
        _
      // Predicated region
      $region41: #{hubert_ft_forward.13} parent=11 // pred_check
        %p359 = pneg %p213
      $region42: #{hubert_ft_forward.13} parent=11 // pred_check_branch
        %361 = sbr.rel (%p359) target = $region44
      $region43: #{hubert_ft_forward.13} parent=11 // pred_region
        _
      $region44: #{hubert_ft_forward.13} parent=11 // pred_fallthru
        _
      // Predicated region
      $region45: #{hubert_ft_forward.13} parent=11 // pred_check
        %p362 = pneg %p234
      $region46: #{hubert_ft_forward.13} parent=11 // pred_check_branch
        %364 = sbr.rel (%p362) target = $region48
      $region47: #{hubert_ft_forward.13} parent=11 // pred_region
        _
      $region48: #{hubert_ft_forward.13} parent=11 // pred_fallthru
        _
      // Predicated region
      $region49: #{hubert_ft_forward.13} parent=11 // pred_check
        %p365 = pneg %p255
      $region50: #{hubert_ft_forward.13} parent=11 // pred_check_branch
        %367 = sbr.rel (%p365) target = $region52
      $region51: #{hubert_ft_forward.13} parent=11 // pred_region
        _
      $region52: #{hubert_ft_forward.13} parent=11 // pred_fallthru
        _
      // Predicated region
      $region53: #{hubert_ft_forward.13} parent=11 // pred_check
        %p368 = pneg %p276
      $region54: #{hubert_ft_forward.13} parent=11 // pred_check_branch
        %370 = sbr.rel (%p368) target = $region56
      $region55: #{hubert_ft_forward.13} parent=11 // pred_region
        _
      $region56: #{hubert_ft_forward.13} parent=11 // pred_fallthru
        _
      // Predicated region
      $region57: #{hubert_ft_forward.13} parent=11 // pred_check
        %p371 = pneg %p297
      $region58: #{hubert_ft_forward.13} parent=11 // pred_check_branch
        %373 = sbr.rel (%p371) target = $region60
      $region59: #{hubert_ft_forward.13} parent=11 // pred_region
        _
      $region60: #{hubert_ft_forward.13} parent=11 // pred_fallthru
        _
    $region12: #{hubert_ft_forward.13} parent=5 // pred_fallthru
      _
    %p374 = scmp.lt.s32.totalorder %s19, 2
    // Predicated region
    $region61: #{hubert_ft_forward.13} parent=5 // pred_check
      %p375 = pneg %p374
    $region62: #{hubert_ft_forward.13} parent=5 // pred_check_branch
      %377 = sbr.rel (%p375) target = $region64
    $region63: #{hubert_ft_forward.13} parent=5 // pred_region
      // Predicated region
      $region65: #{hubert_ft_forward.13} parent=63 // pred_check
        %p378 = pneg %p39
      $region66: #{hubert_ft_forward.13} parent=63 // pred_check_branch
        %380 = sbr.rel (%p378) target = $region68
      $region67: #{hubert_ft_forward.13} parent=63 // pred_region
        %p381 = scmp.lt.s32.totalorder %s19, 1
        %s382 = scalar_select %p381, %s19, 1
        %s383 = smul.addr %s382, 3
        %s384 = smul.addr %s383, 8
        %s385 = scalar_lea.vmem %s0, %s384
      $region68: #{hubert_ft_forward.13} parent=63 // pred_fallthru
        _
    $region64: #{hubert_ft_forward.13} parent=5 // pred_fallthru
      _
    %p386 = scmp.le.s32.totalorder 1, %s19
    %p387 = scmp.lt.s32.totalorder %s19, 3
    %p388 = pnand %p386, %p387
    %p389 = pneg %p388
    // Predicated region
    $region69: #{hubert_ft_forward.13} parent=5 // pred_check
      _
    $region70: #{hubert_ft_forward.13} parent=5 // pred_check_branch
      %391 = sbr.rel (%p388) target = $region72
    $region71: #{hubert_ft_forward.13} parent=5 // pred_region
      %s392 = ssub.s32 %s19, 1
      %p393 = scmp.lt.s32.totalorder %s24, 1
      %s394 = scalar_select %p393, %s24, 1
      %s395 = smul.addr %s394, 3
      %s396 = smul.addr %s395, 8
      %s397 = scalar_lea.vmem %s0, %s396
      %p398 = pneg %p45
      %p399 = pneg %p42
      %p400 = pneg %p66
      %p401 = pneg %p63
      %p402 = pneg %p87
      %p403 = pneg %p84
      %p404 = pneg %p108
      %p405 = pneg %p105
      %p406 = pneg %p129
      %p407 = pneg %p126
      %p408 = pneg %p150
      %p409 = pneg %p147
      %p410 = pneg %p171
      %p411 = pneg %p168
      %p412 = pneg %p192
      %p413 = pneg %p189
      %p414 = pneg %p213
      %p415 = pneg %p210
      %p416 = pneg %p234
      %p417 = pneg %p231
      %p418 = pneg %p255
      %p419 = pneg %p252
      %p420 = pneg %p276
      %p421 = pneg %p273
      %p422 = pneg %p297
      %p423 = pneg %p294
      %p424 = pneg %p323
      %p425 = pneg %p320
      %p426 = scmp.lt.s32.totalorder %s24, 1
      %s427 = scalar_select %p426, %s24, 1
      %s428 = smul.addr %s427, 3
      %s429 = smul.addr %s428, 8
      %s430 = scalar_lea.vmem %s13, %s429
      %p431 = scmp.lt.s32.totalorder %s24, 1
      %s432 = scalar_select %p431, %s24, 1
      %s433 = smul.addr %s432, 3
      %s434 = smul.addr %s433, 8
      %s435 = scalar_lea.vmem %s0, %s434
      %p436 = scmp.lt.s32.totalorder %s24, 1
      %s437 = scalar_select %p436, %s24, 1
      %s438 = smul.addr %s437, 3
      %s439 = smul.addr %s438, 8
      %s440 = scalar_lea.vmem %s13, %s439
      %v441 = vld [vmem:[%s435] sm:$0xff]
      %v442 = vld [vmem:[%s435 + $0x8] sm:$0xff]
      %v443 = vld [vmem:[%s435 + $0x10] sm:$0x7]
      %v444 = vld [vmem:[%s1] sm:$0x1]
      %v445 = vld [vmem:[%s2] sm:$0x1]
      %vm446 = vcmask 261120
      %v447 = vsel %vm446, %v441, 0.0
      %448 = vadd.xlane.f32.xlu0 %v447
      %v449 = vpop.xlane.xlu0 %448
      %v450 = vsel %vm446, %v442, 0.0
      %451 = vadd.xlane.f32.xlu0 %v450
      %v452 = vpop.xlane.xlu0 %451
      %vm453 = vcmask 256000
      %v454 = vsel %vm453, %v443, 0.0
      %455 = vadd.xlane.f32.xlu0 %v454
      %v456 = vpop.xlane.xlu0 %455
      %v457 = vrcp.pop 32.0
      %v458 = vmul.f32 %v449, %v457
      %v459 = vmul.f32 %v452, %v457
      %v460 = vmul.f32 %v456, %v457
      %v461 = vsub.f32 %v441, %v458
      %v462 = vsub.f32 %v442, %v459
      %v463 = vsub.f32 %v443, %v460
      %v464 = vmul.f32 %v461, %v461
      %v465 = vmul.f32 %v462, %v462
      %v466 = vmul.f32 %v463, %v463
      %v467 = vsel %vm446, %v464, 0.0
      %468 = vadd.xlane.f32.xlu0 %v467
      %v469 = vpop.xlane.xlu0 %468
      %v470 = vsel %vm446, %v465, 0.0
      %471 = vadd.xlane.f32.xlu0 %v470
      %v472 = vpop.xlane.xlu0 %471
      %v473 = vsel %vm453, %v466, 0.0
      %474 = vadd.xlane.f32.xlu0 %v473
      %v475 = vpop.xlane.xlu0 %474
      %v476 = vmul.f32 %v469, %v457
      %v477 = vmul.f32 %v472, %v457
      %v478 = vmul.f32 %v475, %v457
      %v479 = vadd.f32 %v476, 1e-05
      %v480 = vadd.f32 %v477, 1e-05
      %v481 = vadd.f32 %v478, 1e-05
      %v482 = vrsqrt.pop %v479
      %v483 = vrsqrt.pop %v480
      %v484 = vrsqrt.pop %v481
      %v485 = vmul.f32 %v461, %v482
      %v486 = vmul.f32 %v462, %v483
      %v487 = vmul.f32 %v463, %v484
      %v489 = vlaneseq
      %v490 = vshrl.u32 %v489, 7
      %v491 = vsub.s32 0, %v490
      %v492 = vrot.slane %v444, %v491
      %v494 = vmul.f32 %v485, %v492
      %v495 = vmul.f32 %v486, %v492
      %v496 = vmul.f32 %v487, %v492
      %v498 = vlaneseq
      %v499 = vshrl.u32 %v498, 7
      %v500 = vsub.s32 0, %v499
      %v501 = vrot.slane %v445, %v500
      %v503 = vadd.f32 %v494, %v501
      %v504 = vadd.f32 %v495, %v501
      %v505 = vadd.f32 %v496, %v501
      %v506 = vld [vmem:[%s3] sm:$0xff]
      %v507 = vld [vmem:[%s3 + $0x8] sm:$0xff]
      %v508 = vld [vmem:[%s3 + $0x10] sm:$0xff]
      %v509 = vld [vmem:[%s3 + $0x18] sm:$0xff]
      %v510 = vld [vmem:[%s4] sm:$0x1]
      %v512 = vlaneseq
      %v513 = vshrl.u32 %v512, 7
      %v514 = vsub.s32 0, %v513
      %v515 = vrot.slane %v510, %v514
      %v518 = vsel %vm446, %v503, 0
      %v521 = vsel %vm446, %v504, 0
      %v524 = vsel %vm446, %v505, 0
      %526 = vmatprep.subr.mxu0 0.0
      %527 = vmatpush1.msra.mxu0 0.0
      %528 = vmatprep.subr.mxu0 0.0
      %529 = vmatpush1.msra.mxu0 0.0
      %530 = vmatprep.subr.mxu0 0.0
      %531 = vmatpush1.msra.mxu0 0.0
      %532 = vmatprep.subr.mxu0 0.0
      %533 = vmatpush1.msra.mxu0 0.0
      %534 = vmatprep.subr.mxu0 0.0
      %535 = vmatpush1.msra.mxu0 0.0
      %536 = vmatprep.subr.mxu0 0.0
      %537 = vmatpush1.msra.mxu0 0.0
      %538 = vmatprep.subr.mxu0 0.0
      %539 = vmatpush1.msra.mxu0 0.0
      %540 = vmatprep.subr.mxu0 0.0
      %541 = vmatpush1.msra.mxu0 0.0
      %542 = vmatprep.subr.mxu0 0.0
      %543 = vmatpush1.msra.mxu0 0.0
      %544 = vmatprep.subr.mxu0 0.0
      %545 = vmatpush1.msra.mxu0 0.0
      %546 = vmatprep.subr.mxu0 0.0
      %547 = vmatpush1.msra.mxu0 0.0
      %548 = vmatprep.subr.mxu0 0.0
      %549 = vmatpush1.msra.mxu0 0.0
      %550 = vmatprep.subr.mxu0 0.0
      %551 = vmatpush1.msra.mxu0 %v509
      %552 = vmatprep.subr.mxu0 0.0
      %553 = vmatpush1.msra.mxu0 %v508
      %554 = vmatprep.subr.mxu0 0.0
      %555 = vmatpush1.msra.mxu0 %v507
      %556 = vmatprep.subr.mxu0 0.0
      %557 = vmatpush1.msra.mxu0 %v506
      %558 = vmatprep.subr.mxu0 0.0
      %559 = vmatpush2.msra.mxu0 0.0
      %560 = vmatprep.subr.mxu0 0.0
      %561 = vmatpush2.msra.mxu0 0.0
      %562 = vmatprep.subr.mxu0 0.0
      %563 = vmatpush2.msra.mxu0 0.0
      %564 = vmatprep.subr.mxu0 0.0
      %565 = vmatpush2.msra.mxu0 0.0
      %566 = vmatprep.subr.mxu0 0.0
      %567 = vmatpush2.msra.mxu0 0.0
      %568 = vmatprep.subr.mxu0 0.0
      %569 = vmatpush2.msra.mxu0 0.0
      %570 = vmatprep.subr.mxu0 0.0
      %571 = vmatpush2.msra.mxu0 0.0
      %572 = vmatprep.subr.mxu0 0.0
      %573 = vmatpush2.msra.mxu0 0.0
      %574 = vmatprep.subr.mxu0 0.0
      %575 = vmatpush2.msra.mxu0 0.0
      %576 = vmatprep.subr.mxu0 0.0
      %577 = vmatpush2.msra.mxu0 0.0
      %578 = vmatprep.subr.mxu0 0.0
      %579 = vmatpush2.msra.mxu0 0.0
      %580 = vmatprep.subr.mxu0 0.0
      %581 = vmatpush2.msra.mxu0 0.0
      %582 = vmatprep.subr.mxu0 0.0
      %583 = vmatpush2.msra.mxu0 0.0
      %584 = vmatprep.subr.mxu0 0.0
      %585 = vmatpush2.msra.mxu0 0.0
      %586 = vmatprep.subr.mxu0 0.0
      %587 = vmatpush2.msra.mxu0 0.0
      %588 = vmatprep.subr.mxu0 0.0
      %589 = vmatpush2.msra.mxu0 0.0
      %590 = vmatprep.mubr.f32.mxu0 0.0
      %591 = vmatmul.mubr.f32.gmra.mxu0 %v518
      %v592 = vpop.f32.mrf.mxu0
      %v593 = vadd.f32 %v515, %v592
      %v594 = vpop.f32.mrf.mxu0
      %595 = vmatprep.mubr.f32.mxu0 0.0
      %596 = vmatmul.mubr.f32.gmra.mxu0 %v521
      %v597 = vpop.f32.mrf.mxu0
      %v598 = vadd.f32 %v515, %v597
      %v599 = vpop.f32.mrf.mxu0
      %600 = vmatprep.mubr.f32.mxu0 0.0
      %601 = vmatmul.mubr.f32.gmra.mxu0 %v524
      %v602 = vpop.f32.mrf.mxu0
      %v603 = vadd.f32 %v515, %v602
      %v604 = vpop.f32.mrf.mxu0
      %605 = vdwg.mxu0
      %v606 = vmul.f32 %v593, 0.35355338
      %v607 = vmul.f32 %v598, 0.35355338
      %v608 = vmul.f32 %v603, 0.35355338
      %612 = vrot.lane.b32.xlu0 %v593, 96
      %v613 = vpop.permute.xlu0 %612
      %614 = vrot.lane.b32.xlu0 %v598, 96
      %v615 = vpop.permute.xlu0 %614
      %616 = vrot.lane.b32.xlu0 %v603, 96
      %v617 = vpop.permute.xlu0 %616
      %vm618 = vcmask 64512
      %v620 = vsel %vm618, %v606, 0
      %v623 = vsel %vm618, %v607, 0
      %v626 = vsel %vm618, %v608, 0
      %v628 = vsel %vm618, %v613, 0
      %v630 = vsel %vm618, %v615, 0
      %v632 = vsel %vm618, %v617, 0
      %634 = vmatprep.subr.mxu0 0.0
      %635 = vmatpush1.xpose.msra.mxu0 0.0
      %636 = vmatprep.subr.mxu0 0.0
      %637 = vmatpush1.xpose.msra.mxu0 0.0
      %638 = vmatprep.subr.mxu0 0.0
      %639 = vmatpush1.xpose.msra.mxu0 0.0
      %640 = vmatprep.subr.mxu0 0.0
      %641 = vmatpush1.xpose.msra.mxu0 0.0
      %642 = vmatprep.subr.mxu0 0.0
      %643 = vmatpush1.xpose.msra.mxu0 0.0
      %644 = vmatprep.subr.mxu0 0.0
      %645 = vmatpush1.xpose.msra.mxu0 0.0
      %646 = vmatprep.subr.mxu0 0.0
      %647 = vmatpush1.xpose.msra.mxu0 0.0
      %648 = vmatprep.subr.mxu0 0.0
      %649 = vmatpush1.xpose.msra.mxu0 0.0
      %650 = vmatprep.subr.mxu0 0.0
      %651 = vmatpush1.xpose.msra.mxu0 0.0
      %652 = vmatprep.subr.mxu0 0.0
      %653 = vmatpush1.xpose.msra.mxu0 0.0
      %654 = vmatprep.subr.mxu0 0.0
      %655 = vmatpush1.xpose.msra.mxu0 0.0
      %656 = vmatprep.subr.mxu0 0.0
      %657 = vmatpush1.xpose.msra.mxu0 0.0
      %658 = vmatprep.subr.mxu0 0.0
      %659 = vmatpush1.xpose.msra.mxu0 0.0
      %660 = vmatprep.subr.mxu0 0.0
      %661 = vmatpush1.xpose.msra.mxu0 %v632
      %662 = vmatprep.subr.mxu0 0.0
      %663 = vmatpush1.xpose.msra.mxu0 %v630
      %664 = vmatprep.subr.mxu0 0.0
      %665 = vmatpush1.xpose.msra.mxu0 %v628
      %666 = vmatprep.subr.mxu0 0.0
      %667 = vmatpush2.xpose.msra.mxu0 0.0
      %668 = vmatprep.subr.mxu0 0.0
      %669 = vmatpush2.xpose.msra.mxu0 0.0
      %670 = vmatprep.subr.mxu0 0.0
      %671 = vmatpush2.xpose.msra.mxu0 0.0
      %672 = vmatprep.subr.mxu0 0.0
      %673 = vmatpush2.xpose.msra.mxu0 0.0
      %674 = vmatprep.subr.mxu0 0.0
      %675 = vmatpush2.xpose.msra.mxu0 0.0
      %676 = vmatprep.subr.mxu0 0.0
      %677 = vmatpush2.xpose.msra.mxu0 0.0
      %678 = vmatprep.subr.mxu0 0.0
      %679 = vmatpush2.xpose.msra.mxu0 0.0
      %680 = vmatprep.subr.mxu0 0.0
      %681 = vmatpush2.xpose.msra.mxu0 0.0
      %682 = vmatprep.subr.mxu0 0.0
      %683 = vmatpush2.xpose.msra.mxu0 0.0
      %684 = vmatprep.subr.mxu0 0.0
      %685 = vmatpush2.xpose.msra.mxu0 0.0
      %686 = vmatprep.subr.mxu0 0.0
      %687 = vmatpush2.xpose.msra.mxu0 0.0
      %688 = vmatprep.subr.mxu0 0.0
      %689 = vmatpush2.xpose.msra.mxu0 0.0
      %690 = vmatprep.subr.mxu0 0.0
      %691 = vmatpush2.xpose.msra.mxu0 0.0
      %692 = vmatprep.subr.mxu0 0.0
      %693 = vmatpush2.xpose.msra.mxu0 0.0
      %694 = vmatprep.subr.mxu0 0.0
      %695 = vmatpush2.xpose.msra.mxu0 0.0
      %696 = vmatprep.subr.mxu0 0.0
      %697 = vmatpush2.xpose.msra.mxu0 0.0
      %698 = vmatprep.mubr.f32.mxu0 0.0
      %699 = vmatmul.mubr.f32.gmra.mxu0 %v620
      %v700 = vpop.f32.mrf.mxu0
      %v701 = vadd.f32 0.0, %v700
      %v702 = vpop.f32.mrf.mxu0
      %703 = vmatprep.mubr.f32.mxu0 0.0
      %704 = vmatmul.mubr.f32.gmra.mxu0 %v623
      %v705 = vpop.f32.mrf.mxu0
      %v706 = vadd.f32 0.0, %v705
      %v707 = vpop.f32.mrf.mxu0
      %708 = vmatprep.mubr.f32.mxu0 0.0
      %709 = vmatmul.mubr.f32.gmra.mxu0 %v626
      %v710 = vpop.f32.mrf.mxu0
      %v711 = vadd.f32 0.0, %v710
      %v712 = vpop.f32.mrf.mxu0
      %713 = vdwg.mxu0
      %vm714 = vcmask 154624
      %v715 = vsel %vm714, %v701, -inf
      %716 = vmax.xlane.f32.xlu0 %v715
      %v717 = vpop.xlane.xlu0 %716
      %v718 = vsel %vm714, %v706, -inf
      %719 = vmax.xlane.f32.xlu0 %v718
      %v720 = vpop.xlane.xlu0 %719
      %vm721 = vcmask 149504
      %v722 = vsel %vm721, %v711, -inf
      %723 = vmax.xlane.f32.xlu0 %v722
      %v724 = vpop.xlane.xlu0 %723
      %v725 = vsub.f32 %v701, %v717
      %v726 = vsub.f32 %v706, %v720
      %v727 = vsub.f32 %v711, %v724
      %v728 = vmul.f32 %v725, 1.442695
      %v729 = vpow.pop %v728
      %v730 = vmul.f32 %v726, 1.442695
      %v731 = vpow.pop %v730
      %v732 = vmul.f32 %v727, 1.442695
      %v733 = vpow.pop %v732
      %v734 = vsel %vm714, %v729, 0.0
      %735 = vadd.xlane.f32.xlu0 %v734
      %v736 = vpop.xlane.xlu0 %735
      %v737 = vsel %vm714, %v731, 0.0
      %738 = vadd.xlane.f32.xlu0 %v737
      %v739 = vpop.xlane.xlu0 %738
      %v740 = vsel %vm721, %v733, 0.0
      %741 = vadd.xlane.f32.xlu0 %v740
      %v742 = vpop.xlane.xlu0 %741
      %v743 = vrcp.pop %v736
      %v744 = vrcp.pop %v739
      %v745 = vrcp.pop %v742
      %v746 = vmul.f32 %v729, %v743
      %v747 = vmul.f32 %v731, %v744
      %v748 = vmul.f32 %v733, %v745
      %749 = vrot.lane.b32.xlu0 %v593, 64
      %v750 = vpop.permute.xlu0 %749
      %751 = vrot.lane.b32.xlu0 %v598, 64
      %v752 = vpop.permute.xlu0 %751
      %753 = vrot.lane.b32.xlu0 %v603, 64
      %v754 = vpop.permute.xlu0 %753
      %v758 = vsel %vm714, %v746, 0
      %v761 = vsel %vm714, %v747, 0
      %v764 = vsel %vm714, %v748, 0
      %vm766 = vcmask 1042432
      %v767 = vsel %vm766, %v754, 0
      %769 = vmatprep.subr.mxu0 0.0
      %770 = vmatpush1.msra.mxu0 0.0
      %771 = vmatprep.subr.mxu0 0.0
      %772 = vmatpush1.msra.mxu0 0.0
      %773 = vmatprep.subr.mxu0 0.0
      %774 = vmatpush1.msra.mxu0 0.0
      %775 = vmatprep.subr.mxu0 0.0
      %776 = vmatpush1.msra.mxu0 0.0
      %777 = vmatprep.subr.mxu0 0.0
      %778 = vmatpush1.msra.mxu0 0.0
      %779 = vmatprep.subr.mxu0 0.0
      %780 = vmatpush1.msra.mxu0 0.0
      %781 = vmatprep.subr.mxu0 0.0
      %782 = vmatpush1.msra.mxu0 0.0
      %783 = vmatprep.subr.mxu0 0.0
      %784 = vmatpush1.msra.mxu0 0.0
      %785 = vmatprep.subr.mxu0 0.0
      %786 = vmatpush1.msra.mxu0 0.0
      %787 = vmatprep.subr.mxu0 0.0
      %788 = vmatpush1.msra.mxu0 0.0
      %789 = vmatprep.subr.mxu0 0.0
      %790 = vmatpush1.msra.mxu0 0.0
      %791 = vmatprep.subr.mxu0 0.0
      %792 = vmatpush1.msra.mxu0 0.0
      %793 = vmatprep.subr.mxu0 0.0
      %794 = vmatpush1.msra.mxu0 0.0
      %795 = vmatprep.subr.mxu0 0.0
      %796 = vmatpush1.msra.mxu0 %v767
      %797 = vmatprep.subr.mxu0 0.0
      %798 = vmatpush1.msra.mxu0 %v752
      %799 = vmatprep.subr.mxu0 0.0
      %800 = vmatpush1.msra.mxu0 %v750
      %801 = vmatprep.subr.mxu0 0.0
      %802 = vmatpush2.msra.mxu0 0.0
      %803 = vmatprep.subr.mxu0 0.0
      %804 = vmatpush2.msra.mxu0 0.0
      %805 = vmatprep.subr.mxu0 0.0
      %806 = vmatpush2.msra.mxu0 0.0
      %807 = vmatprep.subr.mxu0 0.0
      %808 = vmatpush2.msra.mxu0 0.0
      %809 = vmatprep.subr.mxu0 0.0
      %810 = vmatpush2.msra.mxu0 0.0
      %811 = vmatprep.subr.mxu0 0.0
      %812 = vmatpush2.msra.mxu0 0.0
      %813 = vmatprep.subr.mxu0 0.0
      %814 = vmatpush2.msra.mxu0 0.0
      %815 = vmatprep.subr.mxu0 0.0
      %816 = vmatpush2.msra.mxu0 0.0
      %817 = vmatprep.subr.mxu0 0.0
      %818 = vmatpush2.msra.mxu0 0.0
      %819 = vmatprep.subr.mxu0 0.0
      %820 = vmatpush2.msra.mxu0 0.0
      %821 = vmatprep.subr.mxu0 0.0
      %822 = vmatpush2.msra.mxu0 0.0
      %823 = vmatprep.subr.mxu0 0.0
      %824 = vmatpush2.msra.mxu0 0.0
      %825 = vmatprep.subr.mxu0 0.0
      %826 = vmatpush2.msra.mxu0 0.0
      %827 = vmatprep.subr.mxu0 0.0
      %828 = vmatpush2.msra.mxu0 0.0
      %829 = vmatprep.subr.mxu0 0.0
      %830 = vmatpush2.msra.mxu0 0.0
      %831 = vmatprep.subr.mxu0 0.0
      %832 = vmatpush2.msra.mxu0 0.0
      %833 = vmatprep.mubr.f32.mxu0 0.0
      %834 = vmatmul.mubr.f32.gmra.mxu0 %v758
      %v835 = vpop.f32.mrf.mxu0
      %v836 = vadd.f32 0.0, %v835
      %v837 = vpop.f32.mrf.mxu0
      %838 = vmatprep.mubr.f32.mxu0 0.0
      %839 = vmatmul.mubr.f32.gmra.mxu0 %v761
      %v840 = vpop.f32.mrf.mxu0
      %v841 = vadd.f32 0.0, %v840
      %v842 = vpop.f32.mrf.mxu0
      %843 = vmatprep.mubr.f32.mxu0 0.0
      %844 = vmatmul.mubr.f32.gmra.mxu0 %v764
      %v845 = vpop.f32.mrf.mxu0
      %v846 = vadd.f32 0.0, %v845
      %v847 = vpop.f32.mrf.mxu0
      %848 = vdwg.mxu0
      %849 = vrot.lane.b32.xlu0 %v606, 120
      %v850 = vpop.permute.xlu0 %849
      %851 = vrot.lane.b32.xlu0 %v607, 120
      %v852 = vpop.permute.xlu0 %851
      %853 = vrot.lane.b32.xlu0 %v608, 120
      %v854 = vpop.permute.xlu0 %853
      %855 = vrot.lane.b32.xlu0 %v593, 88
      %v856 = vpop.permute.xlu0 %855
      %857 = vrot.lane.b32.xlu0 %v598, 88
      %v858 = vpop.permute.xlu0 %857
      %859 = vrot.lane.b32.xlu0 %v603, 88
      %v860 = vpop.permute.xlu0 %859
      %v861 = vsel %vm618, %v850, 0
      %v863 = vsel %vm618, %v852, 0
      %v865 = vsel %vm618, %v854, 0
      %v867 = vsel %vm618, %v856, 0
      %v869 = vsel %vm618, %v858, 0
      %v871 = vsel %vm618, %v860, 0
      %873 = vmatprep.subr.mxu0 0.0
      %874 = vmatpush1.xpose.msra.mxu0 0.0
      %875 = vmatprep.subr.mxu0 0.0
      %876 = vmatpush1.xpose.msra.mxu0 0.0
      %877 = vmatprep.subr.mxu0 0.0
      %878 = vmatpush1.xpose.msra.mxu0 0.0
      %879 = vmatprep.subr.mxu0 0.0
      %880 = vmatpush1.xpose.msra.mxu0 0.0
      %881 = vmatprep.subr.mxu0 0.0
      %882 = vmatpush1.xpose.msra.mxu0 0.0
      %883 = vmatprep.subr.mxu0 0.0
      %884 = vmatpush1.xpose.msra.mxu0 0.0
      %885 = vmatprep.subr.mxu0 0.0
      %886 = vmatpush1.xpose.msra.mxu0 0.0
      %887 = vmatprep.subr.mxu0 0.0
      %888 = vmatpush1.xpose.msra.mxu0 0.0
      %889 = vmatprep.subr.mxu0 0.0
      %890 = vmatpush1.xpose.msra.mxu0 0.0
      %891 = vmatprep.subr.mxu0 0.0
      %892 = vmatpush1.xpose.msra.mxu0 0.0
      %893 = vmatprep.subr.mxu0 0.0
      %894 = vmatpush1.xpose.msra.mxu0 0.0
      %895 = vmatprep.subr.mxu0 0.0
      %896 = vmatpush1.xpose.msra.mxu0 0.0
      %897 = vmatprep.subr.mxu0 0.0
      %898 = vmatpush1.xpose.msra.mxu0 0.0
      %899 = vmatprep.subr.mxu0 0.0
      %900 = vmatpush1.xpose.msra.mxu0 %v871
      %901 = vmatprep.subr.mxu0 0.0
      %902 = vmatpush1.xpose.msra.mxu0 %v869
      %903 = vmatprep.subr.mxu0 0.0
      %904 = vmatpush1.xpose.msra.mxu0 %v867
      %905 = vmatprep.subr.mxu0 0.0
      %906 = vmatpush2.xpose.msra.mxu0 0.0
      %907 = vmatprep.subr.mxu0 0.0
      %908 = vmatpush2.xpose.msra.mxu0 0.0
      %909 = vmatprep.subr.mxu0 0.0
      %910 = vmatpush2.xpose.msra.mxu0 0.0
      %911 = vmatprep.subr.mxu0 0.0
      %912 = vmatpush2.xpose.msra.mxu0 0.0
      %913 = vmatprep.subr.mxu0 0.0
      %914 = vmatpush2.xpose.msra.mxu0 0.0
      %915 = vmatprep.subr.mxu0 0.0
      %916 = vmatpush2.xpose.msra.mxu0 0.0
      %917 = vmatprep.subr.mxu0 0.0
      %918 = vmatpush2.xpose.msra.mxu0 0.0
      %919 = vmatprep.subr.mxu0 0.0
      %920 = vmatpush2.xpose.msra.mxu0 0.0
      %921 = vmatprep.subr.mxu0 0.0
      %922 = vmatpush2.xpose.msra.mxu0 0.0
      %923 = vmatprep.subr.mxu0 0.0
      %924 = vmatpush2.xpose.msra.mxu0 0.0
      %925 = vmatprep.subr.mxu0 0.0
      %926 = vmatpush2.xpose.msra.mxu0 0.0
      %927 = vmatprep.subr.mxu0 0.0
      %928 = vmatpush2.xpose.msra.mxu0 0.0
      %929 = vmatprep.subr.mxu0 0.0
      %930 = vmatpush2.xpose.msra.mxu0 0.0
      %931 = vmatprep.subr.mxu0 0.0
      %932 = vmatpush2.xpose.msra.mxu0 0.0
      %933 = vmatprep.subr.mxu0 0.0
      %934 = vmatpush2.xpose.msra.mxu0 0.0
      %935 = vmatprep.subr.mxu0 0.0
      %936 = vmatpush2.xpose.msra.mxu0 0.0
      %937 = vmatprep.mubr.f32.mxu0 0.0
      %938 = vmatmul.mubr.f32.gmra.mxu0 %v861
      %v939 = vpop.f32.mrf.mxu0
      %v940 = vadd.f32 0.0, %v939
      %v941 = vpop.f32.mrf.mxu0
      %942 = vmatprep.mubr.f32.mxu0 0.0
      %943 = vmatmul.mubr.f32.gmra.mxu0 %v863
      %v944 = vpop.f32.mrf.mxu0
      %v945 = vadd.f32 0.0, %v944
      %v946 = vpop.f32.mrf.mxu0
      %947 = vmatprep.mubr.f32.mxu0 0.0
      %948 = vmatmul.mubr.f32.gmra.mxu0 %v865
      %v949 = vpop.f32.mrf.mxu0
      %v950 = vadd.f32 0.0, %v949
      %v951 = vpop.f32.mrf.mxu0
      %952 = vdwg.mxu0
      %v953 = vsel %vm714, %v940, -inf
      %954 = vmax.xlane.f32.xlu0 %v953
      %v955 = vpop.xlane.xlu0 %954
      %v956 = vsel %vm714, %v945, -inf
      %957 = vmax.xlane.f32.xlu0 %v956
      %v958 = vpop.xlane.xlu0 %957
      %v959 = vsel %vm721, %v950, -inf
      %960 = vmax.xlane.f32.xlu0 %v959
      %v961 = vpop.xlane.xlu0 %960
      %v962 = vsub.f32 %v940, %v955
      %v963 = vsub.f32 %v945, %v958
      %v964 = vsub.f32 %v950, %v961
      %v965 = vmul.f32 %v962, 1.442695
      %v966 = vpow.pop %v965
      %v967 = vmul.f32 %v963, 1.442695
      %v968 = vpow.pop %v967
      %v969 = vmul.f32 %v964, 1.442695
      %v970 = vpow.pop %v969
      %v971 = vsel %vm714, %v966, 0.0
      %972 = vadd.xlane.f32.xlu0 %v971
      %v973 = vpop.xlane.xlu0 %972
      %v974 = vsel %vm714, %v968, 0.0
      %975 = vadd.xlane.f32.xlu0 %v974
      %v976 = vpop.xlane.xlu0 %975
      %v977 = vsel %vm721, %v970, 0.0
      %978 = vadd.xlane.f32.xlu0 %v977
      %v979 = vpop.xlane.xlu0 %978
      %v980 = vrcp.pop %v973
      %v981 = vrcp.pop %v976
      %v982 = vrcp.pop %v979
      %v983 = vmul.f32 %v966, %v980
      %v984 = vmul.f32 %v968, %v981
      %v985 = vmul.f32 %v970, %v982
      %986 = vrot.lane.b32.xlu0 %v593, 56
      %v987 = vpop.permute.xlu0 %986
      %988 = vrot.lane.b32.xlu0 %v598, 56
      %v989 = vpop.permute.xlu0 %988
      %990 = vrot.lane.b32.xlu0 %v603, 56
      %v991 = vpop.permute.xlu0 %990
      %v995 = vsel %vm714, %v983, 0
      %v998 = vsel %vm714, %v984, 0
      %v1001 = vsel %vm714, %v985, 0
      %v1003 = vsel %vm766, %v991, 0
      %1005 = vmatprep.subr.mxu0 0.0
      %1006 = vmatpush1.msra.mxu0 0.0
      %1007 = vmatprep.subr.mxu0 0.0
      %1008 = vmatpush1.msra.mxu0 0.0
      %1009 = vmatprep.subr.mxu0 0.0
      %1010 = vmatpush1.msra.mxu0 0.0
      %1011 = vmatprep.subr.mxu0 0.0
      %1012 = vmatpush1.msra.mxu0 0.0
      %1013 = vmatprep.subr.mxu0 0.0
      %1014 = vmatpush1.msra.mxu0 0.0
      %1015 = vmatprep.subr.mxu0 0.0
      %1016 = vmatpush1.msra.mxu0 0.0
      %1017 = vmatprep.subr.mxu0 0.0
      %1018 = vmatpush1.msra.mxu0 0.0
      %1019 = vmatprep.subr.mxu0 0.0
      %1020 = vmatpush1.msra.mxu0 0.0
      %1021 = vmatprep.subr.mxu0 0.0
      %1022 = vmatpush1.msra.mxu0 0.0
      %1023 = vmatprep.subr.mxu0 0.0
      %1024 = vmatpush1.msra.mxu0 0.0
      %1025 = vmatprep.subr.mxu0 0.0
      %1026 = vmatpush1.msra.mxu0 0.0
      %1027 = vmatprep.subr.mxu0 0.0
      %1028 = vmatpush1.msra.mxu0 0.0
      %1029 = vmatprep.subr.mxu0 0.0
      %1030 = vmatpush1.msra.mxu0 0.0
      %1031 = vmatprep.subr.mxu0 0.0
      %1032 = vmatpush1.msra.mxu0 %v1003
      %1033 = vmatprep.subr.mxu0 0.0
      %1034 = vmatpush1.msra.mxu0 %v989
      %1035 = vmatprep.subr.mxu0 0.0
      %1036 = vmatpush1.msra.mxu0 %v987
      %1037 = vmatprep.subr.mxu0 0.0
      %1038 = vmatpush2.msra.mxu0 0.0
      %1039 = vmatprep.subr.mxu0 0.0
      %1040 = vmatpush2.msra.mxu0 0.0
      %1041 = vmatprep.subr.mxu0 0.0
      %1042 = vmatpush2.msra.mxu0 0.0
      %1043 = vmatprep.subr.mxu0 0.0
      %1044 = vmatpush2.msra.mxu0 0.0
      %1045 = vmatprep.subr.mxu0 0.0
      %1046 = vmatpush2.msra.mxu0 0.0
      %1047 = vmatprep.subr.mxu0 0.0
      %1048 = vmatpush2.msra.mxu0 0.0
      %1049 = vmatprep.subr.mxu0 0.0
      %1050 = vmatpush2.msra.mxu0 0.0
      %1051 = vmatprep.subr.mxu0 0.0
      %1052 = vmatpush2.msra.mxu0 0.0
      %1053 = vmatprep.subr.mxu0 0.0
      %1054 = vmatpush2.msra.mxu0 0.0
      %1055 = vmatprep.subr.mxu0 0.0
      %1056 = vmatpush2.msra.mxu0 0.0
      %1057 = vmatprep.subr.mxu0 0.0
      %1058 = vmatpush2.msra.mxu0 0.0
      %1059 = vmatprep.subr.mxu0 0.0
      %1060 = vmatpush2.msra.mxu0 0.0
      %1061 = vmatprep.subr.mxu0 0.0
      %1062 = vmatpush2.msra.mxu0 0.0
      %1063 = vmatprep.subr.mxu0 0.0
      %1064 = vmatpush2.msra.mxu0 0.0
      %1065 = vmatprep.subr.mxu0 0.0
      %1066 = vmatpush2.msra.mxu0 0.0
      %1067 = vmatprep.subr.mxu0 0.0
      %1068 = vmatpush2.msra.mxu0 0.0
      %1069 = vmatprep.mubr.f32.mxu0 0.0
      %1070 = vmatmul.mubr.f32.gmra.mxu0 %v995
      %v1071 = vpop.f32.mrf.mxu0
      %v1072 = vadd.f32 0.0, %v1071
      %v1073 = vpop.f32.mrf.mxu0
      %1074 = vmatprep.mubr.f32.mxu0 0.0
      %1075 = vmatmul.mubr.f32.gmra.mxu0 %v998
      %v1076 = vpop.f32.mrf.mxu0
      %v1077 = vadd.f32 0.0, %v1076
      %v1078 = vpop.f32.mrf.mxu0
      %1079 = vmatprep.mubr.f32.mxu0 0.0
      %1080 = vmatmul.mubr.f32.gmra.mxu0 %v1001
      %v1081 = vpop.f32.mrf.mxu0
      %v1082 = vadd.f32 0.0, %v1081
      %v1083 = vpop.f32.mrf.mxu0
      %1084 = vdwg.mxu0
      %1085 = vrot.lane.b32.xlu0 %v606, 112
      %v1086 = vpop.permute.xlu0 %1085
      %1087 = vrot.lane.b32.xlu0 %v607, 112
      %v1088 = vpop.permute.xlu0 %1087
      %1089 = vrot.lane.b32.xlu0 %v608, 112
      %v1090 = vpop.permute.xlu0 %1089
      %1091 = vrot.lane.b32.xlu0 %v593, 80
      %v1092 = vpop.permute.xlu0 %1091
      %1093 = vrot.lane.b32.xlu0 %v598, 80
      %v1094 = vpop.permute.xlu0 %1093
      %1095 = vrot.lane.b32.xlu0 %v603, 80
      %v1096 = vpop.permute.xlu0 %1095
      %v1097 = vsel %vm618, %v1086, 0
      %v1099 = vsel %vm618, %v1088, 0
      %v1101 = vsel %vm618, %v1090, 0
      %v1103 = vsel %vm618, %v1092, 0
      %v1105 = vsel %vm618, %v1094, 0
      %v1107 = vsel %vm618, %v1096, 0
      %1109 = vmatprep.subr.mxu0 0.0
      %1110 = vmatpush1.xpose.msra.mxu0 0.0
      %1111 = vmatprep.subr.mxu0 0.0
      %1112 = vmatpush1.xpose.msra.mxu0 0.0
      %1113 = vmatprep.subr.mxu0 0.0
      %1114 = vmatpush1.xpose.msra.mxu0 0.0
      %1115 = vmatprep.subr.mxu0 0.0
      %1116 = vmatpush1.xpose.msra.mxu0 0.0
      %1117 = vmatprep.subr.mxu0 0.0
      %1118 = vmatpush1.xpose.msra.mxu0 0.0
      %1119 = vmatprep.subr.mxu0 0.0
      %1120 = vmatpush1.xpose.msra.mxu0 0.0
      %1121 = vmatprep.subr.mxu0 0.0
      %1122 = vmatpush1.xpose.msra.mxu0 0.0
      %1123 = vmatprep.subr.mxu0 0.0
      %1124 = vmatpush1.xpose.msra.mxu0 0.0
      %1125 = vmatprep.subr.mxu0 0.0
      %1126 = vmatpush1.xpose.msra.mxu0 0.0
      %1127 = vmatprep.subr.mxu0 0.0
      %1128 = vmatpush1.xpose.msra.mxu0 0.0
      %1129 = vmatprep.subr.mxu0 0.0
      %1130 = vmatpush1.xpose.msra.mxu0 0.0
      %1131 = vmatprep.subr.mxu0 0.0
      %1132 = vmatpush1.xpose.msra.mxu0 0.0
      %1133 = vmatprep.subr.mxu0 0.0
      %1134 = vmatpush1.xpose.msra.mxu0 0.0
      %1135 = vmatprep.subr.mxu0 0.0
      %1136 = vmatpush1.xpose.msra.mxu0 %v1107
      %1137 = vmatprep.subr.mxu0 0.0
      %1138 = vmatpush1.xpose.msra.mxu0 %v1105
      %1139 = vmatprep.subr.mxu0 0.0
      %1140 = vmatpush1.xpose.msra.mxu0 %v1103
      %1141 = vmatprep.subr.mxu0 0.0
      %1142 = vmatpush2.xpose.msra.mxu0 0.0
      %1143 = vmatprep.subr.mxu0 0.0
      %1144 = vmatpush2.xpose.msra.mxu0 0.0
      %1145 = vmatprep.subr.mxu0 0.0
      %1146 = vmatpush2.xpose.msra.mxu0 0.0
      %1147 = vmatprep.subr.mxu0 0.0
      %1148 = vmatpush2.xpose.msra.mxu0 0.0
      %1149 = vmatprep.subr.mxu0 0.0
      %1150 = vmatpush2.xpose.msra.mxu0 0.0
      %1151 = vmatprep.subr.mxu0 0.0
      %1152 = vmatpush2.xpose.msra.mxu0 0.0
      %1153 = vmatprep.subr.mxu0 0.0
      %1154 = vmatpush2.xpose.msra.mxu0 0.0
      %1155 = vmatprep.subr.mxu0 0.0
      %1156 = vmatpush2.xpose.msra.mxu0 0.0
      %1157 = vmatprep.subr.mxu0 0.0
      %1158 = vmatpush2.xpose.msra.mxu0 0.0
      %1159 = vmatprep.subr.mxu0 0.0
      %1160 = vmatpush2.xpose.msra.mxu0 0.0
      %1161 = vmatprep.subr.mxu0 0.0
      %1162 = vmatpush2.xpose.msra.mxu0 0.0
      %1163 = vmatprep.subr.mxu0 0.0
      %1164 = vmatpush2.xpose.msra.mxu0 0.0
      %1165 = vmatprep.subr.mxu0 0.0
      %1166 = vmatpush2.xpose.msra.mxu0 0.0
      %1167 = vmatprep.subr.mxu0 0.0
      %1168 = vmatpush2.xpose.msra.mxu0 0.0
      %1169 = vmatprep.subr.mxu0 0.0
      %1170 = vmatpush2.xpose.msra.mxu0 0.0
      %1171 = vmatprep.subr.mxu0 0.0
      %1172 = vmatpush2.xpose.msra.mxu0 0.0
      %1173 = vmatprep.mubr.f32.mxu0 0.0
      %1174 = vmatmul.mubr.f32.gmra.mxu0 %v1097
      %v1175 = vpop.f32.mrf.mxu0
      %v1176 = vadd.f32 0.0, %v1175
      %v1177 = vpop.f32.mrf.mxu0
      %1178 = vmatprep.mubr.f32.mxu0 0.0
      %1179 = vmatmul.mubr.f32.gmra.mxu0 %v1099
      %v1180 = vpop.f32.mrf.mxu0
      %v1181 = vadd.f32 0.0, %v1180
      %v1182 = vpop.f32.mrf.mxu0
      %1183 = vmatprep.mubr.f32.mxu0 0.0
      %1184 = vmatmul.mubr.f32.gmra.mxu0 %v1101
      %v1185 = vpop.f32.mrf.mxu0
      %v1186 = vadd.f32 0.0, %v1185
      %v1187 = vpop.f32.mrf.mxu0
      %1188 = vdwg.mxu0
      %v1189 = vsel %vm714, %v1176, -inf
      %1190 = vmax.xlane.f32.xlu0 %v1189
      %v1191 = vpop.xlane.xlu0 %1190
      %v1192 = vsel %vm714, %v1181, -inf
      %1193 = vmax.xlane.f32.xlu0 %v1192
      %v1194 = vpop.xlane.xlu0 %1193
      %v1195 = vsel %vm721, %v1186, -inf
      %1196 = vmax.xlane.f32.xlu0 %v1195
      %v1197 = vpop.xlane.xlu0 %1196
      %v1198 = vsub.f32 %v1176, %v1191
      %v1199 = vsub.f32 %v1181, %v1194
      %v1200 = vsub.f32 %v1186, %v1197
      %v1201 = vmul.f32 %v1198, 1.442695
      %v1202 = vpow.pop %v1201
      %v1203 = vmul.f32 %v1199, 1.442695
      %v1204 = vpow.pop %v1203
      %v1205 = vmul.f32 %v1200, 1.442695
      %v1206 = vpow.pop %v1205
      %v1207 = vsel %vm714, %v1202, 0.0
      %1208 = vadd.xlane.f32.xlu0 %v1207
      %v1209 = vpop.xlane.xlu0 %1208
      %v1210 = vsel %vm714, %v1204, 0.0
      %1211 = vadd.xlane.f32.xlu0 %v1210
      %v1212 = vpop.xlane.xlu0 %1211
      %v1213 = vsel %vm721, %v1206, 0.0
      %1214 = vadd.xlane.f32.xlu0 %v1213
      %v1215 = vpop.xlane.xlu0 %1214
      %v1216 = vrcp.pop %v1209
      %v1217 = vrcp.pop %v1212
      %v1218 = vrcp.pop %v1215
      %v1219 = vmul.f32 %v1202, %v1216
      %v1220 = vmul.f32 %v1204, %v1217
      %v1221 = vmul.f32 %v1206, %v1218
      %1222 = vrot.lane.b32.xlu0 %v593, 48
      %v1223 = vpop.permute.xlu0 %1222
      %1224 = vrot.lane.b32.xlu0 %v598, 48
      %v1225 = vpop.permute.xlu0 %1224
      %1226 = vrot.lane.b32.xlu0 %v603, 48
      %v1227 = vpop.permute.xlu0 %1226
      %v1231 = vsel %vm714, %v1219, 0
      %v1234 = vsel %vm714, %v1220, 0
      %v1237 = vsel %vm714, %v1221, 0
      %v1239 = vsel %vm766, %v1227, 0
      %1241 = vmatprep.subr.mxu0 0.0
      %1242 = vmatpush1.msra.mxu0 0.0
      %1243 = vmatprep.subr.mxu0 0.0
      %1244 = vmatpush1.msra.mxu0 0.0
      %1245 = vmatprep.subr.mxu0 0.0
      %1246 = vmatpush1.msra.mxu0 0.0
      %1247 = vmatprep.subr.mxu0 0.0
      %1248 = vmatpush1.msra.mxu0 0.0
      %1249 = vmatprep.subr.mxu0 0.0
      %1250 = vmatpush1.msra.mxu0 0.0
      %1251 = vmatprep.subr.mxu0 0.0
      %1252 = vmatpush1.msra.mxu0 0.0
      %1253 = vmatprep.subr.mxu0 0.0
      %1254 = vmatpush1.msra.mxu0 0.0
      %1255 = vmatprep.subr.mxu0 0.0
      %1256 = vmatpush1.msra.mxu0 0.0
      %1257 = vmatprep.subr.mxu0 0.0
      %1258 = vmatpush1.msra.mxu0 0.0
      %1259 = vmatprep.subr.mxu0 0.0
      %1260 = vmatpush1.msra.mxu0 0.0
      %1261 = vmatprep.subr.mxu0 0.0
      %1262 = vmatpush1.msra.mxu0 0.0
      %1263 = vmatprep.subr.mxu0 0.0
      %1264 = vmatpush1.msra.mxu0 0.0
      %1265 = vmatprep.subr.mxu0 0.0
      %1266 = vmatpush1.msra.mxu0 0.0
      %1267 = vmatprep.subr.mxu0 0.0
      %1268 = vmatpush1.msra.mxu0 %v1239
      %1269 = vmatprep.subr.mxu0 0.0
      %1270 = vmatpush1.msra.mxu0 %v1225
      %1271 = vmatprep.subr.mxu0 0.0
      %1272 = vmatpush1.msra.mxu0 %v1223
      %1273 = vmatprep.subr.mxu0 0.0
      %1274 = vmatpush2.msra.mxu0 0.0
      %1275 = vmatprep.subr.mxu0 0.0
      %1276 = vmatpush2.msra.mxu0 0.0
      %1277 = vmatprep.subr.mxu0 0.0
      %1278 = vmatpush2.msra.mxu0 0.0
      %1279 = vmatprep.subr.mxu0 0.0
      %1280 = vmatpush2.msra.mxu0 0.0
      %1281 = vmatprep.subr.mxu0 0.0
      %1282 = vmatpush2.msra.mxu0 0.0
      %1283 = vmatprep.subr.mxu0 0.0
      %1284 = vmatpush2.msra.mxu0 0.0
      %1285 = vmatprep.subr.mxu0 0.0
      %1286 = vmatpush2.msra.mxu0 0.0
      %1287 = vmatprep.subr.mxu0 0.0
      %1288 = vmatpush2.msra.mxu0 0.0
      %1289 = vmatprep.subr.mxu0 0.0
      %1290 = vmatpush2.msra.mxu0 0.0
      %1291 = vmatprep.subr.mxu0 0.0
      %1292 = vmatpush2.msra.mxu0 0.0
      %1293 = vmatprep.subr.mxu0 0.0
      %1294 = vmatpush2.msra.mxu0 0.0
      %1295 = vmatprep.subr.mxu0 0.0
      %1296 = vmatpush2.msra.mxu0 0.0
      %1297 = vmatprep.subr.mxu0 0.0
      %1298 = vmatpush2.msra.mxu0 0.0
      %1299 = vmatprep.subr.mxu0 0.0
      %1300 = vmatpush2.msra.mxu0 0.0
      %1301 = vmatprep.subr.mxu0 0.0
      %1302 = vmatpush2.msra.mxu0 0.0
      %1303 = vmatprep.subr.mxu0 0.0
      %1304 = vmatpush2.msra.mxu0 0.0
      %1305 = vmatprep.mubr.f32.mxu0 0.0
      %1306 = vmatmul.mubr.f32.gmra.mxu0 %v1231
      %v1307 = vpop.f32.mrf.mxu0
      %v1308 = vadd.f32 0.0, %v1307
      %v1309 = vpop.f32.mrf.mxu0
      %1310 = vmatprep.mubr.f32.mxu0 0.0
      %1311 = vmatmul.mubr.f32.gmra.mxu0 %v1234
      %v1312 = vpop.f32.mrf.mxu0
      %v1313 = vadd.f32 0.0, %v1312
      %v1314 = vpop.f32.mrf.mxu0
      %1315 = vmatprep.mubr.f32.mxu0 0.0
      %1316 = vmatmul.mubr.f32.gmra.mxu0 %v1237
      %v1317 = vpop.f32.mrf.mxu0
      %v1318 = vadd.f32 0.0, %v1317
      %v1319 = vpop.f32.mrf.mxu0
      %1320 = vdwg.mxu0
      %1321 = vrot.lane.b32.xlu0 %v606, 104
      %v1322 = vpop.permute.xlu0 %1321
      %1323 = vrot.lane.b32.xlu0 %v607, 104
      %v1324 = vpop.permute.xlu0 %1323
      %1325 = vrot.lane.b32.xlu0 %v608, 104
      %v1326 = vpop.permute.xlu0 %1325
      %1327 = vrot.lane.b32.xlu0 %v593, 72
      %v1328 = vpop.permute.xlu0 %1327
      %1329 = vrot.lane.b32.xlu0 %v598, 72
      %v1330 = vpop.permute.xlu0 %1329
      %1331 = vrot.lane.b32.xlu0 %v603, 72
      %v1332 = vpop.permute.xlu0 %1331
      %v1333 = vsel %vm618, %v1322, 0
      %v1335 = vsel %vm618, %v1324, 0
      %v1337 = vsel %vm618, %v1326, 0
      %v1339 = vsel %vm618, %v1328, 0
      %v1341 = vsel %vm618, %v1330, 0
      %v1343 = vsel %vm618, %v1332, 0
      %1345 = vmatprep.subr.mxu0 0.0
      %1346 = vmatpush1.xpose.msra.mxu0 0.0
      %1347 = vmatprep.subr.mxu0 0.0
      %1348 = vmatpush1.xpose.msra.mxu0 0.0
      %1349 = vmatprep.subr.mxu0 0.0
      %1350 = vmatpush1.xpose.msra.mxu0 0.0
      %1351 = vmatprep.subr.mxu0 0.0
      %1352 = vmatpush1.xpose.msra.mxu0 0.0
      %1353 = vmatprep.subr.mxu0 0.0
      %1354 = vmatpush1.xpose.msra.mxu0 0.0
      %1355 = vmatprep.subr.mxu0 0.0
      %1356 = vmatpush1.xpose.msra.mxu0 0.0
      %1357 = vmatprep.subr.mxu0 0.0
      %1358 = vmatpush1.xpose.msra.mxu0 0.0
      %1359 = vmatprep.subr.mxu0 0.0
      %1360 = vmatpush1.xpose.msra.mxu0 0.0
      %1361 = vmatprep.subr.mxu0 0.0
      %1362 = vmatpush1.xpose.msra.mxu0 0.0
      %1363 = vmatprep.subr.mxu0 0.0
      %1364 = vmatpush1.xpose.msra.mxu0 0.0
      %1365 = vmatprep.subr.mxu0 0.0
      %1366 = vmatpush1.xpose.msra.mxu0 0.0
      %1367 = vmatprep.subr.mxu0 0.0
      %1368 = vmatpush1.xpose.msra.mxu0 0.0
      %1369 = vmatprep.subr.mxu0 0.0
      %1370 = vmatpush1.xpose.msra.mxu0 0.0
      %1371 = vmatprep.subr.mxu0 0.0
      %1372 = vmatpush1.xpose.msra.mxu0 %v1343
      %1373 = vmatprep.subr.mxu0 0.0
      %1374 = vmatpush1.xpose.msra.mxu0 %v1341
      %1375 = vmatprep.subr.mxu0 0.0
      %1376 = vmatpush1.xpose.msra.mxu0 %v1339
      %1377 = vmatprep.subr.mxu0 0.0
      %1378 = vmatpush2.xpose.msra.mxu0 0.0
      %1379 = vmatprep.subr.mxu0 0.0
      %1380 = vmatpush2.xpose.msra.mxu0 0.0
      %1381 = vmatprep.subr.mxu0 0.0
      %1382 = vmatpush2.xpose.msra.mxu0 0.0
      %1383 = vmatprep.subr.mxu0 0.0
      %1384 = vmatpush2.xpose.msra.mxu0 0.0
      %1385 = vmatprep.subr.mxu0 0.0
      %1386 = vmatpush2.xpose.msra.mxu0 0.0
      %1387 = vmatprep.subr.mxu0 0.0
      %1388 = vmatpush2.xpose.msra.mxu0 0.0
      %1389 = vmatprep.subr.mxu0 0.0
      %1390 = vmatpush2.xpose.msra.mxu0 0.0
      %1391 = vmatprep.subr.mxu0 0.0
      %1392 = vmatpush2.xpose.msra.mxu0 0.0
      %1393 = vmatprep.subr.mxu0 0.0
      %1394 = vmatpush2.xpose.msra.mxu0 0.0
      %1395 = vmatprep.subr.mxu0 0.0
      %1396 = vmatpush2.xpose.msra.mxu0 0.0
      %1397 = vmatprep.subr.mxu0 0.0
      %1398 = vmatpush2.xpose.msra.mxu0 0.0
      %1399 = vmatprep.subr.mxu0 0.0
      %1400 = vmatpush2.xpose.msra.mxu0 0.0
      %1401 = vmatprep.subr.mxu0 0.0
      %1402 = vmatpush2.xpose.msra.mxu0 0.0
      %1403 = vmatprep.subr.mxu0 0.0
      %1404 = vmatpush2.xpose.msra.mxu0 0.0
      %1405 = vmatprep.subr.mxu0 0.0
      %1406 = vmatpush2.xpose.msra.mxu0 0.0
      %1407 = vmatprep.subr.mxu0 0.0
      %1408 = vmatpush2.xpose.msra.mxu0 0.0
      %1409 = vmatprep.mubr.f32.mxu0 0.0
      %1410 = vmatmul.mubr.f32.gmra.mxu0 %v1333
      %v1411 = vpop.f32.mrf.mxu0
      %v1412 = vadd.f32 0.0, %v1411
      %v1413 = vpop.f32.mrf.mxu0
      %1414 = vmatprep.mubr.f32.mxu0 0.0
      %1415 = vmatmul.mubr.f32.gmra.mxu0 %v1335
      %v1416 = vpop.f32.mrf.mxu0
      %v1417 = vadd.f32 0.0, %v1416
      %v1418 = vpop.f32.mrf.mxu0
      %1419 = vmatprep.mubr.f32.mxu0 0.0
      %1420 = vmatmul.mubr.f32.gmra.mxu0 %v1337
      %v1421 = vpop.f32.mrf.mxu0
      %v1422 = vadd.f32 0.0, %v1421
      %v1423 = vpop.f32.mrf.mxu0
      %1424 = vdwg.mxu0
      %v1425 = vsel %vm714, %v1412, -inf
      %1426 = vmax.xlane.f32.xlu0 %v1425
      %v1427 = vpop.xlane.xlu0 %1426
      %v1428 = vsel %vm714, %v1417, -inf
      %1429 = vmax.xlane.f32.xlu0 %v1428
      %v1430 = vpop.xlane.xlu0 %1429
      %v1431 = vsel %vm721, %v1422, -inf
      %1432 = vmax.xlane.f32.xlu0 %v1431
      %v1433 = vpop.xlane.xlu0 %1432
      %v1434 = vsub.f32 %v1412, %v1427
      %v1435 = vsub.f32 %v1417, %v1430
      %v1436 = vsub.f32 %v1422, %v1433
      %v1437 = vmul.f32 %v1434, 1.442695
      %v1438 = vpow.pop %v1437
      %v1439 = vmul.f32 %v1435, 1.442695
      %v1440 = vpow.pop %v1439
      %v1441 = vmul.f32 %v1436, 1.442695
      %v1442 = vpow.pop %v1441
      %v1443 = vsel %vm714, %v1438, 0.0
      %1444 = vadd.xlane.f32.xlu0 %v1443
      %v1445 = vpop.xlane.xlu0 %1444
      %v1446 = vsel %vm714, %v1440, 0.0
      %1447 = vadd.xlane.f32.xlu0 %v1446
      %v1448 = vpop.xlane.xlu0 %1447
      %v1449 = vsel %vm721, %v1442, 0.0
      %1450 = vadd.xlane.f32.xlu0 %v1449
      %v1451 = vpop.xlane.xlu0 %1450
      %v1452 = vrcp.pop %v1445
      %v1453 = vrcp.pop %v1448
      %v1454 = vrcp.pop %v1451
      %v1455 = vmul.f32 %v1438, %v1452
      %v1456 = vmul.f32 %v1440, %v1453
      %v1457 = vmul.f32 %v1442, %v1454
      %1458 = vrot.lane.b32.xlu0 %v593, 40
      %v1459 = vpop.permute.xlu0 %1458
      %1460 = vrot.lane.b32.xlu0 %v598, 40
      %v1461 = vpop.permute.xlu0 %1460
      %1462 = vrot.lane.b32.xlu0 %v603, 40
      %v1463 = vpop.permute.xlu0 %1462
      %v1467 = vsel %vm714, %v1455, 0
      %v1470 = vsel %vm714, %v1456, 0
      %v1473 = vsel %vm714, %v1457, 0
      %v1475 = vsel %vm766, %v1463, 0
      %1477 = vmatprep.subr.mxu0 0.0
      %1478 = vmatpush1.msra.mxu0 0.0
      %1479 = vmatprep.subr.mxu0 0.0
      %1480 = vmatpush1.msra.mxu0 0.0
      %1481 = vmatprep.subr.mxu0 0.0
      %1482 = vmatpush1.msra.mxu0 0.0
      %1483 = vmatprep.subr.mxu0 0.0
      %1484 = vmatpush1.msra.mxu0 0.0
      %1485 = vmatprep.subr.mxu0 0.0
      %1486 = vmatpush1.msra.mxu0 0.0
      %1487 = vmatprep.subr.mxu0 0.0
      %1488 = vmatpush1.msra.mxu0 0.0
      %1489 = vmatprep.subr.mxu0 0.0
      %1490 = vmatpush1.msra.mxu0 0.0
      %1491 = vmatprep.subr.mxu0 0.0
      %1492 = vmatpush1.msra.mxu0 0.0
      %1493 = vmatprep.subr.mxu0 0.0
      %1494 = vmatpush1.msra.mxu0 0.0
      %1495 = vmatprep.subr.mxu0 0.0
      %1496 = vmatpush1.msra.mxu0 0.0
      %1497 = vmatprep.subr.mxu0 0.0
      %1498 = vmatpush1.msra.mxu0 0.0
      %1499 = vmatprep.subr.mxu0 0.0
      %1500 = vmatpush1.msra.mxu0 0.0
      %1501 = vmatprep.subr.mxu0 0.0
      %1502 = vmatpush1.msra.mxu0 0.0
      %1503 = vmatprep.subr.mxu0 0.0
      %1504 = vmatpush1.msra.mxu0 %v1475
      %1505 = vmatprep.subr.mxu0 0.0
      %1506 = vmatpush1.msra.mxu0 %v1461
      %1507 = vmatprep.subr.mxu0 0.0
      %1508 = vmatpush1.msra.mxu0 %v1459
      %1509 = vmatprep.subr.mxu0 0.0
      %1510 = vmatpush2.msra.mxu0 0.0
      %1511 = vmatprep.subr.mxu0 0.0
      %1512 = vmatpush2.msra.mxu0 0.0
      %1513 = vmatprep.subr.mxu0 0.0
      %1514 = vmatpush2.msra.mxu0 0.0
      %1515 = vmatprep.subr.mxu0 0.0
      %1516 = vmatpush2.msra.mxu0 0.0
      %1517 = vmatprep.subr.mxu0 0.0
      %1518 = vmatpush2.msra.mxu0 0.0
      %1519 = vmatprep.subr.mxu0 0.0
      %1520 = vmatpush2.msra.mxu0 0.0
      %1521 = vmatprep.subr.mxu0 0.0
      %1522 = vmatpush2.msra.mxu0 0.0
      %1523 = vmatprep.subr.mxu0 0.0
      %1524 = vmatpush2.msra.mxu0 0.0
      %1525 = vmatprep.subr.mxu0 0.0
      %1526 = vmatpush2.msra.mxu0 0.0
      %1527 = vmatprep.subr.mxu0 0.0
      %1528 = vmatpush2.msra.mxu0 0.0
      %1529 = vmatprep.subr.mxu0 0.0
      %1530 = vmatpush2.msra.mxu0 0.0
      %1531 = vmatprep.subr.mxu0 0.0
      %1532 = vmatpush2.msra.mxu0 0.0
      %1533 = vmatprep.subr.mxu0 0.0
      %1534 = vmatpush2.msra.mxu0 0.0
      %1535 = vmatprep.subr.mxu0 0.0
      %1536 = vmatpush2.msra.mxu0 0.0
      %1537 = vmatprep.subr.mxu0 0.0
      %1538 = vmatpush2.msra.mxu0 0.0
      %1539 = vmatprep.subr.mxu0 0.0
      %1540 = vmatpush2.msra.mxu0 0.0
      %1541 = vmatprep.mubr.f32.mxu0 0.0
      %1542 = vmatmul.mubr.f32.gmra.mxu0 %v1467
      %v1543 = vpop.f32.mrf.mxu0
      %v1544 = vadd.f32 0.0, %v1543
      %v1545 = vpop.f32.mrf.mxu0
      %1546 = vmatprep.mubr.f32.mxu0 0.0
      %1547 = vmatmul.mubr.f32.gmra.mxu0 %v1470
      %v1548 = vpop.f32.mrf.mxu0
      %v1549 = vadd.f32 0.0, %v1548
      %v1550 = vpop.f32.mrf.mxu0
      %1551 = vmatprep.mubr.f32.mxu0 0.0
      %1552 = vmatmul.mubr.f32.gmra.mxu0 %v1473
      %v1553 = vpop.f32.mrf.mxu0
      %v1554 = vadd.f32 0.0, %v1553
      %v1555 = vpop.f32.mrf.mxu0
      %1556 = vdwg.mxu0
      %1560 = vrot.lane.b32.xlu0 %v1072, 8
      %v1561 = vpop.permute.xlu0 %1560
      %1562 = vrot.lane.b32.xlu0 %v1077, 8
      %v1563 = vpop.permute.xlu0 %1562
      %1564 = vrot.lane.b32.xlu0 %v1082, 8
      %v1565 = vpop.permute.xlu0 %1564
      %1572 = vrot.lane.b32.xlu0 %v1308, 16
      %v1573 = vpop.permute.xlu0 %1572
      %1574 = vrot.lane.b32.xlu0 %v1313, 16
      %v1575 = vpop.permute.xlu0 %1574
      %1576 = vrot.lane.b32.xlu0 %v1318, 16
      %v1577 = vpop.permute.xlu0 %1576
      %1584 = vrot.lane.b32.xlu0 %v1544, 24
      %v1585 = vpop.permute.xlu0 %1584
      %1586 = vrot.lane.b32.xlu0 %v1549, 24
      %v1587 = vpop.permute.xlu0 %1586
      %1588 = vrot.lane.b32.xlu0 %v1554, 24
      %v1589 = vpop.permute.xlu0 %1588
      %v1593 = vsel %vm618, %v836, %v1561
      %v1594 = vsel %vm618, %v841, %v1563
      %v1595 = vsel %vm618, %v846, %v1565
      %vm1596 = vcmask 130048
      %v1597 = vsel %vm1596, %v1593, %v1573
      %v1598 = vsel %vm1596, %v1594, %v1575
      %v1599 = vsel %vm1596, %v1595, %v1577
      %vm1600 = vcmask 195584
      %v1601 = vsel %vm1600, %v1597, %v1585
      %v1602 = vsel %vm1600, %v1598, %v1587
      %v1603 = vsel %vm1600, %v1599, %v1589
      %v1604 = vld [vmem:[%s5] sm:$0xff]
      %v1605 = vld [vmem:[%s5 + $0x8] sm:$0xff]
      %v1606 = vld [vmem:[%s5 + $0x10] sm:$0xff]
      %v1607 = vld [vmem:[%s5 + $0x18] sm:$0xff]
      %v1608 = vld [vmem:[%s6] sm:$0x1]
      %v1610 = vlaneseq
      %v1611 = vshrl.u32 %v1610, 7
      %v1612 = vsub.s32 0, %v1611
      %v1613 = vrot.slane %v1608, %v1612
      %v1616 = vsel %vm446, %v1601, 0
      %v1619 = vsel %vm446, %v1602, 0
      %v1622 = vsel %vm446, %v1603, 0
      %1624 = vmatprep.subr.mxu0 0.0
      %1625 = vmatpush1.msra.mxu0 0.0
      %1626 = vmatprep.subr.mxu0 0.0
      %1627 = vmatpush1.msra.mxu0 0.0
      %1628 = vmatprep.subr.mxu0 0.0
      %1629 = vmatpush1.msra.mxu0 0.0
      %1630 = vmatprep.subr.mxu0 0.0
      %1631 = vmatpush1.msra.mxu0 0.0
      %1632 = vmatprep.subr.mxu0 0.0
      %1633 = vmatpush1.msra.mxu0 0.0
      %1634 = vmatprep.subr.mxu0 0.0
      %1635 = vmatpush1.msra.mxu0 0.0
      %1636 = vmatprep.subr.mxu0 0.0
      %1637 = vmatpush1.msra.mxu0 0.0
      %1638 = vmatprep.subr.mxu0 0.0
      %1639 = vmatpush1.msra.mxu0 0.0
      %1640 = vmatprep.subr.mxu0 0.0
      %1641 = vmatpush1.msra.mxu0 0.0
      %1642 = vmatprep.subr.mxu0 0.0
      %1643 = vmatpush1.msra.mxu0 0.0
      %1644 = vmatprep.subr.mxu0 0.0
      %1645 = vmatpush1.msra.mxu0 0.0
      %1646 = vmatprep.subr.mxu0 0.0
      %1647 = vmatpush1.msra.mxu0 0.0
      %1648 = vmatprep.subr.mxu0 0.0
      %1649 = vmatpush1.msra.mxu0 %v1607
      %1650 = vmatprep.subr.mxu0 0.0
      %1651 = vmatpush1.msra.mxu0 %v1606
      %1652 = vmatprep.subr.mxu0 0.0
      %1653 = vmatpush1.msra.mxu0 %v1605
      %1654 = vmatprep.subr.mxu0 0.0
      %1655 = vmatpush1.msra.mxu0 %v1604
      %1656 = vmatprep.subr.mxu0 0.0
      %1657 = vmatpush2.msra.mxu0 0.0
      %1658 = vmatprep.subr.mxu0 0.0
      %1659 = vmatpush2.msra.mxu0 0.0
      %1660 = vmatprep.subr.mxu0 0.0
      %1661 = vmatpush2.msra.mxu0 0.0
      %1662 = vmatprep.subr.mxu0 0.0
      %1663 = vmatpush2.msra.mxu0 0.0
      %1664 = vmatprep.subr.mxu0 0.0
      %1665 = vmatpush2.msra.mxu0 0.0
      %1666 = vmatprep.subr.mxu0 0.0
      %1667 = vmatpush2.msra.mxu0 0.0
      %1668 = vmatprep.subr.mxu0 0.0
      %1669 = vmatpush2.msra.mxu0 0.0
      %1670 = vmatprep.subr.mxu0 0.0
      %1671 = vmatpush2.msra.mxu0 0.0
      %1672 = vmatprep.subr.mxu0 0.0
      %1673 = vmatpush2.msra.mxu0 0.0
      %1674 = vmatprep.subr.mxu0 0.0
      %1675 = vmatpush2.msra.mxu0 0.0
      %1676 = vmatprep.subr.mxu0 0.0
      %1677 = vmatpush2.msra.mxu0 0.0
      %1678 = vmatprep.subr.mxu0 0.0
      %1679 = vmatpush2.msra.mxu0 0.0
      %1680 = vmatprep.subr.mxu0 0.0
      %1681 = vmatpush2.msra.mxu0 0.0
      %1682 = vmatprep.subr.mxu0 0.0
      %1683 = vmatpush2.msra.mxu0 0.0
      %1684 = vmatprep.subr.mxu0 0.0
      %1685 = vmatpush2.msra.mxu0 0.0
      %1686 = vmatprep.subr.mxu0 0.0
      %1687 = vmatpush2.msra.mxu0 0.0
      %1688 = vmatprep.mubr.f32.mxu0 0.0
      %1689 = vmatmul.mubr.f32.gmra.mxu0 %v1616
      %v1690 = vpop.f32.mrf.mxu0
      %v1691 = vadd.f32 %v1613, %v1690
      %v1692 = vpop.f32.mrf.mxu0
      %1693 = vmatprep.mubr.f32.mxu0 0.0
      %1694 = vmatmul.mubr.f32.gmra.mxu0 %v1619
      %v1695 = vpop.f32.mrf.mxu0
      %v1696 = vadd.f32 %v1613, %v1695
      %v1697 = vpop.f32.mrf.mxu0
      %1698 = vmatprep.mubr.f32.mxu0 0.0
      %1699 = vmatmul.mubr.f32.gmra.mxu0 %v1622
      %v1700 = vpop.f32.mrf.mxu0
      %v1701 = vadd.f32 %v1613, %v1700
      %v1702 = vpop.f32.mrf.mxu0
      %1703 = vdwg.mxu0
      %v1704 = vadd.f32 %v441, %v1691
      %v1705 = vadd.f32 %v442, %v1696
      %v1706 = vadd.f32 %v443, %v1701
      %v1707 = vld [vmem:[%s7] sm:$0x1]
      %v1708 = vld [vmem:[%s8] sm:$0x1]
      %v1709 = vsel %vm446, %v1704, 0.0
      %1710 = vadd.xlane.f32.xlu0 %v1709
      %v1711 = vpop.xlane.xlu0 %1710
      %v1712 = vsel %vm446, %v1705, 0.0
      %1713 = vadd.xlane.f32.xlu0 %v1712
      %v1714 = vpop.xlane.xlu0 %1713
      %v1715 = vsel %vm453, %v1706, 0.0
      %1716 = vadd.xlane.f32.xlu0 %v1715
      %v1717 = vpop.xlane.xlu0 %1716
      %v1718 = vmul.f32 %v1711, %v457
      %v1719 = vmul.f32 %v1714, %v457
      %v1720 = vmul.f32 %v1717, %v457
      %v1721 = vsub.f32 %v1704, %v1718
      %v1722 = vsub.f32 %v1705, %v1719
      %v1723 = vsub.f32 %v1706, %v1720
      %v1724 = vmul.f32 %v1721, %v1721
      %v1725 = vmul.f32 %v1722, %v1722
      %v1726 = vmul.f32 %v1723, %v1723
      %v1727 = vsel %vm446, %v1724, 0.0
      %1728 = vadd.xlane.f32.xlu0 %v1727
      %v1729 = vpop.xlane.xlu0 %1728
      %v1730 = vsel %vm446, %v1725, 0.0
      %1731 = vadd.xlane.f32.xlu0 %v1730
      %v1732 = vpop.xlane.xlu0 %1731
      %v1733 = vsel %vm453, %v1726, 0.0
      %1734 = vadd.xlane.f32.xlu0 %v1733
      %v1735 = vpop.xlane.xlu0 %1734
      %v1736 = vmul.f32 %v1729, %v457
      %v1737 = vmul.f32 %v1732, %v457
      %v1738 = vmul.f32 %v1735, %v457
      %v1739 = vadd.f32 %v1736, 1e-05
      %v1740 = vadd.f32 %v1737, 1e-05
      %v1741 = vadd.f32 %v1738, 1e-05
      %v1742 = vrsqrt.pop %v1739
      %v1743 = vrsqrt.pop %v1740
      %v1744 = vrsqrt.pop %v1741
      %v1745 = vmul.f32 %v1721, %v1742
      %v1746 = vmul.f32 %v1722, %v1743
      %v1747 = vmul.f32 %v1723, %v1744
      %v1749 = vlaneseq
      %v1750 = vshrl.u32 %v1749, 7
      %v1751 = vsub.s32 0, %v1750
      %v1752 = vrot.slane %v1707, %v1751
      %v1754 = vmul.f32 %v1745, %v1752
      %v1755 = vmul.f32 %v1746, %v1752
      %v1756 = vmul.f32 %v1747, %v1752
      %v1758 = vlaneseq
      %v1759 = vshrl.u32 %v1758, 7
      %v1760 = vsub.s32 0, %v1759
      %v1761 = vrot.slane %v1708, %v1760
      %v1763 = vadd.f32 %v1754, %v1761
      %v1764 = vadd.f32 %v1755, %v1761
      %v1765 = vadd.f32 %v1756, %v1761
      %v1766 = vld [vmem:[%s9] sm:$0xff]
      %v1767 = vld [vmem:[%s9 + $0x8] sm:$0xff]
      %v1768 = vld [vmem:[%s9 + $0x10] sm:$0xff]
      %v1769 = vld [vmem:[%s9 + $0x18] sm:$0xff]
      %v1770 = vld [vmem:[%s10] sm:$0x1]
      %v1772 = vlaneseq
      %v1773 = vshrl.u32 %v1772, 7
      %v1774 = vsub.s32 0, %v1773
      %v1775 = vrot.slane %v1770, %v1774
      %v1778 = vsel %vm446, %v1763, 0
      %v1781 = vsel %vm446, %v1764, 0
      %v1784 = vsel %vm446, %v1765, 0
      %1786 = vmatprep.subr.mxu0 0.0
      %1787 = vmatpush1.msra.mxu0 0.0
      %1788 = vmatprep.subr.mxu0 0.0
      %1789 = vmatpush1.msra.mxu0 0.0
      %1790 = vmatprep.subr.mxu0 0.0
      %1791 = vmatpush1.msra.mxu0 0.0
      %1792 = vmatprep.subr.mxu0 0.0
      %1793 = vmatpush1.msra.mxu0 0.0
      %1794 = vmatprep.subr.mxu0 0.0
      %1795 = vmatpush1.msra.mxu0 0.0
      %1796 = vmatprep.subr.mxu0 0.0
      %1797 = vmatpush1.msra.mxu0 0.0
      %1798 = vmatprep.subr.mxu0 0.0
      %1799 = vmatpush1.msra.mxu0 0.0
      %1800 = vmatprep.subr.mxu0 0.0
      %1801 = vmatpush1.msra.mxu0 0.0
      %1802 = vmatprep.subr.mxu0 0.0
      %1803 = vmatpush1.msra.mxu0 0.0
      %1804 = vmatprep.subr.mxu0 0.0
      %1805 = vmatpush1.msra.mxu0 0.0
      %1806 = vmatprep.subr.mxu0 0.0
      %1807 = vmatpush1.msra.mxu0 0.0
      %1808 = vmatprep.subr.mxu0 0.0
      %1809 = vmatpush1.msra.mxu0 0.0
      %1810 = vmatprep.subr.mxu0 0.0
      %1811 = vmatpush1.msra.mxu0 %v1769
      %1812 = vmatprep.subr.mxu0 0.0
      %1813 = vmatpush1.msra.mxu0 %v1768
      %1814 = vmatprep.subr.mxu0 0.0
      %1815 = vmatpush1.msra.mxu0 %v1767
      %1816 = vmatprep.subr.mxu0 0.0
      %1817 = vmatpush1.msra.mxu0 %v1766
      %1818 = vmatprep.subr.mxu0 0.0
      %1819 = vmatpush2.msra.mxu0 0.0
      %1820 = vmatprep.subr.mxu0 0.0
      %1821 = vmatpush2.msra.mxu0 0.0
      %1822 = vmatprep.subr.mxu0 0.0
      %1823 = vmatpush2.msra.mxu0 0.0
      %1824 = vmatprep.subr.mxu0 0.0
      %1825 = vmatpush2.msra.mxu0 0.0
      %1826 = vmatprep.subr.mxu0 0.0
      %1827 = vmatpush2.msra.mxu0 0.0
      %1828 = vmatprep.subr.mxu0 0.0
      %1829 = vmatpush2.msra.mxu0 0.0
      %1830 = vmatprep.subr.mxu0 0.0
      %1831 = vmatpush2.msra.mxu0 0.0
      %1832 = vmatprep.subr.mxu0 0.0
      %1833 = vmatpush2.msra.mxu0 0.0
      %1834 = vmatprep.subr.mxu0 0.0
      %1835 = vmatpush2.msra.mxu0 0.0
      %1836 = vmatprep.subr.mxu0 0.0
      %1837 = vmatpush2.msra.mxu0 0.0
      %1838 = vmatprep.subr.mxu0 0.0
      %1839 = vmatpush2.msra.mxu0 0.0
      %1840 = vmatprep.subr.mxu0 0.0
      %1841 = vmatpush2.msra.mxu0 0.0
      %1842 = vmatprep.subr.mxu0 0.0
      %1843 = vmatpush2.msra.mxu0 0.0
      %1844 = vmatprep.subr.mxu0 0.0
      %1845 = vmatpush2.msra.mxu0 0.0
      %1846 = vmatprep.subr.mxu0 0.0
      %1847 = vmatpush2.msra.mxu0 0.0
      %1848 = vmatprep.subr.mxu0 0.0
      %1849 = vmatpush2.msra.mxu0 0.0
      %1850 = vmatprep.mubr.f32.mxu0 0.0
      %1851 = vmatmul.mubr.f32.gmra.mxu0 %v1778
      %v1852 = vpop.f32.mrf.mxu0
      %v1853 = vadd.f32 %v1775, %v1852
      %v1854 = vpop.f32.mrf.mxu0
      %1855 = vmatprep.mubr.f32.mxu0 0.0
      %1856 = vmatmul.mubr.f32.gmra.mxu0 %v1781
      %v1857 = vpop.f32.mrf.mxu0
      %v1858 = vadd.f32 %v1775, %v1857
      %v1859 = vpop.f32.mrf.mxu0
      %1860 = vmatprep.mubr.f32.mxu0 0.0
      %1861 = vmatmul.mubr.f32.gmra.mxu0 %v1784
      %v1862 = vpop.f32.mrf.mxu0
      %v1863 = vadd.f32 %v1775, %v1862
      %v1864 = vpop.f32.mrf.mxu0
      %1865 = vdwg.mxu0
      %v1866 = vmul.f32 %v1853, %v1853
      %v1867 = vmul.f32 %v1858, %v1858
      %v1868 = vmul.f32 %v1863, %v1863
      %v1869 = vmul.f32 %v1853, %v1866
      %v1870 = vmul.f32 %v1858, %v1867
      %v1871 = vmul.f32 %v1863, %v1868
      %v1872 = vmul.f32 %v1869, 0.044715
      %v1873 = vmul.f32 %v1870, 0.044715
      %v1874 = vmul.f32 %v1871, 0.044715
      %v1875 = vadd.f32 %v1853, %v1872
      %v1876 = vadd.f32 %v1858, %v1873
      %v1877 = vadd.f32 %v1863, %v1874
      %v1878 = vmul.f32 %v1875, 0.7978846
      %v1879 = vmul.f32 %v1876, 0.7978846
      %v1880 = vmul.f32 %v1877, 0.7978846
      %v1881 = vtanh.pop %v1878
      %v1882 = vtanh.pop %v1879
      %v1883 = vtanh.pop %v1880
      %v1884 = vadd.f32 %v1881, 1.0
      %v1885 = vadd.f32 %v1882, 1.0
      %v1886 = vadd.f32 %v1883, 1.0
      %v1887 = vmul.f32 %v1884, 0.5
      %v1888 = vmul.f32 %v1885, 0.5
      %v1889 = vmul.f32 %v1886, 0.5
      %v1890 = vmul.f32 %v1853, %v1887
      %v1891 = vmul.f32 %v1858, %v1888
      %v1892 = vmul.f32 %v1863, %v1889
      %v1893 = vld [vmem:[%s11] sm:$0xff]
      %v1894 = vld [vmem:[%s11 + $0x8] sm:$0xff]
      %v1895 = vld [vmem:[%s11 + $0x10] sm:$0xff]
      %v1896 = vld [vmem:[%s11 + $0x18] sm:$0xff]
      %v1897 = vld [vmem:[%s11 + $0x20] sm:$0xff]
      %v1898 = vld [vmem:[%s11 + $0x28] sm:$0xff]
      %v1899 = vld [vmem:[%s11 + $0x30] sm:$0xff]
      %v1900 = vld [vmem:[%s11 + $0x38] sm:$0xff]
      %v1901 = vld [vmem:[%s12] sm:$0x1]
      %v1903 = vlaneseq
      %v1904 = vshrl.u32 %v1903, 7
      %v1905 = vsub.s32 0, %v1904
      %v1906 = vrot.slane %v1901, %v1905
      %vm1908 = vcmask 523264
      %v1910 = vsel %vm1908, %v1890, 0
      %v1913 = vsel %vm1908, %v1891, 0
      %v1916 = vsel %vm1908, %v1892, 0
      %1918 = vmatprep.subr.mxu0 0.0
      %1919 = vmatpush1.msra.mxu0 0.0
      %1920 = vmatprep.subr.mxu0 0.0
      %1921 = vmatpush1.msra.mxu0 0.0
      %1922 = vmatprep.subr.mxu0 0.0
      %1923 = vmatpush1.msra.mxu0 0.0
      %1924 = vmatprep.subr.mxu0 0.0
      %1925 = vmatpush1.msra.mxu0 0.0
      %1926 = vmatprep.subr.mxu0 0.0
      %1927 = vmatpush1.msra.mxu0 0.0
      %1928 = vmatprep.subr.mxu0 0.0
      %1929 = vmatpush1.msra.mxu0 0.0
      %1930 = vmatprep.subr.mxu0 0.0
      %1931 = vmatpush1.msra.mxu0 0.0
      %1932 = vmatprep.subr.mxu0 0.0
      %1933 = vmatpush1.msra.mxu0 0.0
      %1934 = vmatprep.subr.mxu0 0.0
      %1935 = vmatpush1.msra.mxu0 %v1900
      %1936 = vmatprep.subr.mxu0 0.0
      %1937 = vmatpush1.msra.mxu0 %v1899
      %1938 = vmatprep.subr.mxu0 0.0
      %1939 = vmatpush1.msra.mxu0 %v1898
      %1940 = vmatprep.subr.mxu0 0.0
      %1941 = vmatpush1.msra.mxu0 %v1897
      %1942 = vmatprep.subr.mxu0 0.0
      %1943 = vmatpush1.msra.mxu0 %v1896
      %1944 = vmatprep.subr.mxu0 0.0
      %1945 = vmatpush1.msra.mxu0 %v1895
      %1946 = vmatprep.subr.mxu0 0.0
      %1947 = vmatpush1.msra.mxu0 %v1894
      %1948 = vmatprep.subr.mxu0 0.0
      %1949 = vmatpush1.msra.mxu0 %v1893
      %1950 = vmatprep.subr.mxu0 0.0
      %1951 = vmatpush2.msra.mxu0 0.0
      %1952 = vmatprep.subr.mxu0 0.0
      %1953 = vmatpush2.msra.mxu0 0.0
      %1954 = vmatprep.subr.mxu0 0.0
      %1955 = vmatpush2.msra.mxu0 0.0
      %1956 = vmatprep.subr.mxu0 0.0
      %1957 = vmatpush2.msra.mxu0 0.0
      %1958 = vmatprep.subr.mxu0 0.0
      %1959 = vmatpush2.msra.mxu0 0.0
      %1960 = vmatprep.subr.mxu0 0.0
      %1961 = vmatpush2.msra.mxu0 0.0
      %1962 = vmatprep.subr.mxu0 0.0
      %1963 = vmatpush2.msra.mxu0 0.0
      %1964 = vmatprep.subr.mxu0 0.0
      %1965 = vmatpush2.msra.mxu0 0.0
      %1966 = vmatprep.subr.mxu0 0.0
      %1967 = vmatpush2.msra.mxu0 0.0
      %1968 = vmatprep.subr.mxu0 0.0
      %1969 = vmatpush2.msra.mxu0 0.0
      %1970 = vmatprep.subr.mxu0 0.0
      %1971 = vmatpush2.msra.mxu0 0.0
      %1972 = vmatprep.subr.mxu0 0.0
      %1973 = vmatpush2.msra.mxu0 0.0
      %1974 = vmatprep.subr.mxu0 0.0
      %1975 = vmatpush2.msra.mxu0 0.0
      %1976 = vmatprep.subr.mxu0 0.0
      %1977 = vmatpush2.msra.mxu0 0.0
      %1978 = vmatprep.subr.mxu0 0.0
      %1979 = vmatpush2.msra.mxu0 0.0
      %1980 = vmatprep.subr.mxu0 0.0
      %1981 = vmatpush2.msra.mxu0 0.0
      %1982 = vmatprep.mubr.f32.mxu0 0.0
      %1983 = vmatmul.mubr.f32.gmra.mxu0 %v1910
      %v1984 = vpop.f32.mrf.mxu0
      %v1985 = vadd.f32 %v1906, %v1984
      %v1986 = vpop.f32.mrf.mxu0
      %1987 = vmatprep.mubr.f32.mxu0 0.0
      %1988 = vmatmul.mubr.f32.gmra.mxu0 %v1913
      %v1989 = vpop.f32.mrf.mxu0
      %v1990 = vadd.f32 %v1906, %v1989
      %v1991 = vpop.f32.mrf.mxu0
      %1992 = vmatprep.mubr.f32.mxu0 0.0
      %1993 = vmatmul.mubr.f32.gmra.mxu0 %v1916
      %v1994 = vpop.f32.mrf.mxu0
      %v1995 = vadd.f32 %v1906, %v1994
      %v1996 = vpop.f32.mrf.mxu0
      %1997 = vdwg.mxu0
      %v1998 = vadd.f32 %v1704, %v1985
      %v1999 = vadd.f32 %v1705, %v1990
      %v2000 = vadd.f32 %v1706, %v1995
      %2001 = vst.msk [vmem:[%s440] sm:$0xff] %vm446, %v1998
      %2002 = vst.msk [vmem:[%s440 + $0x8] sm:$0xff] %vm446, %v1999
      %2003 = vst.msk [vmem:[%s440 + $0x10] sm:$0x7] %vm453, %v2000
      %p2004 = scmp.lt.s32.totalorder %s24, 1
      %s2005 = scalar_select %p2004, %s24, 1
      %s2006 = smul.addr %s2005, 3
      %s2007 = smul.addr %s2006, 8
      %s2008 = scalar_lea.vmem %s13, %s2007
      // Predicated region
      $region73: #{hubert_ft_forward.13} parent=71 // pred_check
        %p2009 = pneg %p320
      $region74: #{hubert_ft_forward.13} parent=71 // pred_check_branch
        %2011 = sbr.rel (%p2009) target = $region76
      $region75: #{hubert_ft_forward.13} parent=71 // pred_region
        _
      $region76: #{hubert_ft_forward.13} parent=71 // pred_fallthru
        _
    $region72: #{hubert_ft_forward.13} parent=5 // pred_fallthru
      _
    %p2012 = scmp.le.s32.totalorder 2, %s19
    // Predicated region
    $region77: #{hubert_ft_forward.13} parent=5 // pred_check
      %p2013 = pneg %p2012
    $region78: #{hubert_ft_forward.13} parent=5 // pred_check_branch
      %2015 = sbr.rel (%p2013) target = $region80
    $region79: #{hubert_ft_forward.13} parent=5 // pred_region
      %s2016 = ssub.s32 %s19, 2
      // Predicated region
      $region81: #{hubert_ft_forward.13} parent=79 // pred_check
        %p2017 = pneg %p326
      $region82: #{hubert_ft_forward.13} parent=79 // pred_check_branch
        %2019 = sbr.rel (%p2017) target = $region84
      $region83: #{hubert_ft_forward.13} parent=79 // pred_region
        %p2020 = scmp.lt.s32.totalorder %s25, 1
        %s2021 = scalar_select %p2020, %s25, 1
        %s2022 = smul.addr %s2021, 3
        %s2023 = smul.addr %s2022, 8
        %s2024 = scalar_lea.vmem %s13, %s2023
      $region84: #{hubert_ft_forward.13} parent=79 // pred_fallthru
        _
    $region80: #{hubert_ft_forward.13} parent=5 // pred_fallthru
      _
  $region6: #{hubert_ft_forward.13} parent=0 // loop_footer
    %s23 = sadd.s32 1, %s19
  $region7: #{hubert_ft_forward.13} parent=0 // loop_footer_branch
    %18 = sbr.rel target = $region3
  $region8: #{hubert_ft_forward.13} parent=0 // loop_exit
    _

// kernel: hubert_ft_forward.15
$region0: #{hubert_ft_forward.15}
  #allocation0 [shape = 'u32[]', space=smem, size = 0x4, offset = 0x4, fixed_abs, tag = 'smem constant byte address 0x4 - core index']
  #allocation1 [shape = 'u32[144,128]{1,0:T(1,128)}', space=vmem, size = 0x12000, scoped, tag = 'internal scratch']
  %s0 = inlined_call_operand.vmem [shape: f32[2,19,32], index: 0, kind: input, shape index: {}]
  %s1 = inlined_call_operand.vmem [shape: f32[1,32], index: 1, kind: input, shape index: {}]
  %s2 = inlined_call_operand.vmem [shape: f32[1,32], index: 2, kind: input, shape index: {}]
  %s3 = inlined_call_operand.vmem [shape: f32[32,5], index: 3, kind: input, shape index: {}]
  %s4 = inlined_call_operand.vmem [shape: f32[1,5], index: 4, kind: input, shape index: {}]
  %s5 = inlined_call_operand.hbm [shape: f32[2,5], index: 5, kind: output, shape index: {}]
  %s6 = sld [smem:[#allocation0]]
  $region30: #{hubert_ft_forward.15} parent=0
    _
  %s8 = ssub.s32 1, %s6
  %s9 = scalar_select 0, %s8, %s6
  $region1: #{hubert_ft_forward.15} parent=0
    #allocation2 [shape = 'u8[1024]{0}', space=vmem, size = 0x400, scoped, tag = 'output window, operand 0, single buffered']
    #allocation3 [shape = 's32[1]{0}', space=sflag, size = 0x4, scoped, tag = 'scoped memory for hubert_ft_forward.15']
    %10 = vsyncpa [#allocation3], 0
    // Predicated region
    $region2: #{hubert_ft_forward.15} parent=1 // pred_check
      _
    $region3: #{hubert_ft_forward.15} parent=1 // pred_check_branch
      %12 = sbr.rel (0) target = $region5
    $region4: #{hubert_ft_forward.15} parent=1 // pred_region
      _
    $region5: #{hubert_ft_forward.15} parent=1 // pred_fallthru
      _
    // Predicated region
    $region6: #{hubert_ft_forward.15} parent=1 // pred_check
      _
    $region7: #{hubert_ft_forward.15} parent=1 // pred_check_branch
      %14 = sbr.rel (0) target = $region9
    $region8: #{hubert_ft_forward.15} parent=1 // pred_region
      _
    $region9: #{hubert_ft_forward.15} parent=1 // pred_fallthru
      _
    // Predicated region
    $region10: #{hubert_ft_forward.15} parent=1 // pred_check
      _
    $region11: #{hubert_ft_forward.15} parent=1 // pred_check_branch
      %16 = sbr.rel (0) target = $region13
    $region12: #{hubert_ft_forward.15} parent=1 // pred_region
      _
    $region13: #{hubert_ft_forward.15} parent=1 // pred_fallthru
      _
    // Predicated region
    $region14: #{hubert_ft_forward.15} parent=1 // pred_check
      _
    $region15: #{hubert_ft_forward.15} parent=1 // pred_check_branch
      %18 = sbr.rel (0) target = $region17
    $region16: #{hubert_ft_forward.15} parent=1 // pred_region
      _
    $region17: #{hubert_ft_forward.15} parent=1 // pred_fallthru
      _
    // Predicated region
    $region18: #{hubert_ft_forward.15} parent=1 // pred_check
      _
    $region19: #{hubert_ft_forward.15} parent=1 // pred_check_branch
      %20 = sbr.rel (0) target = $region21
    $region20: #{hubert_ft_forward.15} parent=1 // pred_region
      _
    $region21: #{hubert_ft_forward.15} parent=1 // pred_fallthru
      _
    %v21 = vld [vmem:[%s0] sm:$0xff]
    %v22 = vld [vmem:[%s0 + $0x8] sm:$0xff]
    %v23 = vld [vmem:[%s0 + $0x10] sm:$0x7]
    %v24 = vld [vmem:[%s1] sm:$0x1]
    %v25 = vld [vmem:[%s2] sm:$0x1]
    %vm26 = vcmask 261120
    %v27 = vsel %vm26, %v21, 0.0
    %28 = vadd.xlane.f32.xlu0 %v27
    %v29 = vpop.xlane.xlu0 %28
    %v30 = vsel %vm26, %v22, 0.0
    %31 = vadd.xlane.f32.xlu0 %v30
    %v32 = vpop.xlane.xlu0 %31
    %vm33 = vcmask 256000
    %v34 = vsel %vm33, %v23, 0.0
    %35 = vadd.xlane.f32.xlu0 %v34
    %v36 = vpop.xlane.xlu0 %35
    %v37 = vrcp.pop 32.0
    %v38 = vmul.f32 %v29, %v37
    %v39 = vmul.f32 %v32, %v37
    %v40 = vmul.f32 %v36, %v37
    %v41 = vsub.f32 %v21, %v38
    %v42 = vsub.f32 %v22, %v39
    %v43 = vsub.f32 %v23, %v40
    %v44 = vmul.f32 %v41, %v41
    %v45 = vmul.f32 %v42, %v42
    %v46 = vmul.f32 %v43, %v43
    %v47 = vsel %vm26, %v44, 0.0
    %48 = vadd.xlane.f32.xlu0 %v47
    %v49 = vpop.xlane.xlu0 %48
    %v50 = vsel %vm26, %v45, 0.0
    %51 = vadd.xlane.f32.xlu0 %v50
    %v52 = vpop.xlane.xlu0 %51
    %v53 = vsel %vm33, %v46, 0.0
    %54 = vadd.xlane.f32.xlu0 %v53
    %v55 = vpop.xlane.xlu0 %54
    %v56 = vmul.f32 %v49, %v37
    %v57 = vmul.f32 %v52, %v37
    %v58 = vmul.f32 %v55, %v37
    %v59 = vadd.f32 %v56, 1e-05
    %v60 = vadd.f32 %v57, 1e-05
    %v61 = vadd.f32 %v58, 1e-05
    %v62 = vrsqrt.pop %v59
    %v63 = vrsqrt.pop %v60
    %v64 = vrsqrt.pop %v61
    %v65 = vmul.f32 %v41, %v62
    %v66 = vmul.f32 %v42, %v63
    %v67 = vmul.f32 %v43, %v64
    %v69 = vlaneseq
    %v70 = vshrl.u32 %v69, 7
    %v71 = vsub.s32 0, %v70
    %v72 = vrot.slane %v24, %v71
    %v74 = vmul.f32 %v65, %v72
    %v75 = vmul.f32 %v66, %v72
    %v76 = vmul.f32 %v67, %v72
    %v78 = vlaneseq
    %v79 = vshrl.u32 %v78, 7
    %v80 = vsub.s32 0, %v79
    %v81 = vrot.slane %v25, %v80
    %v83 = vadd.f32 %v74, %v81
    %v84 = vadd.f32 %v75, %v81
    %v85 = vadd.f32 %v76, %v81
    %v86 = vsel %vm26, %v83, 0.0
    %v87 = vsel %vm26, %v84, 0.0
    %v88 = vadd.f32 %v86, %v87
    %v89 = vsel %vm33, %v85, 0.0
    %v90 = vadd.f32 %v88, %v89
    %v91 = vrot.slane %v90, 4
    %v92 = vadd.f32 %v90, %v91
    %v93 = vrot.slane %v92, 2
    %v94 = vadd.f32 %v92, %v93
    %v95 = vrot.slane %v94, 1
    %v96 = vadd.f32 %v94, %v95
    %v97 = vrcp.pop 19.0
    %v98 = vmul.f32 %v96, %v97
    %s99 = scalar_lea.vmem %s0, 24
    %v100 = vld [vmem:[%s99] sm:$0xff]
    %v101 = vld [vmem:[%s99 + $0x8] sm:$0xff]
    %v102 = vld [vmem:[%s99 + $0x10] sm:$0x7]
    %v103 = vsel %vm26, %v100, 0.0
    %104 = vadd.xlane.f32.xlu0 %v103
    %v105 = vpop.xlane.xlu0 %104
    %v106 = vsel %vm26, %v101, 0.0
    %107 = vadd.xlane.f32.xlu0 %v106
    %v108 = vpop.xlane.xlu0 %107
    %v109 = vsel %vm33, %v102, 0.0
    %110 = vadd.xlane.f32.xlu0 %v109
    %v111 = vpop.xlane.xlu0 %110
    %v112 = vmul.f32 %v105, %v37
    %v113 = vmul.f32 %v108, %v37
    %v114 = vmul.f32 %v111, %v37
    %v115 = vsub.f32 %v100, %v112
    %v116 = vsub.f32 %v101, %v113
    %v117 = vsub.f32 %v102, %v114
    %v118 = vmul.f32 %v115, %v115
    %v119 = vmul.f32 %v116, %v116
    %v120 = vmul.f32 %v117, %v117
    %v121 = vsel %vm26, %v118, 0.0
    %122 = vadd.xlane.f32.xlu0 %v121
    %v123 = vpop.xlane.xlu0 %122
    %v124 = vsel %vm26, %v119, 0.0
    %125 = vadd.xlane.f32.xlu0 %v124
    %v126 = vpop.xlane.xlu0 %125
    %v127 = vsel %vm33, %v120, 0.0
    %128 = vadd.xlane.f32.xlu0 %v127
    %v129 = vpop.xlane.xlu0 %128
    %v130 = vmul.f32 %v123, %v37
    %v131 = vmul.f32 %v126, %v37
    %v132 = vmul.f32 %v129, %v37
    %v133 = vadd.f32 %v130, 1e-05
    %v134 = vadd.f32 %v131, 1e-05
    %v135 = vadd.f32 %v132, 1e-05
    %v136 = vrsqrt.pop %v133
    %v137 = vrsqrt.pop %v134
    %v138 = vrsqrt.pop %v135
    %v139 = vmul.f32 %v115, %v136
    %v140 = vmul.f32 %v116, %v137
    %v141 = vmul.f32 %v117, %v138
    %v142 = vmul.f32 %v139, %v72
    %v143 = vmul.f32 %v140, %v72
    %v144 = vmul.f32 %v141, %v72
    %v145 = vadd.f32 %v142, %v81
    %v146 = vadd.f32 %v143, %v81
    %v147 = vadd.f32 %v144, %v81
    %v148 = vsel %vm26, %v145, 0.0
    %v149 = vsel %vm26, %v146, 0.0
    %v150 = vadd.f32 %v148, %v149
    %v151 = vsel %vm33, %v147, 0.0
    %v152 = vadd.f32 %v150, %v151
    %v153 = vrot.slane %v152, 4
    %v154 = vadd.f32 %v152, %v153
    %v155 = vrot.slane %v154, 2
    %v156 = vadd.f32 %v154, %v155
    %v157 = vrot.slane %v156, 1
    %v158 = vadd.f32 %v156, %v157
    %v159 = vmul.f32 %v158, %v97
    %vm160 = vcmask 1040384
    %v161 = vsel %vm160, %v98, %v159
    %v162 = vld [vmem:[%s3] sm:$0xff]
    %v163 = vld [vmem:[%s3 + $0x8] sm:$0xff]
    %v164 = vld [vmem:[%s3 + $0x10] sm:$0xff]
    %v165 = vld [vmem:[%s3 + $0x18] sm:$0xff]
    %v166 = vld [vmem:[%s4] sm:$0x1]
    %v168 = vlaneseq
    %v169 = vshrl.u32 %v168, 7
    %v170 = vsub.s32 0, %v169
    %v171 = vrot.slane %v166, %v170
    %v174 = vsel %vm26, %v161, 0
    %176 = vmatprep.subr.mxu0 0.0
    %177 = vmatpush1.msra.mxu0 0.0
    %178 = vmatprep.subr.mxu0 0.0
    %179 = vmatpush1.msra.mxu0 0.0
    %180 = vmatprep.subr.mxu0 0.0
    %181 = vmatpush1.msra.mxu0 0.0
    %182 = vmatprep.subr.mxu0 0.0
    %183 = vmatpush1.msra.mxu0 0.0
    %184 = vmatprep.subr.mxu0 0.0
    %185 = vmatpush1.msra.mxu0 0.0
    %186 = vmatprep.subr.mxu0 0.0
    %187 = vmatpush1.msra.mxu0 0.0
    %188 = vmatprep.subr.mxu0 0.0
    %189 = vmatpush1.msra.mxu0 0.0
    %190 = vmatprep.subr.mxu0 0.0
    %191 = vmatpush1.msra.mxu0 0.0
    %192 = vmatprep.subr.mxu0 0.0
    %193 = vmatpush1.msra.mxu0 0.0
    %194 = vmatprep.subr.mxu0 0.0
    %195 = vmatpush1.msra.mxu0 0.0
    %196 = vmatprep.subr.mxu0 0.0
    %197 = vmatpush1.msra.mxu0 0.0
    %198 = vmatprep.subr.mxu0 0.0
    %199 = vmatpush1.msra.mxu0 0.0
    %200 = vmatprep.subr.mxu0 0.0
    %201 = vmatpush1.msra.mxu0 %v165
    %202 = vmatprep.subr.mxu0 0.0
    %203 = vmatpush1.msra.mxu0 %v164
    %204 = vmatprep.subr.mxu0 0.0
    %205 = vmatpush1.msra.mxu0 %v163
    %206 = vmatprep.subr.mxu0 0.0
    %207 = vmatpush1.msra.mxu0 %v162
    %208 = vmatprep.subr.mxu0 0.0
    %209 = vmatpush2.msra.mxu0 0.0
    %210 = vmatprep.subr.mxu0 0.0
    %211 = vmatpush2.msra.mxu0 0.0
    %212 = vmatprep.subr.mxu0 0.0
    %213 = vmatpush2.msra.mxu0 0.0
    %214 = vmatprep.subr.mxu0 0.0
    %215 = vmatpush2.msra.mxu0 0.0
    %216 = vmatprep.subr.mxu0 0.0
    %217 = vmatpush2.msra.mxu0 0.0
    %218 = vmatprep.subr.mxu0 0.0
    %219 = vmatpush2.msra.mxu0 0.0
    %220 = vmatprep.subr.mxu0 0.0
    %221 = vmatpush2.msra.mxu0 0.0
    %222 = vmatprep.subr.mxu0 0.0
    %223 = vmatpush2.msra.mxu0 0.0
    %224 = vmatprep.subr.mxu0 0.0
    %225 = vmatpush2.msra.mxu0 0.0
    %226 = vmatprep.subr.mxu0 0.0
    %227 = vmatpush2.msra.mxu0 0.0
    %228 = vmatprep.subr.mxu0 0.0
    %229 = vmatpush2.msra.mxu0 0.0
    %230 = vmatprep.subr.mxu0 0.0
    %231 = vmatpush2.msra.mxu0 0.0
    %232 = vmatprep.subr.mxu0 0.0
    %233 = vmatpush2.msra.mxu0 0.0
    %234 = vmatprep.subr.mxu0 0.0
    %235 = vmatpush2.msra.mxu0 0.0
    %236 = vmatprep.subr.mxu0 0.0
    %237 = vmatpush2.msra.mxu0 0.0
    %238 = vmatprep.subr.mxu0 0.0
    %239 = vmatpush2.msra.mxu0 0.0
    %240 = vmatprep.mubr.f32.mxu0 0.0
    %241 = vmatmul.mubr.f32.gmra.mxu0 %v174
    %v242 = vpop.f32.mrf.mxu0
    %v243 = vadd.f32 %v171, %v242
    %v244 = vpop.f32.mrf.mxu0
    %245 = vdwg.mxu0
    %vm246 = vcmask 33792
    %247 = vst.msk [vmem:[#allocation2] sm:$0x3] %vm246, %v243
    // Predicated region
    $region22: #{hubert_ft_forward.15} parent=1 // pred_check
      _
    $region23: #{hubert_ft_forward.15} parent=1 // pred_check_branch
      %249 = sbr.rel (0) target = $region25
    $region24: #{hubert_ft_forward.15} parent=1 // pred_region
      %s251 = ssub.s32 32, 32
      %252 = vsyncadd [#allocation3], %s251
      %s254 = sshll.u32 [#allocation2], 4
      %s255 = int_to_ptr.vmem [resolvable:$true] %s254
      %257 = dma.vmem_to_hbm [thread:$0]  %s255, 32, %s5, [#allocation3]
    $region25: #{hubert_ft_forward.15} parent=1 // pred_fallthru
      _
    // Predicated region
    $region26: #{hubert_ft_forward.15} parent=1 // pred_check
      _
    $region27: #{hubert_ft_forward.15} parent=1 // pred_check_branch
      %259 = sbr.rel (0) target = $region29
    $region28: #{hubert_ft_forward.15} parent=1 // pred_region
      %260 = dma.done [#allocation3], 32
    $region29: #{hubert_ft_forward.15} parent=1 // pred_fallthru
      _
    %261 = vsyncpa [#allocation3], 1

</llo_original>
